<compile_context>
chip_gen: v5e
topology: v5e:2x2
jax: 0.10.0
libtpu: 0.0.40
codegen_flags: <defaults>
</compile_context>

<pallas_src>
import functools
import math

import jax
import jax.numpy as jnp
from jax.experimental import pallas as pl
from jax.experimental.pallas import tpu as pltpu

PAD = 0
NEG_INF = -1e9


# ---------------------------------------------------------------------------
# Pallas kernel: the full encoder stack.  grid = (batch_tiles, num_layers).
# ---------------------------------------------------------------------------
def encoder_stack_kernel(
    x_ref, mrow_ref, mcol_ref,
    wqkv_ref, bqkv_ref, wo_ref, bo_ref,
    g1_ref, beta1_ref, w1_ref, b1_ref, w2_ref, b2_ref, g2_ref, beta2_ref,
    o_ref, mask_sc, *, num_heads):
    layer = pl.program_id(1)
    Bt, S, H = o_ref.shape
    dh = H // num_heads

    # Layer 0 consumes the embedded input; later layers reuse the output block,
    # which stays resident in VMEM across the ("arbitrary") layer axis.
    # The additive OR-mask (-1e9 where query OR key position is padding) is
    # also built exactly once per batch tile, into a VMEM scratch.
    @pl.when(layer == 0)
    def _():
        o_ref[...] = x_ref[...]
        mask_sc[...] = jnp.maximum(mrow_ref[...] + mcol_ref[...], NEG_INF)

    x = o_ref[...].astype(jnp.float32).reshape(Bt * S, H)   # (Bt*S, H) slab
    mask_add = mask_sc[...]                                 # (Bt, S, S) f32

    def layer_norm(v, g_ref, b_ref, eps=1e-6):
        # seq2seq LayerNorm1d: biased variance, eps inside sqrt; stats in f32.
        mean = jnp.mean(v, axis=-1, keepdims=True)
        c = v - mean
        var = jnp.mean(c * c, axis=-1, keepdims=True)
        return c * jax.lax.rsqrt(var + eps) * g_ref[0] + b_ref[0]

    # ---- multi-head self-attention ----
    res = x
    x_bf = x.astype(jnp.bfloat16)          # single f32->bf16 pack per layer
    # Fused QKV projection: one matmul, contraction = H, 1/sqrt(dh) already
    # folded into the Wq/bq third of the fused weight host-side.
    qkv = jnp.dot(x_bf, wqkv_ref[0],
                  preferred_element_type=jnp.float32) + bqkv_ref[0]
    q, k, v = qkv[:, :H], qkv[:, H:2 * H], qkv[:, 2 * H:]

    ctx_heads = []
    for h in range(num_heads):             # static unroll; dh-aligned slices
        sl = slice(h * dh, (h + 1) * dh)
        qh = q[:, sl].reshape(Bt, S, dh).astype(jnp.bfloat16)
        kh = k[:, sl].reshape(Bt, S, dh).astype(jnp.bfloat16)
        vh = v[:, sl].reshape(Bt, S, dh).astype(jnp.bfloat16)
        # Batched over the Bt sequences; contracts dh without an explicit .T.
        s_h = jnp.einsum("bqd,bkd->bqk", qh, kh,
                         preferred_element_type=jnp.float32)
        s_h = s_h + mask_add
        s_h = s_h - jnp.max(s_h, axis=-1, keepdims=True)
        p = jnp.exp(s_h)
        p = p * pl.reciprocal(jnp.sum(p, axis=-1, keepdims=True), approx=True)
        ctx = jnp.einsum("bqk,bkd->bqd", p.astype(jnp.bfloat16), vh,
                         preferred_element_type=jnp.float32)
        ctx_heads.append(ctx.reshape(Bt * S, dh))
    # Lane-concat of 128-aligned head slabs, then ONE output projection that
    # contracts the full H (fills the 256-deep MXU on v6e/v7x).
    ctx_slab = jnp.concatenate(ctx_heads, axis=-1).astype(jnp.bfloat16)
    attn = jnp.dot(ctx_slab, wo_ref[0],
                   preferred_element_type=jnp.float32) + bo_ref[0]

    x = layer_norm(res + attn, g1_ref, beta1_ref)

    # ---- position-wise feed-forward ----
    res = x
    h1 = jnp.maximum(
        jnp.dot(x.astype(jnp.bfloat16), w1_ref[0],
                preferred_element_type=jnp.float32) + b1_ref[0], 0.0)
    y = jnp.dot(h1.astype(jnp.bfloat16), w2_ref[0],
                preferred_element_type=jnp.float32) + b2_ref[0]
    x = layer_norm(res + y, g2_ref, beta2_ref)

    o_ref[...] = x.reshape(Bt, S, H).astype(o_ref.dtype)


# ---------------------------------------------------------------------------
# Wrapper: embedding + positional embedding in plain JAX, then one pallas_call.
# ---------------------------------------------------------------------------
def positional_embedding(batch, length, channels, min_timescale=1.0,
                         max_timescale=10000.0):
    assert channels % 2 == 0
    num_timescales = channels // 2
    log_inc = (math.log(float(max_timescale) / float(min_timescale))
               / (float(num_timescales) - 1.0))
    position = jnp.arange(length, dtype=jnp.float32)
    inv_timescales = (jnp.exp(jnp.arange(num_timescales, dtype=jnp.float32)
                              * -log_inc) * min_timescale)
    scaled_time = position[:, None] * inv_timescales[None, :]
    signal = jnp.concatenate([jnp.sin(scaled_time), jnp.cos(scaled_time)], axis=1)
    return jnp.broadcast_to(signal[None], (batch, length, channels))


def prepare_params(raw, num_heads):
    """Fold 1/sqrt(dh) into Wq/bq, fuse QKV, and cast matmul weights to bf16."""
    H = raw["wq"].shape[-1]
    dh = H // num_heads
    scale = 1.0 / math.sqrt(dh)
    p = {}
    p["wqkv"] = jnp.concatenate(
        [raw["wq"] * scale, raw["wk"], raw["wv"]], axis=-1).astype(jnp.bfloat16)
    p["bqkv"] = jnp.concatenate(
        [raw["bq"] * scale, raw["bk"], raw["bv"]], axis=-1).astype(jnp.float32)
    p["wo"] = raw["wo"].astype(jnp.bfloat16)
    p["bo"] = raw["bo"].astype(jnp.float32)
    p["w1"] = raw["w1"].astype(jnp.bfloat16)
    p["b1"] = raw["b1"].astype(jnp.float32)
    p["w2"] = raw["w2"].astype(jnp.bfloat16)
    p["b2"] = raw["b2"].astype(jnp.float32)
    for n in ("g1", "beta1", "g2", "beta2"):
        p[n] = raw[n].astype(jnp.float32)
    return p


def transformer_attention_encoder(tokens, emb_table, params, num_heads,
                                  batch_tile=None):
    B, S = tokens.shape
    H = emb_table.shape[1]
    L, _, inner = params["w1"].shape
    assert H % num_heads == 0
    # Maximize Bt (weights stream from HBM once per batch tile); on v7x keep
    # B // Bt a multiple of 2 so both TensorCores get work from the parallel axis.
    Bt = batch_tile or B
    assert B % Bt == 0

    padding_mask = tokens == PAD                                      # (B, S) bool
    neg = jnp.where(padding_mask, NEG_INF, 0.0).astype(jnp.float32)   # (B, S)
    mask_row = neg.reshape(B, 1, S)    # key-side mask  (broadcast over queries)
    mask_col = neg.reshape(B, S, 1)    # query-side mask (broadcast over keys)

    x = jnp.take(emb_table, tokens, axis=0) * (H ** 0.5)              # (B, S, H)
    x = (x + positional_embedding(B, S, H)).astype(jnp.float32)
    # dropout(p=0) -> identity

    def per_layer(*shape):
        return pl.BlockSpec((1,) + tuple(shape),
                            lambda b, l: (l,) + (0,) * len(shape))

    in_specs = [
        pl.BlockSpec((Bt, S, H), lambda b, l: (b, 0, 0)),   # x (used at layer 0)
        pl.BlockSpec((Bt, 1, S), lambda b, l: (b, 0, 0)),   # key padding mask
        pl.BlockSpec((Bt, S, 1), lambda b, l: (b, 0, 0)),   # query padding mask
        per_layer(H, 3 * H), per_layer(1, 3 * H),           # fused Wqkv, bqkv
        per_layer(H, H), per_layer(1, H),                   # Wo, bo
        per_layer(1, H), per_layer(1, H),                   # lnorm1 gamma, beta
        per_layer(H, inner), per_layer(1, inner),           # fc1
        per_layer(inner, H), per_layer(1, H),               # fc2
        per_layer(1, H), per_layer(1, H),                   # lnorm2 gamma, beta
    ]

    # Advisory cost estimate for XLA's scheduler around the custom call.
    flops = 2 * L * B * S * (4 * H * H + 2 * H * inner + 2 * S * H)
    transcendentals = L * B * num_heads * S * S
    weight_bytes_per_layer = (4 * H * H + 2 * H * inner) * 2           # bf16
    bytes_accessed = (L * (B // Bt) * weight_bytes_per_layer
                      + 2 * B * S * H * 4)                             # act in/out
    cost = pl.CostEstimate(flops=flops, transcendentals=transcendentals,
                           bytes_accessed=bytes_accessed)

    kernel = functools.partial(encoder_stack_kernel, num_heads=num_heads)
    out = pl.pallas_call(
        kernel,
        out_shape=jax.ShapeDtypeStruct((B, S, H), jnp.float32),
        grid=(B // Bt, L),
        in_specs=in_specs,
        out_specs=pl.BlockSpec((Bt, S, H), lambda b, l: (b, 0, 0)),
        scratch_shapes=[pltpu.VMEM((Bt, S, S), jnp.float32)],  # additive OR-mask
        compiler_params=pltpu.CompilerParams(
            dimension_semantics=("parallel", "arbitrary"),
            vmem_limit_bytes=48 * 1024 * 1024),   # above default cap, below v7x phys
        cost_estimate=cost,
    )(x, mask_row, mask_col,
      params["wqkv"], params["bqkv"], params["wo"], params["bo"],
      params["g1"], params["beta1"],
      params["w1"], params["b1"], params["w2"], params["b2"],
      params["g2"], params["beta2"])
    return out, padding_mask


# ---------------------------------------------------------------------------
# Parameter init: per-layer params stacked along a leading layer dim (f32);
# prepare_params() does the QKV fusion / scale fold / bf16 cast.
# ---------------------------------------------------------------------------
def init_stacked_block_params(key, num_layers, hidden, inner):
    def one_layer(k):
        ks = jax.random.split(k, 8)
        s_h = 1.0 / math.sqrt(hidden)
        s_i = 1.0 / math.sqrt(inner)
        return {
            "wq": jax.random.normal(ks[0], (hidden, hidden), jnp.float32) * s_h,
            "wk": jax.random.normal(ks[1], (hidden, hidden), jnp.float32) * s_h,
            "wv": jax.random.normal(ks[2], (hidden, hidden), jnp.float32) * s_h,
            "wo": jax.random.normal(ks[3], (hidden, hidden), jnp.float32) * s_h,
            "bq": jnp.zeros((1, hidden), jnp.float32),
            "bk": jnp.zeros((1, hidden), jnp.float32),
            "bv": jnp.zeros((1, hidden), jnp.float32),
            "bo": jnp.zeros((1, hidden), jnp.float32),
            "w1": jax.random.normal(ks[4], (hidden, inner), jnp.float32) * s_h,
            "b1": jax.random.normal(ks[5], (1, inner), jnp.float32) * 0.01,
            "w2": jax.random.normal(ks[6], (inner, hidden), jnp.float32) * s_i,
            "b2": jax.random.normal(ks[7], (1, hidden), jnp.float32) * 0.01,
            "g1": jnp.ones((1, hidden), jnp.float32),
            "beta1": jnp.zeros((1, hidden), jnp.float32),
            "g2": jnp.ones((1, hidden), jnp.float32),
            "beta2": jnp.zeros((1, hidden), jnp.float32),
        }
    per = [one_layer(k) for k in jax.random.split(key, num_layers)]
    return {name: jnp.stack([p[name] for p in per], axis=0) for name in per[0]}


# ---------------------------------------------------------------------------
if __name__ == "__main__":
    vocab_size = 50
    hidden_size = 256        # multiple of 128 -> lane-dense blocks
    num_layers = 2
    num_heads = 2            # head dim 128 -> vreg-aligned head slices
    inner_linear = 512
    batch, seq = 4, 16
    batch_tile = 2           # small demo tile; for real workloads maximize Bt

    root = jax.random.PRNGKey(0)
    k_tok, k_emb, k_blocks = jax.random.split(root, 3)

    tokens = jax.random.randint(k_tok, (batch, seq), 1, vocab_size, dtype=jnp.int32)
    tokens = tokens.at[0, -3:].set(PAD)   # exercise the padding mask
    tokens = tokens.at[2, -5:].set(PAD)

    emb_table = jax.random.normal(k_emb, (vocab_size, hidden_size), jnp.float32) * 0.1
    emb_table = emb_table.at[PAD].set(0.0)   # padding_idx=PAD -> zero row

    raw_params = init_stacked_block_params(k_blocks, num_layers, hidden_size,
                                           inner_linear)
    params = prepare_params(raw_params, num_heads)

    out, mask = transformer_attention_encoder(
        tokens, emb_table, params, num_heads, batch_tile=batch_tile)
    out = jax.block_until_ready(out)

    assert out.shape == (batch, seq, hidden_size)
    assert bool(jnp.all(jnp.isfinite(out)))
    print("KERNEL_OK")
</pallas_src>

<mosaic_0001>
module attributes {stable_mosaic.version = 11 : i64} {
  func.func @encoder_stack_kernel(%arg0: i32, %arg1: i32, %arg2: memref<2x16x256xf32, #tpu.memory_space<vmem>>, %arg3: memref<2x1x16xf32, #tpu.memory_space<vmem>>, %arg4: memref<2x16x1xf32, #tpu.memory_space<vmem>>, %arg5: memref<1x256x768xbf16, #tpu.memory_space<vmem>>, %arg6: memref<1x1x768xf32, #tpu.memory_space<vmem>>, %arg7: memref<1x256x256xbf16, #tpu.memory_space<vmem>>, %arg8: memref<1x1x256xf32, #tpu.memory_space<vmem>>, %arg9: memref<1x1x256xf32, #tpu.memory_space<vmem>>, %arg10: memref<1x1x256xf32, #tpu.memory_space<vmem>>, %arg11: memref<1x256x512xbf16, #tpu.memory_space<vmem>>, %arg12: memref<1x1x512xf32, #tpu.memory_space<vmem>>, %arg13: memref<1x512x256xbf16, #tpu.memory_space<vmem>>, %arg14: memref<1x1x256xf32, #tpu.memory_space<vmem>>, %arg15: memref<1x1x256xf32, #tpu.memory_space<vmem>>, %arg16: memref<1x1x256xf32, #tpu.memory_space<vmem>>, %arg17: memref<2x16x256xf32, #tpu.memory_space<vmem>>, %arg18: memref<2x16x16xf32, #tpu.memory_space<vmem>>) attributes {dimension_semantics = [#tpu.dimension_semantics<parallel>, #tpu.dimension_semantics<arbitrary>], iteration_bounds = array<i64: 2, 2>, scalar_prefetch = 0 : i64, scratch_operands = 1 : i64, tpu.core_type = #tpu.core_type<tc>, window_params = [{transform_indices = @transform_0, window_bounds = array<i64: 2, 16, 256>}, {transform_indices = @transform_1, window_bounds = array<i64: 2, 1, 16>}, {transform_indices = @transform_2, window_bounds = array<i64: 2, 16, 1>}, {transform_indices = @transform_3, window_bounds = array<i64: 1, 256, 768>}, {transform_indices = @transform_4, window_bounds = array<i64: 1, 1, 768>}, {transform_indices = @transform_5, window_bounds = array<i64: 1, 256, 256>}, {transform_indices = @transform_6, window_bounds = array<i64: 1, 1, 256>}, {transform_indices = @transform_7, window_bounds = array<i64: 1, 1, 256>}, {transform_indices = @transform_8, window_bounds = array<i64: 1, 1, 256>}, {transform_indices = @transform_9, window_bounds = array<i64: 1, 256, 512>}, {transform_indices = @transform_10, window_bounds = array<i64: 1, 1, 512>}, {transform_indices = @transform_11, window_bounds = array<i64: 1, 512, 256>}, {transform_indices = @transform_12, window_bounds = array<i64: 1, 1, 256>}, {transform_indices = @transform_13, window_bounds = array<i64: 1, 1, 256>}, {transform_indices = @transform_14, window_bounds = array<i64: 1, 1, 256>}, {transform_indices = @transform_15, window_bounds = array<i64: 2, 16, 256>}]} {
    %c0_i32 = arith.constant 0 : i32
    %0 = arith.cmpi eq, %arg1, %c0_i32 : i32
    %1 = arith.extui %0 : i1 to i32
    %c0_i32_0 = arith.constant 0 : i32
    %2 = arith.cmpi ne, %1, %c0_i32_0 : i32
    scf.if %2 {
      %c0_67 = arith.constant 0 : index
      %c0_68 = arith.constant 0 : index
      %c0_69 = arith.constant 0 : index
      %144 = vector.load %arg2[%c0_67, %c0_68, %c0_69] : memref<2x16x256xf32, #tpu.memory_space<vmem>>, vector<2x16x256xf32>
      %c0_70 = arith.constant 0 : index
      %c0_71 = arith.constant 0 : index
      %c0_72 = arith.constant 0 : index
      %145 = vector.load %arg17[%c0_70, %c0_71, %c0_72] : memref<2x16x256xf32, #tpu.memory_space<vmem>>, vector<2x16x256xf32>
      tpu.vector_store %arg17[%c0_70, %c0_71, %c0_72], %144 {strides = array<i32>} : memref<2x16x256xf32, #tpu.memory_space<vmem>>, vector<2x16x256xf32>,
      %c0_73 = arith.constant 0 : index
      %c0_74 = arith.constant 0 : index
      %c0_75 = arith.constant 0 : index
      %146 = vector.load %arg3[%c0_73, %c0_74, %c0_75] : memref<2x1x16xf32, #tpu.memory_space<vmem>>, vector<2x1x16xf32>
      %c0_76 = arith.constant 0 : index
      %c0_77 = arith.constant 0 : index
      %c0_78 = arith.constant 0 : index
      %147 = vector.load %arg4[%c0_76, %c0_77, %c0_78] : memref<2x16x1xf32, #tpu.memory_space<vmem>>, vector<2x16x1xf32>
      %148 = vector.broadcast %146 : vector<2x1x16xf32> to vector<2x16x16xf32>
      %149 = vector.broadcast %147 : vector<2x16x1xf32> to vector<2x16x16xf32>
      %150 = arith.addf %148, %149 : vector<2x16x16xf32>
      %cst_79 = arith.constant -1.000000e+09 : f32
      %151 = vector.broadcast %cst_79 : f32 to vector<2x16x16xf32>
      %152 = arith.maximumf %150, %151 : vector<2x16x16xf32>
      %c0_80 = arith.constant 0 : index
      %c0_81 = arith.constant 0 : index
      %c0_82 = arith.constant 0 : index
      %153 = vector.load %arg18[%c0_80, %c0_81, %c0_82] : memref<2x16x16xf32, #tpu.memory_space<vmem>>, vector<2x16x16xf32>
      tpu.vector_store %arg18[%c0_80, %c0_81, %c0_82], %152 {strides = array<i32>} : memref<2x16x16xf32, #tpu.memory_space<vmem>>, vector<2x16x16xf32>,
    } else {
    }
    %c0 = arith.constant 0 : index
    %c0_1 = arith.constant 0 : index
    %c0_2 = arith.constant 0 : index
    %3 = vector.load %arg17[%c0, %c0_1, %c0_2] : memref<2x16x256xf32, #tpu.memory_space<vmem>>, vector<2x16x256xf32>
    %4 = vector.shape_cast %3 : vector<2x16x256xf32> to vector<32x256xf32>
    %c0_3 = arith.constant 0 : index
    %c0_4 = arith.constant 0 : index
    %c0_5 = arith.constant 0 : index
    %5 = vector.load %arg18[%c0_3, %c0_4, %c0_5] : memref<2x16x16xf32, #tpu.memory_space<vmem>>, vector<2x16x16xf32>
    %6 = arith.truncf %4 : vector<32x256xf32> to vector<32x256xbf16>
    %c0_6 = arith.constant 0 : index
    %c0_7 = arith.constant 0 : index
    %c0_8 = arith.constant 0 : index
    %7 = vector.load %arg5[%c0_6, %c0_7, %c0_8] : memref<1x256x768xbf16, #tpu.memory_space<vmem>>, vector<1x256x768xbf16>
    %8 = vector.shape_cast %7 : vector<1x256x768xbf16> to vector<256x768xbf16>
    %cst = arith.constant dense<0.000000e+00> : vector<32x768xf32>
    %9 = tpu.matmul %6, %8, %cst {dimension_numbers = #tpu.dot_dimension_numbers<[1], [0], [0], [1], [0, 0, 1, 1], [], []>} : vector<32x256xbf16>, vector<256x768xbf16>, vector<32x768xf32> -> vector<32x768xf32>
    %c0_9 = arith.constant 0 : index
    %c0_10 = arith.constant 0 : index
    %c0_11 = arith.constant 0 : index
    %10 = vector.load %arg6[%c0_9, %c0_10, %c0_11] : memref<1x1x768xf32, #tpu.memory_space<vmem>>, vector<1x1x768xf32>
    %11 = vector.shape_cast %10 : vector<1x1x768xf32> to vector<1x768xf32>
    %12 = vector.broadcast %11 : vector<1x768xf32> to vector<32x768xf32>
    %13 = arith.addf %9, %12 : vector<32x768xf32>
    %14 = vector.extract_strided_slice %13 {offsets = [0, 0], sizes = [32, 256], strides = [1, 1]} : vector<32x768xf32> to vector<32x256xf32>
    %15 = vector.extract_strided_slice %13 {offsets = [0, 256], sizes = [32, 256], strides = [1, 1]} : vector<32x768xf32> to vector<32x256xf32>
    %16 = vector.extract_strided_slice %13 {offsets = [0, 512], sizes = [32, 256], strides = [1, 1]} : vector<32x768xf32> to vector<32x256xf32>
    %17 = vector.extract_strided_slice %14 {offsets = [0, 0], sizes = [32, 128], strides = [1, 1]} : vector<32x256xf32> to vector<32x128xf32>
    %18 = vector.shape_cast %17 : vector<32x128xf32> to vector<2x16x128xf32>
    %19 = arith.truncf %18 : vector<2x16x128xf32> to vector<2x16x128xbf16>
    %20 = vector.extract_strided_slice %15 {offsets = [0, 0], sizes = [32, 128], strides = [1, 1]} : vector<32x256xf32> to vector<32x128xf32>
    %21 = vector.shape_cast %20 : vector<32x128xf32> to vector<2x16x128xf32>
    %22 = arith.truncf %21 : vector<2x16x128xf32> to vector<2x16x128xbf16>
    %23 = vector.extract_strided_slice %16 {offsets = [0, 0], sizes = [32, 128], strides = [1, 1]} : vector<32x256xf32> to vector<32x128xf32>
    %24 = vector.shape_cast %23 : vector<32x128xf32> to vector<2x16x128xf32>
    %25 = arith.truncf %24 : vector<2x16x128xf32> to vector<2x16x128xbf16>
    "tpu.trace_start"() <{level = 10 : i32, message = "bqd,bkd->bqk"}> : () -> ()
    %cst_12 = arith.constant dense<0.000000e+00> : vector<2x16x16xf32>
    %26 = tpu.matmul %19, %22, %cst_12 {dimension_numbers = #tpu.dot_dimension_numbers<[2], [2], [1], [1], [0, 0, 0, 1, 1, 1], [0], [0]>} : vector<2x16x128xbf16>, vector<2x16x128xbf16>, vector<2x16x16xf32> -> vector<2x16x16xf32>
    "tpu.trace_stop"() : () -> ()
    %27 = arith.addf %26, %5 : vector<2x16x16xf32>
    %cst_13 = arith.constant dense<0xFF800000> : vector<2x16xf32>
    %28 = vector.multi_reduction <maximumf>, %27, %cst_13 [2] : vector<2x16x16xf32> to vector<2x16xf32>
    %29 = vector.shape_cast %28 : vector<2x16xf32> to vector<2x16x1xf32>
    %30 = vector.broadcast %29 : vector<2x16x1xf32> to vector<2x16x16xf32>
    %31 = arith.subf %27, %30 : vector<2x16x16xf32>
    %32 = math.exp %31 : vector<2x16x16xf32>
    %cst_14 = arith.constant dense<0.000000e+00> : vector<2x16xf32>
    %33 = vector.multi_reduction <add>, %32, %cst_14 [2] : vector<2x16x16xf32> to vector<2x16xf32>
    %34 = vector.shape_cast %33 : vector<2x16xf32> to vector<2x16x1xf32>
    %35 = tpu.reciprocal %34 {approx = true} : vector<2x16x1xf32> -> vector<2x16x1xf32>
    %36 = vector.broadcast %35 : vector<2x16x1xf32> to vector<2x16x16xf32>
    %37 = arith.mulf %32, %36 : vector<2x16x16xf32>
    %38 = arith.truncf %37 : vector<2x16x16xf32> to vector<2x16x16xbf16>
    "tpu.trace_start"() <{level = 10 : i32, message = "bqk,bkd->bqd"}> : () -> ()
    %cst_15 = arith.constant dense<0.000000e+00> : vector<2x16x128xf32>
    %39 = tpu.matmul %38, %25, %cst_15 {dimension_numbers = #tpu.dot_dimension_numbers<[2], [1], [1], [2], [0, 0, 0, 1, 1, 2], [0], [0]>} : vector<2x16x16xbf16>, vector<2x16x128xbf16>, vector<2x16x128xf32> -> vector<2x16x128xf32>
    "tpu.trace_stop"() : () -> ()
    %40 = vector.shape_cast %39 : vector<2x16x128xf32> to vector<32x128xf32>
    %41 = vector.extract_strided_slice %14 {offsets = [0, 128], sizes = [32, 128], strides = [1, 1]} : vector<32x256xf32> to vector<32x128xf32>
    %42 = vector.shape_cast %41 : vector<32x128xf32> to vector<2x16x128xf32>
    %43 = arith.truncf %42 : vector<2x16x128xf32> to vector<2x16x128xbf16>
    %44 = vector.extract_strided_slice %15 {offsets = [0, 128], sizes = [32, 128], strides = [1, 1]} : vector<32x256xf32> to vector<32x128xf32>
    %45 = vector.shape_cast %44 : vector<32x128xf32> to vector<2x16x128xf32>
    %46 = arith.truncf %45 : vector<2x16x128xf32> to vector<2x16x128xbf16>
    %47 = vector.extract_strided_slice %16 {offsets = [0, 128], sizes = [32, 128], strides = [1, 1]} : vector<32x256xf32> to vector<32x128xf32>
    %48 = vector.shape_cast %47 : vector<32x128xf32> to vector<2x16x128xf32>
    %49 = arith.truncf %48 : vector<2x16x128xf32> to vector<2x16x128xbf16>
    "tpu.trace_start"() <{level = 10 : i32, message = "bqd,bkd->bqk"}> : () -> ()
    %cst_16 = arith.constant dense<0.000000e+00> : vector<2x16x16xf32>
    %50 = tpu.matmul %43, %46, %cst_16 {dimension_numbers = #tpu.dot_dimension_numbers<[2], [2], [1], [1], [0, 0, 0, 1, 1, 1], [0], [0]>} : vector<2x16x128xbf16>, vector<2x16x128xbf16>, vector<2x16x16xf32> -> vector<2x16x16xf32>
    "tpu.trace_stop"() : () -> ()
    %51 = arith.addf %50, %5 : vector<2x16x16xf32>
    %cst_17 = arith.constant dense<0xFF800000> : vector<2x16xf32>
    %52 = vector.multi_reduction <maximumf>, %51, %cst_17 [2] : vector<2x16x16xf32> to vector<2x16xf32>
    %53 = vector.shape_cast %52 : vector<2x16xf32> to vector<2x16x1xf32>
    %54 = vector.broadcast %53 : vector<2x16x1xf32> to vector<2x16x16xf32>
    %55 = arith.subf %51, %54 : vector<2x16x16xf32>
    %56 = math.exp %55 : vector<2x16x16xf32>
    %cst_18 = arith.constant dense<0.000000e+00> : vector<2x16xf32>
    %57 = vector.multi_reduction <add>, %56, %cst_18 [2] : vector<2x16x16xf32> to vector<2x16xf32>
    %58 = vector.shape_cast %57 : vector<2x16xf32> to vector<2x16x1xf32>
    %59 = tpu.reciprocal %58 {approx = true} : vector<2x16x1xf32> -> vector<2x16x1xf32>
    %60 = vector.broadcast %59 : vector<2x16x1xf32> to vector<2x16x16xf32>
    %61 = arith.mulf %56, %60 : vector<2x16x16xf32>
    %62 = arith.truncf %61 : vector<2x16x16xf32> to vector<2x16x16xbf16>
    "tpu.trace_start"() <{level = 10 : i32, message = "bqk,bkd->bqd"}> : () -> ()
    %cst_19 = arith.constant dense<0.000000e+00> : vector<2x16x128xf32>
    %63 = tpu.matmul %62, %49, %cst_19 {dimension_numbers = #tpu.dot_dimension_numbers<[2], [1], [1], [2], [0, 0, 0, 1, 1, 2], [0], [0]>} : vector<2x16x16xbf16>, vector<2x16x128xbf16>, vector<2x16x128xf32> -> vector<2x16x128xf32>
    "tpu.trace_stop"() : () -> ()
    %64 = vector.shape_cast %63 : vector<2x16x128xf32> to vector<32x128xf32>
    %65 = tpu.concatenate %40, %64 in 1 : vector<32x128xf32>, vector<32x128xf32> -> vector<32x256xf32>
    %66 = arith.truncf %65 : vector<32x256xf32> to vector<32x256xbf16>
    %c0_20 = arith.constant 0 : index
    %c0_21 = arith.constant 0 : index
    %c0_22 = arith.constant 0 : index
    %67 = vector.load %arg7[%c0_20, %c0_21, %c0_22] : memref<1x256x256xbf16, #tpu.memory_space<vmem>>, vector<1x256x256xbf16>
    %68 = vector.shape_cast %67 : vector<1x256x256xbf16> to vector<256x256xbf16>
    %cst_23 = arith.constant dense<0.000000e+00> : vector<32x256xf32>
    %69 = tpu.matmul %66, %68, %cst_23 {dimension_numbers = #tpu.dot_dimension_numbers<[1], [0], [0], [1], [0, 0, 1, 1], [], []>} : vector<32x256xbf16>, vector<256x256xbf16>, vector<32x256xf32> -> vector<32x256xf32>
    %c0_24 = arith.constant 0 : index
    %c0_25 = arith.constant 0 : index
    %c0_26 = arith.constant 0 : index
    %70 = vector.load %arg8[%c0_24, %c0_25, %c0_26] : memref<1x1x256xf32, #tpu.memory_space<vmem>>, vector<1x1x256xf32>
    %71 = vector.shape_cast %70 : vector<1x1x256xf32> to vector<1x256xf32>
    %72 = vector.broadcast %71 : vector<1x256xf32> to vector<32x256xf32>
    %73 = arith.addf %69, %72 : vector<32x256xf32>
    %74 = arith.addf %4, %73 : vector<32x256xf32>
    %cst_27 = arith.constant dense<0.000000e+00> : vector<32xf32>
    %75 = vector.multi_reduction <add>, %74, %cst_27 [1] : vector<32x256xf32> to vector<32xf32>
    %76 = vector.shape_cast %75 : vector<32xf32> to vector<32x1xf32>
    %cst_28 = arith.constant 2.560000e+02 : f32
    %77 = vector.broadcast %cst_28 : f32 to vector<32x1xf32>
    %78 = arith.divf %76, %77 : vector<32x1xf32>
    %79 = vector.broadcast %78 : vector<32x1xf32> to vector<32x256xf32>
    %80 = arith.subf %74, %79 : vector<32x256xf32>
    %81 = arith.mulf %80, %80 : vector<32x256xf32>
    %cst_29 = arith.constant dense<0.000000e+00> : vector<32xf32>
    %82 = vector.multi_reduction <add>, %81, %cst_29 [1] : vector<32x256xf32> to vector<32xf32>
    %83 = vector.shape_cast %82 : vector<32xf32> to vector<32x1xf32>
    %cst_30 = arith.constant 2.560000e+02 : f32
    %84 = vector.broadcast %cst_30 : f32 to vector<32x1xf32>
    %85 = arith.divf %83, %84 : vector<32x1xf32>
    %cst_31 = arith.constant 9.99999997E-7 : f32
    %86 = vector.broadcast %cst_31 : f32 to vector<32x1xf32>
    %87 = arith.addf %85, %86 : vector<32x1xf32>
    %88 = math.rsqrt %87 : vector<32x1xf32>
    %89 = vector.broadcast %88 : vector<32x1xf32> to vector<32x256xf32>
    %90 = arith.mulf %80, %89 : vector<32x256xf32>
    %c0_32 = arith.constant 0 : index
    %c0_33 = arith.constant 0 : index
    %c0_34 = arith.constant 0 : index
    %91 = vector.load %arg9[%c0_32, %c0_33, %c0_34] : memref<1x1x256xf32, #tpu.memory_space<vmem>>, vector<1x1x256xf32>
    %92 = vector.shape_cast %91 : vector<1x1x256xf32> to vector<1x256xf32>
    %93 = vector.broadcast %92 : vector<1x256xf32> to vector<32x256xf32>
    %94 = arith.mulf %90, %93 : vector<32x256xf32>
    %c0_35 = arith.constant 0 : index
    %c0_36 = arith.constant 0 : index
    %c0_37 = arith.constant 0 : index
    %95 = vector.load %arg10[%c0_35, %c0_36, %c0_37] : memref<1x1x256xf32, #tpu.memory_space<vmem>>, vector<1x1x256xf32>
    %96 = vector.shape_cast %95 : vector<1x1x256xf32> to vector<1x256xf32>
    %97 = vector.broadcast %96 : vector<1x256xf32> to vector<32x256xf32>
    %98 = arith.addf %94, %97 : vector<32x256xf32>
    %99 = arith.truncf %98 : vector<32x256xf32> to vector<32x256xbf16>
    %c0_38 = arith.constant 0 : index
    %c0_39 = arith.constant 0 : index
    %c0_40 = arith.constant 0 : index
    %100 = vector.load %arg11[%c0_38, %c0_39, %c0_40] : memref<1x256x512xbf16, #tpu.memory_space<vmem>>, vector<1x256x512xbf16>
    %101 = vector.shape_cast %100 : vector<1x256x512xbf16> to vector<256x512xbf16>
    %cst_41 = arith.constant dense<0.000000e+00> : vector<32x512xf32>
    %102 = tpu.matmul %99, %101, %cst_41 {dimension_numbers = #tpu.dot_dimension_numbers<[1], [0], [0], [1], [0, 0, 1, 1], [], []>} : vector<32x256xbf16>, vector<256x512xbf16>, vector<32x512xf32> -> vector<32x512xf32>
    %c0_42 = arith.constant 0 : index
    %c0_43 = arith.constant 0 : index
    %c0_44 = arith.constant 0 : index
    %103 = vector.load %arg12[%c0_42, %c0_43, %c0_44] : memref<1x1x512xf32, #tpu.memory_space<vmem>>, vector<1x1x512xf32>
    %104 = vector.shape_cast %103 : vector<1x1x512xf32> to vector<1x512xf32>
    %105 = vector.broadcast %104 : vector<1x512xf32> to vector<32x512xf32>
    %106 = arith.addf %102, %105 : vector<32x512xf32>
    %cst_45 = arith.constant 0.000000e+00 : f32
    %107 = vector.broadcast %cst_45 : f32 to vector<32x512xf32>
    %108 = arith.maximumf %106, %107 : vector<32x512xf32>
    %109 = arith.truncf %108 : vector<32x512xf32> to vector<32x512xbf16>
    %c0_46 = arith.constant 0 : index
    %c0_47 = arith.constant 0 : index
    %c0_48 = arith.constant 0 : index
    %110 = vector.load %arg13[%c0_46, %c0_47, %c0_48] : memref<1x512x256xbf16, #tpu.memory_space<vmem>>, vector<1x512x256xbf16>
    %111 = vector.shape_cast %110 : vector<1x512x256xbf16> to vector<512x256xbf16>
    %cst_49 = arith.constant dense<0.000000e+00> : vector<32x256xf32>
    %112 = tpu.matmul %109, %111, %cst_49 {dimension_numbers = #tpu.dot_dimension_numbers<[1], [0], [0], [1], [0, 0, 1, 1], [], []>} : vector<32x512xbf16>, vector<512x256xbf16>, vector<32x256xf32> -> vector<32x256xf32>
    %c0_50 = arith.constant 0 : index
    %c0_51 = arith.constant 0 : index
    %c0_52 = arith.constant 0 : index
    %113 = vector.load %arg14[%c0_50, %c0_51, %c0_52] : memref<1x1x256xf32, #tpu.memory_space<vmem>>, vector<1x1x256xf32>
    %114 = vector.shape_cast %113 : vector<1x1x256xf32> to vector<1x256xf32>
    %115 = vector.broadcast %114 : vector<1x256xf32> to vector<32x256xf32>
    %116 = arith.addf %112, %115 : vector<32x256xf32>
    %117 = arith.addf %98, %116 : vector<32x256xf32>
    %cst_53 = arith.constant dense<0.000000e+00> : vector<32xf32>
    %118 = vector.multi_reduction <add>, %117, %cst_53 [1] : vector<32x256xf32> to vector<32xf32>
    %119 = vector.shape_cast %118 : vector<32xf32> to vector<32x1xf32>
    %cst_54 = arith.constant 2.560000e+02 : f32
    %120 = vector.broadcast %cst_54 : f32 to vector<32x1xf32>
    %121 = arith.divf %119, %120 : vector<32x1xf32>
    %122 = vector.broadcast %121 : vector<32x1xf32> to vector<32x256xf32>
    %123 = arith.subf %117, %122 : vector<32x256xf32>
    %124 = arith.mulf %123, %123 : vector<32x256xf32>
    %cst_55 = arith.constant dense<0.000000e+00> : vector<32xf32>
    %125 = vector.multi_reduction <add>, %124, %cst_55 [1] : vector<32x256xf32> to vector<32xf32>
    %126 = vector.shape_cast %125 : vector<32xf32> to vector<32x1xf32>
    %cst_56 = arith.constant 2.560000e+02 : f32
    %127 = vector.broadcast %cst_56 : f32 to vector<32x1xf32>
    %128 = arith.divf %126, %127 : vector<32x1xf32>
    %cst_57 = arith.constant 9.99999997E-7 : f32
    %129 = vector.broadcast %cst_57 : f32 to vector<32x1xf32>
    %130 = arith.addf %128, %129 : vector<32x1xf32>
    %131 = math.rsqrt %130 : vector<32x1xf32>
    %132 = vector.broadcast %131 : vector<32x1xf32> to vector<32x256xf32>
    %133 = arith.mulf %123, %132 : vector<32x256xf32>
    %c0_58 = arith.constant 0 : index
    %c0_59 = arith.constant 0 : index
    %c0_60 = arith.constant 0 : index
    %134 = vector.load %arg15[%c0_58, %c0_59, %c0_60] : memref<1x1x256xf32, #tpu.memory_space<vmem>>, vector<1x1x256xf32>
    %135 = vector.shape_cast %134 : vector<1x1x256xf32> to vector<1x256xf32>
    %136 = vector.broadcast %135 : vector<1x256xf32> to vector<32x256xf32>
    %137 = arith.mulf %133, %136 : vector<32x256xf32>
    %c0_61 = arith.constant 0 : index
    %c0_62 = arith.constant 0 : index
    %c0_63 = arith.constant 0 : index
    %138 = vector.load %arg16[%c0_61, %c0_62, %c0_63] : memref<1x1x256xf32, #tpu.memory_space<vmem>>, vector<1x1x256xf32>
    %139 = vector.shape_cast %138 : vector<1x1x256xf32> to vector<1x256xf32>
    %140 = vector.broadcast %139 : vector<1x256xf32> to vector<32x256xf32>
    %141 = arith.addf %137, %140 : vector<32x256xf32>
    %142 = vector.shape_cast %141 : vector<32x256xf32> to vector<2x16x256xf32>
    %c0_64 = arith.constant 0 : index
    %c0_65 = arith.constant 0 : index
    %c0_66 = arith.constant 0 : index
    %143 = vector.load %arg17[%c0_64, %c0_65, %c0_66] : memref<2x16x256xf32, #tpu.memory_space<vmem>>, vector<2x16x256xf32>
    tpu.vector_store %arg17[%c0_64, %c0_65, %c0_66], %142 {strides = array<i32>} : memref<2x16x256xf32, #tpu.memory_space<vmem>>, vector<2x16x256xf32>,
    return
  }
  func.func @transform_0(%arg0: i32, %arg1: i32) -> (i32, i32, i32) {
    %c0_i32 = arith.constant 0 : i32
    %c0_i32_0 = arith.constant 0 : i32
    %c0_i32_1 = arith.constant 0 : i32
    return %arg0, %c0_i32, %c0_i32_0 : i32, i32, i32
  }
  func.func @transform_1(%arg0: i32, %arg1: i32) -> (i32, i32, i32) {
    %c0_i32 = arith.constant 0 : i32
    %c0_i32_0 = arith.constant 0 : i32
    %c0_i32_1 = arith.constant 0 : i32
    return %arg0, %c0_i32, %c0_i32_0 : i32, i32, i32
  }
  func.func @transform_2(%arg0: i32, %arg1: i32) -> (i32, i32, i32) {
    %c0_i32 = arith.constant 0 : i32
    %c0_i32_0 = arith.constant 0 : i32
    %c0_i32_1 = arith.constant 0 : i32
    return %arg0, %c0_i32, %c0_i32_0 : i32, i32, i32
  }
  func.func @transform_3(%arg0: i32, %arg1: i32) -> (i32, i32, i32) {
    %c0_i32 = arith.constant 0 : i32
    %c0_i32_0 = arith.constant 0 : i32
    %c0_i32_1 = arith.constant 0 : i32
    return %arg1, %c0_i32, %c0_i32_0 : i32, i32, i32
  }
  func.func @transform_4(%arg0: i32, %arg1: i32) -> (i32, i32, i32) {
    %c0_i32 = arith.constant 0 : i32
    %c0_i32_0 = arith.constant 0 : i32
    %c0_i32_1 = arith.constant 0 : i32
    return %arg1, %c0_i32, %c0_i32_0 : i32, i32, i32
  }
  func.func @transform_5(%arg0: i32, %arg1: i32) -> (i32, i32, i32) {
    %c0_i32 = arith.constant 0 : i32
    %c0_i32_0 = arith.constant 0 : i32
    %c0_i32_1 = arith.constant 0 : i32
    return %arg1, %c0_i32, %c0_i32_0 : i32, i32, i32
  }
  func.func @transform_6(%arg0: i32, %arg1: i32) -> (i32, i32, i32) {
    %c0_i32 = arith.constant 0 : i32
    %c0_i32_0 = arith.constant 0 : i32
    %c0_i32_1 = arith.constant 0 : i32
    return %arg1, %c0_i32, %c0_i32_0 : i32, i32, i32
  }
  func.func @transform_7(%arg0: i32, %arg1: i32) -> (i32, i32, i32) {
    %c0_i32 = arith.constant 0 : i32
    %c0_i32_0 = arith.constant 0 : i32
    %c0_i32_1 = arith.constant 0 : i32
    return %arg1, %c0_i32, %c0_i32_0 : i32, i32, i32
  }
  func.func @transform_8(%arg0: i32, %arg1: i32) -> (i32, i32, i32) {
    %c0_i32 = arith.constant 0 : i32
    %c0_i32_0 = arith.constant 0 : i32
    %c0_i32_1 = arith.constant 0 : i32
    return %arg1, %c0_i32, %c0_i32_0 : i32, i32, i32
  }
  func.func @transform_9(%arg0: i32, %arg1: i32) -> (i32, i32, i32) {
    %c0_i32 = arith.constant 0 : i32
    %c0_i32_0 = arith.constant 0 : i32
    %c0_i32_1 = arith.constant 0 : i32
    return %arg1, %c0_i32, %c0_i32_0 : i32, i32, i32
  }
  func.func @transform_10(%arg0: i32, %arg1: i32) -> (i32, i32, i32) {
    %c0_i32 = arith.constant 0 : i32
    %c0_i32_0 = arith.constant 0 : i32
    %c0_i32_1 = arith.constant 0 : i32
    return %arg1, %c0_i32, %c0_i32_0 : i32, i32, i32
  }
  func.func @transform_11(%arg0: i32, %arg1: i32) -> (i32, i32, i32) {
    %c0_i32 = arith.constant 0 : i32
    %c0_i32_0 = arith.constant 0 : i32
    %c0_i32_1 = arith.constant 0 : i32
    return %arg1, %c0_i32, %c0_i32_0 : i32, i32, i32
  }
  func.func @transform_12(%arg0: i32, %arg1: i32) -> (i32, i32, i32) {
    %c0_i32 = arith.constant 0 : i32
    %c0_i32_0 = arith.constant 0 : i32
    %c0_i32_1 = arith.constant 0 : i32
    return %arg1, %c0_i32, %c0_i32_0 : i32, i32, i32
  }
  func.func @transform_13(%arg0: i32, %arg1: i32) -> (i32, i32, i32) {
    %c0_i32 = arith.constant 0 : i32
    %c0_i32_0 = arith.constant 0 : i32
    %c0_i32_1 = arith.constant 0 : i32
    return %arg1, %c0_i32, %c0_i32_0 : i32, i32, i32
  }
  func.func @transform_14(%arg0: i32, %arg1: i32) -> (i32, i32, i32) {
    %c0_i32 = arith.constant 0 : i32
    %c0_i32_0 = arith.constant 0 : i32
    %c0_i32_1 = arith.constant 0 : i32
    return %arg1, %c0_i32, %c0_i32_0 : i32, i32, i32
  }
  func.func @transform_15(%arg0: i32, %arg1: i32) -> (i32, i32, i32) {
    %c0_i32 = arith.constant 0 : i32
    %c0_i32_0 = arith.constant 0 : i32
    %c0_i32_1 = arith.constant 0 : i32
    return %arg0, %c0_i32, %c0_i32_0 : i32, i32, i32
  }
}

</mosaic_0001>

<llo_original>
// kernel: tpu_custom_call.1
$region0: #{tpu_custom_call.1}
  #allocation0 [shape = 'u32[]', space=smem, size = 0x4, offset = 0x4, fixed_abs, tag = 'smem constant byte address 0x4 - core index']
  #allocation1 [shape = 'u32[72,128]{1,0:T(1,128)}', space=vmem, size = 0x9000, scoped, tag = 'internal scratch']
  #allocation2 [shape = 'f32[2,16,16]{2,1,0:T(8,128)}', space=vmem, size = 0x4000, scoped, tag = 'scratch operand']
  %s0 = inlined_call_operand.hbm [shape: f32[4,16,256], index: 0, kind: input, shape index: {}]
  %s1 = inlined_call_operand.vmem [shape: f32[4,1,16], index: 1, kind: input, shape index: {}]
  %s2 = inlined_call_operand.vmem [shape: f32[4,16,1], index: 2, kind: input, shape index: {}]
  %s3 = inlined_call_operand.hbm [shape: bf16[2,256,768], index: 3, kind: input, shape index: {}]
  %s4 = inlined_call_operand.vmem [shape: f32[2,1,768], index: 4, kind: input, shape index: {}]
  %s5 = inlined_call_operand.hbm [shape: bf16[2,256,256], index: 5, kind: input, shape index: {}]
  %s6 = inlined_call_operand.vmem [shape: f32[2,1,256], index: 6, kind: input, shape index: {}]
  %s7 = inlined_call_operand.vmem [shape: f32[2,1,256], index: 7, kind: input, shape index: {}]
  %s8 = inlined_call_operand.vmem [shape: f32[2,1,256], index: 8, kind: input, shape index: {}]
  %s9 = inlined_call_operand.hbm [shape: bf16[2,256,512], index: 9, kind: input, shape index: {}]
  %s10 = inlined_call_operand.vmem [shape: f32[2,1,512], index: 10, kind: input, shape index: {}]
  %s11 = inlined_call_operand.hbm [shape: bf16[2,512,256], index: 11, kind: input, shape index: {}]
  %s12 = inlined_call_operand.vmem [shape: f32[2,1,256], index: 12, kind: input, shape index: {}]
  %s13 = inlined_call_operand.vmem [shape: f32[2,1,256], index: 13, kind: input, shape index: {}]
  %s14 = inlined_call_operand.vmem [shape: f32[2,1,256], index: 14, kind: input, shape index: {}]
  %s15 = inlined_call_operand.hbm [shape: f32[4,16,256], index: 15, kind: output, shape index: {}]
  %s16 = sld [smem:[#allocation0]]
  $region117: #{tpu_custom_call.1} parent=0
    _
  %s18 = ssub.s32 1, %s16
  %s19 = scalar_select 0, %s18, %s16
  $region1: #{tpu_custom_call.1} parent=0
    #allocation3 [shape = 'u8[65536]{0}', space=vmem, size = 0x10000, scoped, tag = 'input window, operand 0']
    #allocation4 [shape = 's32[2]{0}', space=sflag, size = 0x8, scoped, tag = 'scoped memory for tpu_custom_call.1']
    #allocation5 [shape = 's32[2]{0}', space=sflag, size = 0x8, scoped, tag = 'scoped memory for tpu_custom_call.1']
    #allocation6 [shape = 'u8[786432]{0}', space=vmem, size = 0xc0000, scoped, tag = 'input window, operand 3']
    #allocation7 [shape = 's32[2]{0}', space=sflag, size = 0x8, scoped, tag = 'scoped memory for tpu_custom_call.1']
    #allocation8 [shape = 'u8[262144]{0}', space=vmem, size = 0x40000, scoped, tag = 'input window, operand 5']
    #allocation9 [shape = 'u8[524288]{0}', space=vmem, size = 0x80000, scoped, tag = 'input window, operand 9']
    #allocation10 [shape = 's32[2]{0}', space=sflag, size = 0x8, scoped, tag = 'scoped memory for tpu_custom_call.1']
    #allocation11 [shape = 'u8[524288]{0}', space=vmem, size = 0x80000, scoped, tag = 'input window, operand 11']
    #allocation12 [shape = 'u8[65536]{0}', space=vmem, size = 0x10000, scoped, tag = 'output window, operand 0']
    %20 = vsyncpa [#allocation4], 0
    %s21 = scalar_lea.sflag [#allocation4], 1
    %22 = vsyncpa %s21, 0
    %23 = vsyncpa [#allocation7], 0
    %s24 = scalar_lea.sflag [#allocation7], 1
    %25 = vsyncpa %s24, 0
    %26 = vsyncpa [#allocation10], 0
    %s27 = scalar_lea.sflag [#allocation10], 1
    %28 = vsyncpa %s27, 0
    %29 = vsyncpa [#allocation5], 0
    %s30 = scalar_lea.sflag [#allocation5], 1
    %31 = vsyncpa %s30, 0
    loop: start=0, step=1, limit=6
    $region2: #{tpu_custom_call.1} parent=1 // loop_pre_header
      _
    $region3: #{tpu_custom_call.1} parent=1 // loop_header
      %s33 = sphi 0, %s37
      %p34 = scmp.ge.s32.totalorder %s33, 6
      %s40 = sphi 0, %s52
      %s41 = sphi 0, %s48
      %s42 = sphi 0, %s40
      %s43 = sphi 0, %s41
      %s44 = sphi 0, %s42
      %s45 = sphi 0, %s43
      %s55 = sphi 0, %s57
      %s58 = sphi 0, %s55
      %s59 = sphi 0, %s58
      %s75 = sphi 0, %s59
      %s81 = sphi 0, %s83
      %s84 = sphi 0, %s81
      %s85 = sphi 0, %s84
      %s101 = sphi 0, %s85
      %s107 = sphi 0, %s109
      %s110 = sphi 0, %s107
      %s111 = sphi 0, %s110
      %s127 = sphi 0, %s111
      %s133 = sphi 0, %s135
      %s136 = sphi 0, %s133
      %s137 = sphi 0, %s136
      %s153 = sphi 0, %s137
      %s159 = sphi 0, %s161
      %s162 = sphi 0, %s159
      %s163 = sphi 0, %s162
      %s179 = sphi 0, %s163
      %s185 = sphi 0, %s187
      %s188 = sphi 0, %s185
      %s189 = sphi 0, %s188
      %s205 = sphi 0, %s189
      %s211 = sphi 0, %s213
      %s214 = sphi 0, %s211
      %s215 = sphi 0, %s214
      %s231 = sphi 0, %s215
      %s237 = sphi 0, %s239
      %s240 = sphi 0, %s237
      %s241 = sphi 0, %s240
      %s257 = sphi 0, %s241
      %s263 = sphi 0, %s265
      %s266 = sphi 0, %s263
      %s267 = sphi 0, %s266
      %s283 = sphi 0, %s267
      %s289 = sphi 0, %s291
      %s292 = sphi 0, %s289
      %s293 = sphi 0, %s292
      %s309 = sphi 0, %s293
      %s315 = sphi 0, %s317
      %s318 = sphi 0, %s315
      %s319 = sphi 0, %s318
      %s335 = sphi 0, %s319
      %s341 = sphi 0, %s343
      %s344 = sphi 0, %s341
      %s345 = sphi 0, %s344
      %s361 = sphi 0, %s345
      %s367 = sphi 0, %s369
      %s370 = sphi 0, %s367
      %s371 = sphi 0, %s370
      %s387 = sphi 0, %s371
      %s393 = sphi 0, %s395
      %s396 = sphi 0, %s393
      %s397 = sphi 0, %s396
      %s413 = sphi 0, %s397
      %s419 = sphi 0, %s421
      %s422 = sphi 0, %s419
      %s423 = sphi 0, %s422
      %s439 = sphi 0, %s423
      %s445 = sphi 0, %s447
      %s448 = sphi 0, %s445
      %s449 = sphi 0, %s448
      %s465 = sphi 0, %s449
    $region4: #{tpu_custom_call.1} parent=1 // loop_header_branch
      %36 = sbr.rel (%p34) target = $region8
    $region5: #{tpu_custom_call.1} parent=1 // loop_body
      %s38 = ssub.s32 %s33, 1
      %s39 = ssub.s32 %s33, 2
      %s46 = sadd.s32 1, %s41
      %p47 = scmp.ge.s32.totalorder %s46, 2
      %s48 = scalar_select %p47, 0, %s46
      %s49 = sadd.s32 1, %s40
      %s50 = scalar_select %p47, %s49, %s40
      %p51 = scmp.ge.s32.totalorder %s50, 2
      %s52 = scalar_select %p51, 0, %s50
      %s53 = ssub.s32 %s40, %s52
      %p54 = scmp.eq.s32.totalorder %s53, 0
      %s56 = sadd.s32 %s55, 1
      %s57 = scalar_select %p54, %s55, %s56
      %p60 = pneg %p54
      %p61 = scmp.eq.s32.totalorder %s33, 3
      %p62 = por %p60, %p61
      %p63 = scmp.ne.s32.totalorder %s55, %s58
      %p64 = scmp.eq.s32.totalorder %s33, 0
      %p65 = por %p63, %p64
      %p66 = scmp.ne.s32.totalorder %s55, %s58
      %p67 = scmp.eq.s32.totalorder %s38, 3
      %p68 = por %p66, %p67
      %p69 = scmp.ne.s32.totalorder %s58, %s59
      %p70 = scmp.eq.s32.totalorder %s38, 0
      %p71 = por %p69, %p70
      %p72 = scmp.ne.s32.totalorder %s58, %s59
      %p73 = scmp.eq.s32.totalorder %s39, 3
      %p74 = por %p72, %p73
      %p76 = scmp.ne.s32.totalorder %s59, %s75
      %p77 = scmp.eq.s32.totalorder %s39, 0
      %p78 = por %p76, %p77
      %s79 = ssub.s32 %s40, %s52
      %p80 = scmp.eq.s32.totalorder %s79, 0
      %s82 = sadd.s32 %s81, 1
      %s83 = scalar_select %p80, %s81, %s82
      %p86 = pneg %p80
      %p87 = scmp.eq.s32.totalorder %s33, 3
      %p88 = por %p86, %p87
      %p89 = scmp.ne.s32.totalorder %s81, %s84
      %p90 = scmp.eq.s32.totalorder %s33, 0
      %p91 = por %p89, %p90
      %p92 = scmp.ne.s32.totalorder %s81, %s84
      %p93 = scmp.eq.s32.totalorder %s38, 3
      %p94 = por %p92, %p93
      %p95 = scmp.ne.s32.totalorder %s84, %s85
      %p96 = scmp.eq.s32.totalorder %s38, 0
      %p97 = por %p95, %p96
      %p98 = scmp.ne.s32.totalorder %s84, %s85
      %p99 = scmp.eq.s32.totalorder %s39, 3
      %p100 = por %p98, %p99
      %p102 = scmp.ne.s32.totalorder %s85, %s101
      %p103 = scmp.eq.s32.totalorder %s39, 0
      %p104 = por %p102, %p103
      %s105 = ssub.s32 %s40, %s52
      %p106 = scmp.eq.s32.totalorder %s105, 0
      %s108 = sadd.s32 %s107, 1
      %s109 = scalar_select %p106, %s107, %s108
      %p112 = pneg %p106
      %p113 = scmp.eq.s32.totalorder %s33, 3
      %p114 = por %p112, %p113
      %p115 = scmp.ne.s32.totalorder %s107, %s110
      %p116 = scmp.eq.s32.totalorder %s33, 0
      %p117 = por %p115, %p116
      %p118 = scmp.ne.s32.totalorder %s107, %s110
      %p119 = scmp.eq.s32.totalorder %s38, 3
      %p120 = por %p118, %p119
      %p121 = scmp.ne.s32.totalorder %s110, %s111
      %p122 = scmp.eq.s32.totalorder %s38, 0
      %p123 = por %p121, %p122
      %p124 = scmp.ne.s32.totalorder %s110, %s111
      %p125 = scmp.eq.s32.totalorder %s39, 3
      %p126 = por %p124, %p125
      %p128 = scmp.ne.s32.totalorder %s111, %s127
      %p129 = scmp.eq.s32.totalorder %s39, 0
      %p130 = por %p128, %p129
      %s131 = ssub.s32 %s41, %s48
      %p132 = scmp.eq.s32.totalorder %s131, 0
      %s134 = sadd.s32 %s133, 1
      %s135 = scalar_select %p132, %s133, %s134
      %p138 = pneg %p132
      %p139 = scmp.eq.s32.totalorder %s33, 3
      %p140 = por %p138, %p139
      %p141 = scmp.ne.s32.totalorder %s133, %s136
      %p142 = scmp.eq.s32.totalorder %s33, 0
      %p143 = por %p141, %p142
      %p144 = scmp.ne.s32.totalorder %s133, %s136
      %p145 = scmp.eq.s32.totalorder %s38, 3
      %p146 = por %p144, %p145
      %p147 = scmp.ne.s32.totalorder %s136, %s137
      %p148 = scmp.eq.s32.totalorder %s38, 0
      %p149 = por %p147, %p148
      %p150 = scmp.ne.s32.totalorder %s136, %s137
      %p151 = scmp.eq.s32.totalorder %s39, 3
      %p152 = por %p150, %p151
      %p154 = scmp.ne.s32.totalorder %s137, %s153
      %p155 = scmp.eq.s32.totalorder %s39, 0
      %p156 = por %p154, %p155
      %s157 = ssub.s32 %s41, %s48
      %p158 = scmp.eq.s32.totalorder %s157, 0
      %s160 = sadd.s32 %s159, 1
      %s161 = scalar_select %p158, %s159, %s160
      %p164 = pneg %p158
      %p165 = scmp.eq.s32.totalorder %s33, 3
      %p166 = por %p164, %p165
      %p167 = scmp.ne.s32.totalorder %s159, %s162
      %p168 = scmp.eq.s32.totalorder %s33, 0
      %p169 = por %p167, %p168
      %p170 = scmp.ne.s32.totalorder %s159, %s162
      %p171 = scmp.eq.s32.totalorder %s38, 3
      %p172 = por %p170, %p171
      %p173 = scmp.ne.s32.totalorder %s162, %s163
      %p174 = scmp.eq.s32.totalorder %s38, 0
      %p175 = por %p173, %p174
      %p176 = scmp.ne.s32.totalorder %s162, %s163
      %p177 = scmp.eq.s32.totalorder %s39, 3
      %p178 = por %p176, %p177
      %p180 = scmp.ne.s32.totalorder %s163, %s179
      %p181 = scmp.eq.s32.totalorder %s39, 0
      %p182 = por %p180, %p181
      %s183 = ssub.s32 %s41, %s48
      %p184 = scmp.eq.s32.totalorder %s183, 0
      %s186 = sadd.s32 %s185, 1
      %s187 = scalar_select %p184, %s185, %s186
      %p190 = pneg %p184
      %p191 = scmp.eq.s32.totalorder %s33, 3
      %p192 = por %p190, %p191
      %p193 = scmp.ne.s32.totalorder %s185, %s188
      %p194 = scmp.eq.s32.totalorder %s33, 0
      %p195 = por %p193, %p194
      %p196 = scmp.ne.s32.totalorder %s185, %s188
      %p197 = scmp.eq.s32.totalorder %s38, 3
      %p198 = por %p196, %p197
      %p199 = scmp.ne.s32.totalorder %s188, %s189
      %p200 = scmp.eq.s32.totalorder %s38, 0
      %p201 = por %p199, %p200
      %p202 = scmp.ne.s32.totalorder %s188, %s189
      %p203 = scmp.eq.s32.totalorder %s39, 3
      %p204 = por %p202, %p203
      %p206 = scmp.ne.s32.totalorder %s189, %s205
      %p207 = scmp.eq.s32.totalorder %s39, 0
      %p208 = por %p206, %p207
      %s209 = ssub.s32 %s41, %s48
      %p210 = scmp.eq.s32.totalorder %s209, 0
      %s212 = sadd.s32 %s211, 1
      %s213 = scalar_select %p210, %s211, %s212
      %p216 = pneg %p210
      %p217 = scmp.eq.s32.totalorder %s33, 3
      %p218 = por %p216, %p217
      %p219 = scmp.ne.s32.totalorder %s211, %s214
      %p220 = scmp.eq.s32.totalorder %s33, 0
      %p221 = por %p219, %p220
      %p222 = scmp.ne.s32.totalorder %s211, %s214
      %p223 = scmp.eq.s32.totalorder %s38, 3
      %p224 = por %p222, %p223
      %p225 = scmp.ne.s32.totalorder %s214, %s215
      %p226 = scmp.eq.s32.totalorder %s38, 0
      %p227 = por %p225, %p226
      %p228 = scmp.ne.s32.totalorder %s214, %s215
      %p229 = scmp.eq.s32.totalorder %s39, 3
      %p230 = por %p228, %p229
      %p232 = scmp.ne.s32.totalorder %s215, %s231
      %p233 = scmp.eq.s32.totalorder %s39, 0
      %p234 = por %p232, %p233
      %s235 = ssub.s32 %s41, %s48
      %p236 = scmp.eq.s32.totalorder %s235, 0
      %s238 = sadd.s32 %s237, 1
      %s239 = scalar_select %p236, %s237, %s238
      %p242 = pneg %p236
      %p243 = scmp.eq.s32.totalorder %s33, 3
      %p244 = por %p242, %p243
      %p245 = scmp.ne.s32.totalorder %s237, %s240
      %p246 = scmp.eq.s32.totalorder %s33, 0
      %p247 = por %p245, %p246
      %p248 = scmp.ne.s32.totalorder %s237, %s240
      %p249 = scmp.eq.s32.totalorder %s38, 3
      %p250 = por %p248, %p249
      %p251 = scmp.ne.s32.totalorder %s240, %s241
      %p252 = scmp.eq.s32.totalorder %s38, 0
      %p253 = por %p251, %p252
      %p254 = scmp.ne.s32.totalorder %s240, %s241
      %p255 = scmp.eq.s32.totalorder %s39, 3
      %p256 = por %p254, %p255
      %p258 = scmp.ne.s32.totalorder %s241, %s257
      %p259 = scmp.eq.s32.totalorder %s39, 0
      %p260 = por %p258, %p259
      %s261 = ssub.s32 %s41, %s48
      %p262 = scmp.eq.s32.totalorder %s261, 0
      %s264 = sadd.s32 %s263, 1
      %s265 = scalar_select %p262, %s263, %s264
      %p268 = pneg %p262
      %p269 = scmp.eq.s32.totalorder %s33, 3
      %p270 = por %p268, %p269
      %p271 = scmp.ne.s32.totalorder %s263, %s266
      %p272 = scmp.eq.s32.totalorder %s33, 0
      %p273 = por %p271, %p272
      %p274 = scmp.ne.s32.totalorder %s263, %s266
      %p275 = scmp.eq.s32.totalorder %s38, 3
      %p276 = por %p274, %p275
      %p277 = scmp.ne.s32.totalorder %s266, %s267
      %p278 = scmp.eq.s32.totalorder %s38, 0
      %p279 = por %p277, %p278
      %p280 = scmp.ne.s32.totalorder %s266, %s267
      %p281 = scmp.eq.s32.totalorder %s39, 3
      %p282 = por %p280, %p281
      %p284 = scmp.ne.s32.totalorder %s267, %s283
      %p285 = scmp.eq.s32.totalorder %s39, 0
      %p286 = por %p284, %p285
      %s287 = ssub.s32 %s41, %s48
      %p288 = scmp.eq.s32.totalorder %s287, 0
      %s290 = sadd.s32 %s289, 1
      %s291 = scalar_select %p288, %s289, %s290
      %p294 = pneg %p288
      %p295 = scmp.eq.s32.totalorder %s33, 3
      %p296 = por %p294, %p295
      %p297 = scmp.ne.s32.totalorder %s289, %s292
      %p298 = scmp.eq.s32.totalorder %s33, 0
      %p299 = por %p297, %p298
      %p300 = scmp.ne.s32.totalorder %s289, %s292
      %p301 = scmp.eq.s32.totalorder %s38, 3
      %p302 = por %p300, %p301
      %p303 = scmp.ne.s32.totalorder %s292, %s293
      %p304 = scmp.eq.s32.totalorder %s38, 0
      %p305 = por %p303, %p304
      %p306 = scmp.ne.s32.totalorder %s292, %s293
      %p307 = scmp.eq.s32.totalorder %s39, 3
      %p308 = por %p306, %p307
      %p310 = scmp.ne.s32.totalorder %s293, %s309
      %p311 = scmp.eq.s32.totalorder %s39, 0
      %p312 = por %p310, %p311
      %s313 = ssub.s32 %s41, %s48
      %p314 = scmp.eq.s32.totalorder %s313, 0
      %s316 = sadd.s32 %s315, 1
      %s317 = scalar_select %p314, %s315, %s316
      %p320 = pneg %p314
      %p321 = scmp.eq.s32.totalorder %s33, 3
      %p322 = por %p320, %p321
      %p323 = scmp.ne.s32.totalorder %s315, %s318
      %p324 = scmp.eq.s32.totalorder %s33, 0
      %p325 = por %p323, %p324
      %p326 = scmp.ne.s32.totalorder %s315, %s318
      %p327 = scmp.eq.s32.totalorder %s38, 3
      %p328 = por %p326, %p327
      %p329 = scmp.ne.s32.totalorder %s318, %s319
      %p330 = scmp.eq.s32.totalorder %s38, 0
      %p331 = por %p329, %p330
      %p332 = scmp.ne.s32.totalorder %s318, %s319
      %p333 = scmp.eq.s32.totalorder %s39, 3
      %p334 = por %p332, %p333
      %p336 = scmp.ne.s32.totalorder %s319, %s335
      %p337 = scmp.eq.s32.totalorder %s39, 0
      %p338 = por %p336, %p337
      %s339 = ssub.s32 %s41, %s48
      %p340 = scmp.eq.s32.totalorder %s339, 0
      %s342 = sadd.s32 %s341, 1
      %s343 = scalar_select %p340, %s341, %s342
      %p346 = pneg %p340
      %p347 = scmp.eq.s32.totalorder %s33, 3
      %p348 = por %p346, %p347
      %p349 = scmp.ne.s32.totalorder %s341, %s344
      %p350 = scmp.eq.s32.totalorder %s33, 0
      %p351 = por %p349, %p350
      %p352 = scmp.ne.s32.totalorder %s341, %s344
      %p353 = scmp.eq.s32.totalorder %s38, 3
      %p354 = por %p352, %p353
      %p355 = scmp.ne.s32.totalorder %s344, %s345
      %p356 = scmp.eq.s32.totalorder %s38, 0
      %p357 = por %p355, %p356
      %p358 = scmp.ne.s32.totalorder %s344, %s345
      %p359 = scmp.eq.s32.totalorder %s39, 3
      %p360 = por %p358, %p359
      %p362 = scmp.ne.s32.totalorder %s345, %s361
      %p363 = scmp.eq.s32.totalorder %s39, 0
      %p364 = por %p362, %p363
      %s365 = ssub.s32 %s41, %s48
      %p366 = scmp.eq.s32.totalorder %s365, 0
      %s368 = sadd.s32 %s367, 1
      %s369 = scalar_select %p366, %s367, %s368
      %p372 = pneg %p366
      %p373 = scmp.eq.s32.totalorder %s33, 3
      %p374 = por %p372, %p373
      %p375 = scmp.ne.s32.totalorder %s367, %s370
      %p376 = scmp.eq.s32.totalorder %s33, 0
      %p377 = por %p375, %p376
      %p378 = scmp.ne.s32.totalorder %s367, %s370
      %p379 = scmp.eq.s32.totalorder %s38, 3
      %p380 = por %p378, %p379
      %p381 = scmp.ne.s32.totalorder %s370, %s371
      %p382 = scmp.eq.s32.totalorder %s38, 0
      %p383 = por %p381, %p382
      %p384 = scmp.ne.s32.totalorder %s370, %s371
      %p385 = scmp.eq.s32.totalorder %s39, 3
      %p386 = por %p384, %p385
      %p388 = scmp.ne.s32.totalorder %s371, %s387
      %p389 = scmp.eq.s32.totalorder %s39, 0
      %p390 = por %p388, %p389
      %s391 = ssub.s32 %s41, %s48
      %p392 = scmp.eq.s32.totalorder %s391, 0
      %s394 = sadd.s32 %s393, 1
      %s395 = scalar_select %p392, %s393, %s394
      %p398 = pneg %p392
      %p399 = scmp.eq.s32.totalorder %s33, 3
      %p400 = por %p398, %p399
      %p401 = scmp.ne.s32.totalorder %s393, %s396
      %p402 = scmp.eq.s32.totalorder %s33, 0
      %p403 = por %p401, %p402
      %p404 = scmp.ne.s32.totalorder %s393, %s396
      %p405 = scmp.eq.s32.totalorder %s38, 3
      %p406 = por %p404, %p405
      %p407 = scmp.ne.s32.totalorder %s396, %s397
      %p408 = scmp.eq.s32.totalorder %s38, 0
      %p409 = por %p407, %p408
      %p410 = scmp.ne.s32.totalorder %s396, %s397
      %p411 = scmp.eq.s32.totalorder %s39, 3
      %p412 = por %p410, %p411
      %p414 = scmp.ne.s32.totalorder %s397, %s413
      %p415 = scmp.eq.s32.totalorder %s39, 0
      %p416 = por %p414, %p415
      %s417 = ssub.s32 %s41, %s48
      %p418 = scmp.eq.s32.totalorder %s417, 0
      %s420 = sadd.s32 %s419, 1
      %s421 = scalar_select %p418, %s419, %s420
      %p424 = pneg %p418
      %p425 = scmp.eq.s32.totalorder %s33, 3
      %p426 = por %p424, %p425
      %p427 = scmp.ne.s32.totalorder %s419, %s422
      %p428 = scmp.eq.s32.totalorder %s33, 0
      %p429 = por %p427, %p428
      %p430 = scmp.ne.s32.totalorder %s419, %s422
      %p431 = scmp.eq.s32.totalorder %s38, 3
      %p432 = por %p430, %p431
      %p433 = scmp.ne.s32.totalorder %s422, %s423
      %p434 = scmp.eq.s32.totalorder %s38, 0
      %p435 = por %p433, %p434
      %p436 = scmp.ne.s32.totalorder %s422, %s423
      %p437 = scmp.eq.s32.totalorder %s39, 3
      %p438 = por %p436, %p437
      %p440 = scmp.ne.s32.totalorder %s423, %s439
      %p441 = scmp.eq.s32.totalorder %s39, 0
      %p442 = por %p440, %p441
      %s443 = ssub.s32 %s40, %s52
      %p444 = scmp.eq.s32.totalorder %s443, 0
      %s446 = sadd.s32 %s445, 1
      %s447 = scalar_select %p444, %s445, %s446
      %p450 = pneg %p444
      %p451 = scmp.eq.s32.totalorder %s33, 3
      %p452 = por %p450, %p451
      %p453 = scmp.ne.s32.totalorder %s445, %s448
      %p454 = scmp.eq.s32.totalorder %s33, 0
      %p455 = por %p453, %p454
      %p456 = scmp.ne.s32.totalorder %s445, %s448
      %p457 = scmp.eq.s32.totalorder %s38, 3
      %p458 = por %p456, %p457
      %p459 = scmp.ne.s32.totalorder %s448, %s449
      %p460 = scmp.eq.s32.totalorder %s38, 0
      %p461 = por %p459, %p460
      %p462 = scmp.ne.s32.totalorder %s448, %s449
      %p463 = scmp.eq.s32.totalorder %s39, 3
      %p464 = por %p462, %p463
      %p466 = scmp.ne.s32.totalorder %s449, %s465
      %p467 = scmp.eq.s32.totalorder %s39, 0
      %p468 = por %p466, %p467
      %p469 = scmp.le.s32.totalorder 1, %s33
      %p470 = scmp.lt.s32.totalorder %s33, 5
      %p471 = pnand %p469, %p470
      %p472 = pneg %p471
      // Predicated region
      $region9: #{tpu_custom_call.1} parent=5 // pred_check
        _
      $region10: #{tpu_custom_call.1} parent=5 // pred_check_branch
        %474 = sbr.rel (%p471) target = $region12
      $region11: #{tpu_custom_call.1} parent=5 // pred_region
        %s475 = ssub.s32 %s33, 1
      $region12: #{tpu_custom_call.1} parent=5 // pred_fallthru
        _
      %p476 = scmp.lt.s32.totalorder %s33, 4
      // Predicated region
      $region13: #{tpu_custom_call.1} parent=5 // pred_check
        %p477 = pneg %p476
      $region14: #{tpu_custom_call.1} parent=5 // pred_check_branch
        %479 = sbr.rel (%p477) target = $region16
      $region15: #{tpu_custom_call.1} parent=5 // pred_region
        // Predicated region
        $region17: #{tpu_custom_call.1} parent=15 // pred_check
          %p480 = pneg %p65
        $region18: #{tpu_custom_call.1} parent=15 // pred_check_branch
          %482 = sbr.rel (%p480) target = $region20
        $region19: #{tpu_custom_call.1} parent=15 // pred_region
          %s483 = sand.u32 %s55, 1
          %s484 = scalar_lea.sflag [#allocation4], %s483
          %s485 = sand.u32 %s55, 1
          %s486 = smul.addr %s485, 64
          %s487 = scalar_lea.vmem [#allocation3], %s486
          %s488 = smul.u32 2, %s40
          %490 = vsyncadd %s484, 0
          %s491 = smul.addr %s488, 4
          %s492 = smul.addr %s491, 8
          %s493 = scalar_lea.hbm %s0, %s492
          %s494 = sshll.u32 %s493, 4
          %s495 = int_to_ptr.hbm [resolvable:$true] %s494
          %s496 = sshll.u32 %s487, 4
          %s497 = int_to_ptr.vmem [resolvable:$true] %s496
          %502 = dma.hbm_to_vmem [thread:$0]  %s495, 1024, %s497, %s484, 256, 256, 16
        $region20: #{tpu_custom_call.1} parent=15 // pred_fallthru
          _
        // Predicated region
        $region21: #{tpu_custom_call.1} parent=15 // pred_check
          %p503 = pneg %p91
        $region22: #{tpu_custom_call.1} parent=15 // pred_check_branch
          %505 = sbr.rel (%p503) target = $region24
        $region23: #{tpu_custom_call.1} parent=15 // pred_region
          %s506 = smul.u32 2, %s40
          %p507 = scmp.lt.s32.totalorder %s506, 3
          %s508 = scalar_select %p507, %s506, 3
          %s509 = scalar_lea.vmem %s1, %s508
          %s510 = smul.u32 2, %s40
        $region24: #{tpu_custom_call.1} parent=15 // pred_fallthru
          _
        // Predicated region
        $region25: #{tpu_custom_call.1} parent=15 // pred_check
          %p511 = pneg %p117
        $region26: #{tpu_custom_call.1} parent=15 // pred_check_branch
          %513 = sbr.rel (%p511) target = $region28
        $region27: #{tpu_custom_call.1} parent=15 // pred_region
          %s514 = smul.u32 2, %s40
          %p515 = scmp.lt.s32.totalorder %s514, 3
          %s516 = scalar_select %p515, %s514, 3
          %s517 = smul.addr %s516, 2
          %s518 = smul.addr %s517, 8
          %s519 = scalar_lea.vmem %s2, %s518
          %s520 = smul.u32 2, %s40
        $region28: #{tpu_custom_call.1} parent=15 // pred_fallthru
          _
        // Predicated region
        $region29: #{tpu_custom_call.1} parent=15 // pred_check
          %p521 = pneg %p143
        $region30: #{tpu_custom_call.1} parent=15 // pred_check_branch
          %523 = sbr.rel (%p521) target = $region32
        $region31: #{tpu_custom_call.1} parent=15 // pred_region
          %s524 = sand.u32 %s33, 1
          %s525 = scalar_lea.sflag [#allocation7], %s524
          %s526 = sand.u32 %s133, 1
          %s527 = smul.addr %s526, 768
          %s528 = scalar_lea.vmem [#allocation6], %s527
          %530 = vsyncadd %s525, 0
          %s531 = smul.addr %s41, 192
          %s532 = smul.addr %s531, 4
          %s533 = scalar_lea.hbm %s3, %s532
          %s534 = sshll.u32 %s533, 4
          %s535 = int_to_ptr.hbm [resolvable:$true] %s534
          %s536 = sshll.u32 %s528, 4
          %s537 = int_to_ptr.vmem [resolvable:$true] %s536
          %542 = dma.hbm_to_vmem [thread:$0]  %s535, 12288, %s537, %s525, 384, 384, 24
        $region32: #{tpu_custom_call.1} parent=15 // pred_fallthru
          _
        // Predicated region
        $region33: #{tpu_custom_call.1} parent=15 // pred_check
          %p543 = pneg %p169
        $region34: #{tpu_custom_call.1} parent=15 // pred_check_branch
          %545 = sbr.rel (%p543) target = $region36
        $region35: #{tpu_custom_call.1} parent=15 // pred_region
          %p546 = scmp.lt.s32.totalorder %s41, 1
          %s547 = scalar_select %p546, %s41, 1
          %s548 = smul.addr %s547, 6
          %s549 = scalar_lea.vmem %s4, %s548
        $region36: #{tpu_custom_call.1} parent=15 // pred_fallthru
          _
        // Predicated region
        $region37: #{tpu_custom_call.1} parent=15 // pred_check
          %p550 = pneg %p195
        $region38: #{tpu_custom_call.1} parent=15 // pred_check_branch
          %552 = sbr.rel (%p550) target = $region40
        $region39: #{tpu_custom_call.1} parent=15 // pred_region
          %s553 = sand.u32 %s33, 1
          %s554 = scalar_lea.sflag [#allocation7], %s553
          %s555 = sand.u32 %s185, 1
          %s556 = smul.addr %s555, 256
          %s557 = scalar_lea.vmem [#allocation8], %s556
          %559 = vsyncadd %s554, 0
          %s560 = smul.addr %s41, 64
          %s561 = smul.addr %s560, 4
          %s562 = scalar_lea.hbm %s5, %s561
          %s563 = sshll.u32 %s562, 4
          %s564 = int_to_ptr.hbm [resolvable:$true] %s563
          %s565 = sshll.u32 %s557, 4
          %s566 = int_to_ptr.vmem [resolvable:$true] %s565
          %571 = dma.hbm_to_vmem [thread:$0]  %s564, 4096, %s566, %s554, 128, 128, 8
        $region40: #{tpu_custom_call.1} parent=15 // pred_fallthru
          _
        // Predicated region
        $region41: #{tpu_custom_call.1} parent=15 // pred_check
          %p572 = pneg %p221
        $region42: #{tpu_custom_call.1} parent=15 // pred_check_branch
          %574 = sbr.rel (%p572) target = $region44
        $region43: #{tpu_custom_call.1} parent=15 // pred_region
          %p575 = scmp.lt.s32.totalorder %s41, 1
          %s576 = scalar_select %p575, %s41, 1
          %s577 = smul.addr %s576, 2
          %s578 = scalar_lea.vmem %s6, %s577
        $region44: #{tpu_custom_call.1} parent=15 // pred_fallthru
          _
        // Predicated region
        $region45: #{tpu_custom_call.1} parent=15 // pred_check
          %p579 = pneg %p247
        $region46: #{tpu_custom_call.1} parent=15 // pred_check_branch
          %581 = sbr.rel (%p579) target = $region48
        $region47: #{tpu_custom_call.1} parent=15 // pred_region
          %p582 = scmp.lt.s32.totalorder %s41, 1
          %s583 = scalar_select %p582, %s41, 1
          %s584 = smul.addr %s583, 2
          %s585 = scalar_lea.vmem %s7, %s584
        $region48: #{tpu_custom_call.1} parent=15 // pred_fallthru
          _
        // Predicated region
        $region49: #{tpu_custom_call.1} parent=15 // pred_check
          %p586 = pneg %p273
        $region50: #{tpu_custom_call.1} parent=15 // pred_check_branch
          %588 = sbr.rel (%p586) target = $region52
        $region51: #{tpu_custom_call.1} parent=15 // pred_region
          %p589 = scmp.lt.s32.totalorder %s41, 1
          %s590 = scalar_select %p589, %s41, 1
          %s591 = smul.addr %s590, 2
          %s592 = scalar_lea.vmem %s8, %s591
        $region52: #{tpu_custom_call.1} parent=15 // pred_fallthru
          _
        // Predicated region
        $region53: #{tpu_custom_call.1} parent=15 // pred_check
          %p593 = pneg %p299
        $region54: #{tpu_custom_call.1} parent=15 // pred_check_branch
          %595 = sbr.rel (%p593) target = $region56
        $region55: #{tpu_custom_call.1} parent=15 // pred_region
          %s596 = sand.u32 %s33, 1
          %s597 = scalar_lea.sflag [#allocation10], %s596
          %s598 = sand.u32 %s289, 1
          %s599 = smul.addr %s598, 512
          %s600 = scalar_lea.vmem [#allocation9], %s599
          %602 = vsyncadd %s597, 0
          %s603 = smul.addr %s41, 128
          %s604 = smul.addr %s603, 4
          %s605 = scalar_lea.hbm %s9, %s604
          %s606 = sshll.u32 %s605, 4
          %s607 = int_to_ptr.hbm [resolvable:$true] %s606
          %s608 = sshll.u32 %s600, 4
          %s609 = int_to_ptr.vmem [resolvable:$true] %s608
          %614 = dma.hbm_to_vmem [thread:$0]  %s607, 8192, %s609, %s597, 256, 256, 16
        $region56: #{tpu_custom_call.1} parent=15 // pred_fallthru
          _
        // Predicated region
        $region57: #{tpu_custom_call.1} parent=15 // pred_check
          %p615 = pneg %p325
        $region58: #{tpu_custom_call.1} parent=15 // pred_check_branch
          %617 = sbr.rel (%p615) target = $region60
        $region59: #{tpu_custom_call.1} parent=15 // pred_region
          %p618 = scmp.lt.s32.totalorder %s41, 1
          %s619 = scalar_select %p618, %s41, 1
          %s620 = smul.addr %s619, 4
          %s621 = scalar_lea.vmem %s10, %s620
        $region60: #{tpu_custom_call.1} parent=15 // pred_fallthru
          _
        // Predicated region
        $region61: #{tpu_custom_call.1} parent=15 // pred_check
          %p622 = pneg %p351
        $region62: #{tpu_custom_call.1} parent=15 // pred_check_branch
          %624 = sbr.rel (%p622) target = $region64
        $region63: #{tpu_custom_call.1} parent=15 // pred_region
          %s625 = sand.u32 %s33, 1
          %s626 = scalar_lea.sflag [#allocation10], %s625
          %s627 = sand.u32 %s341, 1
          %s628 = smul.addr %s627, 512
          %s629 = scalar_lea.vmem [#allocation11], %s628
          %631 = vsyncadd %s626, 0
          %s632 = smul.addr %s41, 128
          %s633 = smul.addr %s632, 4
          %s634 = scalar_lea.hbm %s11, %s633
          %s635 = sshll.u32 %s634, 4
          %s636 = int_to_ptr.hbm [resolvable:$true] %s635
          %s637 = sshll.u32 %s629, 4
          %s638 = int_to_ptr.vmem [resolvable:$true] %s637
          %643 = dma.hbm_to_vmem [thread:$0]  %s636, 8192, %s638, %s626, 128, 128, 8
        $region64: #{tpu_custom_call.1} parent=15 // pred_fallthru
          _
        // Predicated region
        $region65: #{tpu_custom_call.1} parent=15 // pred_check
          %p644 = pneg %p377
        $region66: #{tpu_custom_call.1} parent=15 // pred_check_branch
          %646 = sbr.rel (%p644) target = $region68
        $region67: #{tpu_custom_call.1} parent=15 // pred_region
          %p647 = scmp.lt.s32.totalorder %s41, 1
          %s648 = scalar_select %p647, %s41, 1
          %s649 = smul.addr %s648, 2
          %s650 = scalar_lea.vmem %s12, %s649
        $region68: #{tpu_custom_call.1} parent=15 // pred_fallthru
          _
        // Predicated region
        $region69: #{tpu_custom_call.1} parent=15 // pred_check
          %p651 = pneg %p403
        $region70: #{tpu_custom_call.1} parent=15 // pred_check_branch
          %653 = sbr.rel (%p651) target = $region72
        $region71: #{tpu_custom_call.1} parent=15 // pred_region
          %p654 = scmp.lt.s32.totalorder %s41, 1
          %s655 = scalar_select %p654, %s41, 1
          %s656 = smul.addr %s655, 2
          %s657 = scalar_lea.vmem %s13, %s656
        $region72: #{tpu_custom_call.1} parent=15 // pred_fallthru
          _
        // Predicated region
        $region73: #{tpu_custom_call.1} parent=15 // pred_check
          %p658 = pneg %p429
        $region74: #{tpu_custom_call.1} parent=15 // pred_check_branch
          %660 = sbr.rel (%p658) target = $region76
        $region75: #{tpu_custom_call.1} parent=15 // pred_region
          %p661 = scmp.lt.s32.totalorder %s41, 1
          %s662 = scalar_select %p661, %s41, 1
          %s663 = smul.addr %s662, 2
          %s664 = scalar_lea.vmem %s14, %s663
        $region76: #{tpu_custom_call.1} parent=15 // pred_fallthru
          _
      $region16: #{tpu_custom_call.1} parent=5 // pred_fallthru
        _
      %p665 = scmp.le.s32.totalorder 1, %s33
      %p666 = scmp.lt.s32.totalorder %s33, 5
      %p667 = pnand %p665, %p666
      %p668 = pneg %p667
      // Predicated region
      $region77: #{tpu_custom_call.1} parent=5 // pred_check
        _
      $region78: #{tpu_custom_call.1} parent=5 // pred_check_branch
        %670 = sbr.rel (%p667) target = $region80
      $region79: #{tpu_custom_call.1} parent=5 // pred_region
        %s671 = ssub.s32 %s33, 1
        %s672 = sand.u32 %s58, 1
        %s673 = scalar_lea.sflag [#allocation4], %s672
        %s674 = sand.u32 %s58, 1
        %s675 = smul.addr %s674, 64
        %s676 = scalar_lea.vmem [#allocation3], %s675
        // Predicated region
        $region81: #{tpu_custom_call.1} parent=79 // pred_check
          %p677 = pneg %p71
        $region82: #{tpu_custom_call.1} parent=79 // pred_check_branch
          %679 = sbr.rel (%p677) target = $region84
        $region83: #{tpu_custom_call.1} parent=79 // pred_region
          %681 = dma.done %s673, 1024
        $region84: #{tpu_custom_call.1} parent=79 // pred_fallthru
          _
        %s682 = sand.u32 %s38, 1
        %s683 = scalar_lea.sflag [#allocation7], %s682
        %s684 = sand.u32 %s136, 1
        %s685 = smul.addr %s684, 768
        %s686 = scalar_lea.vmem [#allocation6], %s685
        // Predicated region
        $region85: #{tpu_custom_call.1} parent=79 // pred_check
          %p687 = pneg %p149
        $region86: #{tpu_custom_call.1} parent=79 // pred_check_branch
          %689 = sbr.rel (%p687) target = $region88
        $region87: #{tpu_custom_call.1} parent=79 // pred_region
          %691 = dma.done %s683, 12288
        $region88: #{tpu_custom_call.1} parent=79 // pred_fallthru
          _
        %s692 = sand.u32 %s38, 1
        %s693 = scalar_lea.sflag [#allocation7], %s692
        %s694 = sand.u32 %s188, 1
        %s695 = smul.addr %s694, 256
        %s696 = scalar_lea.vmem [#allocation8], %s695
        // Predicated region
        $region89: #{tpu_custom_call.1} parent=79 // pred_check
          %p697 = pneg %p201
        $region90: #{tpu_custom_call.1} parent=79 // pred_check_branch
          %699 = sbr.rel (%p697) target = $region92
        $region91: #{tpu_custom_call.1} parent=79 // pred_region
          %701 = dma.done %s693, 4096
        $region92: #{tpu_custom_call.1} parent=79 // pred_fallthru
          _
        %s702 = sand.u32 %s38, 1
        %s703 = scalar_lea.sflag [#allocation10], %s702
        %s704 = sand.u32 %s292, 1
        %s705 = smul.addr %s704, 512
        %s706 = scalar_lea.vmem [#allocation9], %s705
        // Predicated region
        $region93: #{tpu_custom_call.1} parent=79 // pred_check
          %p707 = pneg %p305
        $region94: #{tpu_custom_call.1} parent=79 // pred_check_branch
          %709 = sbr.rel (%p707) target = $region96
        $region95: #{tpu_custom_call.1} parent=79 // pred_region
          %711 = dma.done %s703, 8192
        $region96: #{tpu_custom_call.1} parent=79 // pred_fallthru
          _
        %s712 = sand.u32 %s38, 1
        %s713 = scalar_lea.sflag [#allocation10], %s712
        %s714 = sand.u32 %s344, 1
        %s715 = smul.addr %s714, 512
        %s716 = scalar_lea.vmem [#allocation11], %s715
        // Predicated region
        $region97: #{tpu_custom_call.1} parent=79 // pred_check
          %p717 = pneg %p357
        $region98: #{tpu_custom_call.1} parent=79 // pred_check_branch
          %719 = sbr.rel (%p717) target = $region100
        $region99: #{tpu_custom_call.1} parent=79 // pred_region
          %721 = dma.done %s713, 8192
        $region100: #{tpu_custom_call.1} parent=79 // pred_fallthru
          _
        %s722 = sand.u32 %s58, 1
        %s723 = scalar_lea.sflag [#allocation4], %s722
        %s724 = sand.u32 %s58, 1
        %s725 = smul.addr %s724, 64
        %s726 = scalar_lea.vmem [#allocation3], %s725
        %p727 = pneg %p71
        %p728 = pneg %p68
        %s729 = smul.u32 2, %s42
        %p730 = scmp.lt.s32.totalorder %s729, 3
        %s731 = scalar_select %p730, %s729, 3
        %s732 = scalar_lea.vmem %s1, %s731
        %p733 = pneg %p97
        %p734 = pneg %p94
        %s735 = smul.u32 2, %s42
        %p736 = scmp.lt.s32.totalorder %s735, 3
        %s737 = scalar_select %p736, %s735, 3
        %s738 = smul.addr %s737, 2
        %s739 = smul.addr %s738, 8
        %s740 = scalar_lea.vmem %s2, %s739
        %p741 = pneg %p123
        %p742 = pneg %p120
        %s743 = sand.u32 %s38, 1
        %s744 = scalar_lea.sflag [#allocation7], %s743
        %s745 = sand.u32 %s136, 1
        %s746 = smul.addr %s745, 768
        %s747 = scalar_lea.vmem [#allocation6], %s746
        %p748 = pneg %p149
        %p749 = pneg %p146
        %p750 = scmp.lt.s32.totalorder %s43, 1
        %s751 = scalar_select %p750, %s43, 1
        %s752 = smul.addr %s751, 6
        %s753 = scalar_lea.vmem %s4, %s752
        %p754 = pneg %p175
        %p755 = pneg %p172
        %s756 = sand.u32 %s38, 1
        %s757 = scalar_lea.sflag [#allocation7], %s756
        %s758 = sand.u32 %s188, 1
        %s759 = smul.addr %s758, 256
        %s760 = scalar_lea.vmem [#allocation8], %s759
        %p761 = pneg %p201
        %p762 = pneg %p198
        %p763 = scmp.lt.s32.totalorder %s43, 1
        %s764 = scalar_select %p763, %s43, 1
        %s765 = smul.addr %s764, 2
        %s766 = scalar_lea.vmem %s6, %s765
        %p767 = pneg %p227
        %p768 = pneg %p224
        %p769 = scmp.lt.s32.totalorder %s43, 1
        %s770 = scalar_select %p769, %s43, 1
        %s771 = smul.addr %s770, 2
        %s772 = scalar_lea.vmem %s7, %s771
        %p773 = pneg %p253
        %p774 = pneg %p250
        %p775 = scmp.lt.s32.totalorder %s43, 1
        %s776 = scalar_select %p775, %s43, 1
        %s777 = smul.addr %s776, 2
        %s778 = scalar_lea.vmem %s8, %s777
        %p779 = pneg %p279
        %p780 = pneg %p276
        %s781 = sand.u32 %s38, 1
        %s782 = scalar_lea.sflag [#allocation10], %s781
        %s783 = sand.u32 %s292, 1
        %s784 = smul.addr %s783, 512
        %s785 = scalar_lea.vmem [#allocation9], %s784
        %p786 = pneg %p305
        %p787 = pneg %p302
        %p788 = scmp.lt.s32.totalorder %s43, 1
        %s789 = scalar_select %p788, %s43, 1
        %s790 = smul.addr %s789, 4
        %s791 = scalar_lea.vmem %s10, %s790
        %p792 = pneg %p331
        %p793 = pneg %p328
        %s794 = sand.u32 %s38, 1
        %s795 = scalar_lea.sflag [#allocation10], %s794
        %s796 = sand.u32 %s344, 1
        %s797 = smul.addr %s796, 512
        %s798 = scalar_lea.vmem [#allocation11], %s797
        %p799 = pneg %p357
        %p800 = pneg %p354
        %p801 = scmp.lt.s32.totalorder %s43, 1
        %s802 = scalar_select %p801, %s43, 1
        %s803 = smul.addr %s802, 2
        %s804 = scalar_lea.vmem %s12, %s803
        %p805 = pneg %p383
        %p806 = pneg %p380
        %p807 = scmp.lt.s32.totalorder %s43, 1
        %s808 = scalar_select %p807, %s43, 1
        %s809 = smul.addr %s808, 2
        %s810 = scalar_lea.vmem %s13, %s809
        %p811 = pneg %p409
        %p812 = pneg %p406
        %p813 = scmp.lt.s32.totalorder %s43, 1
        %s814 = scalar_select %p813, %s43, 1
        %s815 = smul.addr %s814, 2
        %s816 = scalar_lea.vmem %s14, %s815
        %p817 = pneg %p435
        %p818 = pneg %p432
        %p819 = pneg %p461
        %p820 = pneg %p458
        %s821 = sand.u32 %s448, 1
        %s822 = scalar_lea.sflag [#allocation5], %s821
        %s823 = sand.u32 %s448, 1
        %s824 = smul.addr %s823, 64
        %s825 = scalar_lea.vmem [#allocation12], %s824
        %s826 = smul.u32 2, %s42
        %s827 = smul.u32 2, %s42
        %p828 = scmp.lt.s32.totalorder %s827, 3
        %s829 = scalar_select %p828, %s827, 3
        %s830 = scalar_lea.vmem %s1, %s829
        %s831 = smul.u32 2, %s42
        %s832 = smul.u32 2, %s42
        %p833 = scmp.lt.s32.totalorder %s832, 3
        %s834 = scalar_select %p833, %s832, 3
        %s835 = smul.addr %s834, 2
        %s836 = smul.addr %s835, 8
        %s837 = scalar_lea.vmem %s2, %s836
        %s838 = smul.u32 2, %s42
        %p839 = scmp.lt.s32.totalorder %s43, 1
        %s840 = scalar_select %p839, %s43, 1
        %s841 = smul.addr %s840, 6
        %s842 = scalar_lea.vmem %s4, %s841
        %p843 = scmp.lt.s32.totalorder %s43, 1
        %s844 = scalar_select %p843, %s43, 1
        %s845 = smul.addr %s844, 2
        %s846 = scalar_lea.vmem %s6, %s845
        %p847 = scmp.lt.s32.totalorder %s43, 1
        %s848 = scalar_select %p847, %s43, 1
        %s849 = smul.addr %s848, 2
        %s850 = scalar_lea.vmem %s7, %s849
        %p851 = scmp.lt.s32.totalorder %s43, 1
        %s852 = scalar_select %p851, %s43, 1
        %s853 = smul.addr %s852, 2
        %s854 = scalar_lea.vmem %s8, %s853
        %p855 = scmp.lt.s32.totalorder %s43, 1
        %s856 = scalar_select %p855, %s43, 1
        %s857 = smul.addr %s856, 4
        %s858 = scalar_lea.vmem %s10, %s857
        %p859 = scmp.lt.s32.totalorder %s43, 1
        %s860 = scalar_select %p859, %s43, 1
        %s861 = smul.addr %s860, 2
        %s862 = scalar_lea.vmem %s12, %s861
        %p863 = scmp.lt.s32.totalorder %s43, 1
        %s864 = scalar_select %p863, %s43, 1
        %s865 = smul.addr %s864, 2
        %s866 = scalar_lea.vmem %s13, %s865
        %p867 = scmp.lt.s32.totalorder %s43, 1
        %s868 = scalar_select %p867, %s43, 1
        %s869 = smul.addr %s868, 2
        %s870 = scalar_lea.vmem %s14, %s869
        %s871 = smul.u32 2, %s42
        %p873 = scmp.eq.s32.totalorder %s43, 0
        // Predicated region
        $region101: #{tpu_custom_call.1} parent=79 // pred_check
          %p874 = pneg %p873
        $region102: #{tpu_custom_call.1} parent=79 // pred_check_branch
          %876 = sbr.rel (%p874) target = $region104
        $region103: #{tpu_custom_call.1} parent=79 // pred_region
          %v877 = vld [vmem:[%s676] sm:$0xff]
          %v878 = vld [vmem:[%s676 + $0x8] sm:$0xff]
          %v879 = vld [vmem:[%s676 + $0x10] sm:$0xff]
          %v880 = vld [vmem:[%s676 + $0x18] sm:$0xff]
          %v881 = vld [vmem:[%s676 + $0x20] sm:$0xff]
          %v882 = vld [vmem:[%s676 + $0x28] sm:$0xff]
          %v883 = vld [vmem:[%s676 + $0x30] sm:$0xff]
          %v884 = vld [vmem:[%s676 + $0x38] sm:$0xff]
          %885 = vst [vmem:[%s825] sm:$0xff] %v877
          %886 = vst [vmem:[%s825 + $0x8] sm:$0xff] %v878
          %887 = vst [vmem:[%s825 + $0x10] sm:$0xff] %v879
          %888 = vst [vmem:[%s825 + $0x18] sm:$0xff] %v880
          %889 = vst [vmem:[%s825 + $0x20] sm:$0xff] %v881
          %890 = vst [vmem:[%s825 + $0x28] sm:$0xff] %v882
          %891 = vst [vmem:[%s825 + $0x30] sm:$0xff] %v883
          %892 = vst [vmem:[%s825 + $0x38] sm:$0xff] %v884
          %v893 = vld [vmem:[%s830] sm:$0x1]
          %v894 = vld [vmem:[%s830 + $0x1] sm:$0x1]
          %v895 = vld [vmem:[%s837] sm:$0xff]
          %v896 = vld [vmem:[%s837 + $0x8] sm:$0xff]
          %v897 = vld [vmem:[%s837 + $0x10] sm:$0xff]
          %v898 = vld [vmem:[%s837 + $0x18] sm:$0xff]
          %v901 = vperm.slane %v893, 0
          %v902 = vperm.slane %v894, 0
          %906 = vset.pattern.permute.xlu0 0
          %907 = vperm.xlu0 %906, %v895
          %v908 = vpop.permute.xlu0 %907
          %911 = vset.pattern.permute.xlu0 0
          %912 = vperm.xlu0 %911, %v896
          %v913 = vpop.permute.xlu0 %912
          %916 = vset.pattern.permute.xlu0 0
          %917 = vperm.xlu0 %916, %v897
          %v918 = vpop.permute.xlu0 %917
          %921 = vset.pattern.permute.xlu0 0
          %922 = vperm.xlu0 %921, %v898
          %v923 = vpop.permute.xlu0 %922
          %v925 = vadd.f32 %v901, %v908
          %v926 = vadd.f32 %v901, %v913
          %v927 = vadd.f32 %v902, %v918
          %v928 = vadd.f32 %v902, %v923
          %v929 = vmax.f32 %v925, -1e+09
          %v930 = vmax.f32 %v926, -1e+09
          %v931 = vmax.f32 %v927, -1e+09
          %v932 = vmax.f32 %v928, -1e+09
          %vm933 = vcmask 130048
          %934 = vst.msk [vmem:[#allocation2] sm:$0xff] %vm933, %v929
          %935 = vst.msk [vmem:[#allocation2 + $0x8] sm:$0xff] %vm933, %v930
          %936 = vst.msk [vmem:[#allocation2 + $0x10] sm:$0xff] %vm933, %v931
          %937 = vst.msk [vmem:[#allocation2 + $0x18] sm:$0xff] %vm933, %v932
        $region104: #{tpu_custom_call.1} parent=79 // pred_fallthru
          _
        %v938 = vld [vmem:[%s825] sm:$0xff]
        %v939 = vld [vmem:[%s825 + $0x8] sm:$0xff]
        %v940 = vld [vmem:[%s825 + $0x10] sm:$0xff]
        %v941 = vld [vmem:[%s825 + $0x18] sm:$0xff]
        %v942 = vld [vmem:[%s825 + $0x20] sm:$0xff]
        %v943 = vld [vmem:[%s825 + $0x28] sm:$0xff]
        %v944 = vld [vmem:[%s825 + $0x30] sm:$0xff]
        %v945 = vld [vmem:[%s825 + $0x38] sm:$0xff]
        %v946 = vld [vmem:[#allocation2] sm:$0xff]
        %v947 = vld [vmem:[#allocation2 + $0x8] sm:$0xff]
        %v948 = vld [vmem:[#allocation2 + $0x10] sm:$0xff]
        %v949 = vld [vmem:[#allocation2 + $0x18] sm:$0xff]
        %v950 = vpack.c.bf16 %v940, %v938
        %v951 = vpack.c.bf16 %v941, %v939
        %v952 = vpack.c.bf16 %v944, %v942
        %v953 = vpack.c.bf16 %v945, %v943
        %v954 = vld [vmem:[%s686] sm:$0xff]
        %v955 = vld [vmem:[%s686 + $0x8] sm:$0xff]
        %v956 = vld [vmem:[%s686 + $0x10] sm:$0xff]
        %v957 = vld [vmem:[%s686 + $0x18] sm:$0xff]
        %v958 = vld [vmem:[%s686 + $0x20] sm:$0xff]
        %v959 = vld [vmem:[%s686 + $0x28] sm:$0xff]
        %v960 = vld [vmem:[%s686 + $0x30] sm:$0xff]
        %v961 = vld [vmem:[%s686 + $0x38] sm:$0xff]
        %v962 = vld [vmem:[%s686 + $0x40] sm:$0xff]
        %v963 = vld [vmem:[%s686 + $0x48] sm:$0xff]
        %v964 = vld [vmem:[%s686 + $0x50] sm:$0xff]
        %v965 = vld [vmem:[%s686 + $0x58] sm:$0xff]
        %v966 = vld [vmem:[%s686 + $0x60] sm:$0xff]
        %v967 = vld [vmem:[%s686 + $0x68] sm:$0xff]
        %v968 = vld [vmem:[%s686 + $0x70] sm:$0xff]
        %v969 = vld [vmem:[%s686 + $0x78] sm:$0xff]
        %v970 = vld [vmem:[%s686 + $0x80] sm:$0xff]
        %v971 = vld [vmem:[%s686 + $0x88] sm:$0xff]
        %v972 = vld [vmem:[%s686 + $0x90] sm:$0xff]
        %v973 = vld [vmem:[%s686 + $0x98] sm:$0xff]
        %v974 = vld [vmem:[%s686 + $0xa0] sm:$0xff]
        %v975 = vld [vmem:[%s686 + $0xa8] sm:$0xff]
        %v976 = vld [vmem:[%s686 + $0xb0] sm:$0xff]
        %v977 = vld [vmem:[%s686 + $0xb8] sm:$0xff]
        %v978 = vld [vmem:[%s686 + $0xc0] sm:$0xff]
        %v979 = vld [vmem:[%s686 + $0xc8] sm:$0xff]
        %v980 = vld [vmem:[%s686 + $0xd0] sm:$0xff]
        %v981 = vld [vmem:[%s686 + $0xd8] sm:$0xff]
        %v982 = vld [vmem:[%s686 + $0xe0] sm:$0xff]
        %v983 = vld [vmem:[%s686 + $0xe8] sm:$0xff]
        %v984 = vld [vmem:[%s686 + $0xf0] sm:$0xff]
        %v985 = vld [vmem:[%s686 + $0xf8] sm:$0xff]
        %v986 = vld [vmem:[%s686 + $0x100] sm:$0xff]
        %v987 = vld [vmem:[%s686 + $0x108] sm:$0xff]
        %v988 = vld [vmem:[%s686 + $0x110] sm:$0xff]
        %v989 = vld [vmem:[%s686 + $0x118] sm:$0xff]
        %v990 = vld [vmem:[%s686 + $0x120] sm:$0xff]
        %v991 = vld [vmem:[%s686 + $0x128] sm:$0xff]
        %v992 = vld [vmem:[%s686 + $0x130] sm:$0xff]
        %v993 = vld [vmem:[%s686 + $0x138] sm:$0xff]
        %v994 = vld [vmem:[%s686 + $0x140] sm:$0xff]
        %v995 = vld [vmem:[%s686 + $0x148] sm:$0xff]
        %v996 = vld [vmem:[%s686 + $0x150] sm:$0xff]
        %v997 = vld [vmem:[%s686 + $0x158] sm:$0xff]
        %v998 = vld [vmem:[%s686 + $0x160] sm:$0xff]
        %v999 = vld [vmem:[%s686 + $0x168] sm:$0xff]
        %v1000 = vld [vmem:[%s686 + $0x170] sm:$0xff]
        %v1001 = vld [vmem:[%s686 + $0x178] sm:$0xff]
        %v1002 = vld [vmem:[%s686 + $0x180] sm:$0xff]
        %v1003 = vld [vmem:[%s686 + $0x188] sm:$0xff]
        %v1004 = vld [vmem:[%s686 + $0x190] sm:$0xff]
        %v1005 = vld [vmem:[%s686 + $0x198] sm:$0xff]
        %v1006 = vld [vmem:[%s686 + $0x1a0] sm:$0xff]
        %v1007 = vld [vmem:[%s686 + $0x1a8] sm:$0xff]
        %v1008 = vld [vmem:[%s686 + $0x1b0] sm:$0xff]
        %v1009 = vld [vmem:[%s686 + $0x1b8] sm:$0xff]
        %v1010 = vld [vmem:[%s686 + $0x1c0] sm:$0xff]
        %v1011 = vld [vmem:[%s686 + $0x1c8] sm:$0xff]
        %v1012 = vld [vmem:[%s686 + $0x1d0] sm:$0xff]
        %v1013 = vld [vmem:[%s686 + $0x1d8] sm:$0xff]
        %v1014 = vld [vmem:[%s686 + $0x1e0] sm:$0xff]
        %v1015 = vld [vmem:[%s686 + $0x1e8] sm:$0xff]
        %v1016 = vld [vmem:[%s686 + $0x1f0] sm:$0xff]
        %v1017 = vld [vmem:[%s686 + $0x1f8] sm:$0xff]
        %v1018 = vld [vmem:[%s686 + $0x200] sm:$0xff]
        %v1019 = vld [vmem:[%s686 + $0x208] sm:$0xff]
        %v1020 = vld [vmem:[%s686 + $0x210] sm:$0xff]
        %v1021 = vld [vmem:[%s686 + $0x218] sm:$0xff]
        %v1022 = vld [vmem:[%s686 + $0x220] sm:$0xff]
        %v1023 = vld [vmem:[%s686 + $0x228] sm:$0xff]
        %v1024 = vld [vmem:[%s686 + $0x230] sm:$0xff]
        %v1025 = vld [vmem:[%s686 + $0x238] sm:$0xff]
        %v1026 = vld [vmem:[%s686 + $0x240] sm:$0xff]
        %v1027 = vld [vmem:[%s686 + $0x248] sm:$0xff]
        %v1028 = vld [vmem:[%s686 + $0x250] sm:$0xff]
        %v1029 = vld [vmem:[%s686 + $0x258] sm:$0xff]
        %v1030 = vld [vmem:[%s686 + $0x260] sm:$0xff]
        %v1031 = vld [vmem:[%s686 + $0x268] sm:$0xff]
        %v1032 = vld [vmem:[%s686 + $0x270] sm:$0xff]
        %v1033 = vld [vmem:[%s686 + $0x278] sm:$0xff]
        %v1034 = vld [vmem:[%s686 + $0x280] sm:$0xff]
        %v1035 = vld [vmem:[%s686 + $0x288] sm:$0xff]
        %v1036 = vld [vmem:[%s686 + $0x290] sm:$0xff]
        %v1037 = vld [vmem:[%s686 + $0x298] sm:$0xff]
        %v1038 = vld [vmem:[%s686 + $0x2a0] sm:$0xff]
        %v1039 = vld [vmem:[%s686 + $0x2a8] sm:$0xff]
        %v1040 = vld [vmem:[%s686 + $0x2b0] sm:$0xff]
        %v1041 = vld [vmem:[%s686 + $0x2b8] sm:$0xff]
        %v1042 = vld [vmem:[%s686 + $0x2c0] sm:$0xff]
        %v1043 = vld [vmem:[%s686 + $0x2c8] sm:$0xff]
        %v1044 = vld [vmem:[%s686 + $0x2d0] sm:$0xff]
        %v1045 = vld [vmem:[%s686 + $0x2d8] sm:$0xff]
        %v1046 = vld [vmem:[%s686 + $0x2e0] sm:$0xff]
        %v1047 = vld [vmem:[%s686 + $0x2e8] sm:$0xff]
        %v1048 = vld [vmem:[%s686 + $0x2f0] sm:$0xff]
        %v1049 = vld [vmem:[%s686 + $0x2f8] sm:$0xff]
        %v1050 = vld [vmem:[%s842] sm:$0x3f]
        %v1052 = vperm.slane %v1050, 0
        %v1053 = vperm.slane %v1050, 1
        %v1054 = vperm.slane %v1050, 2
        %v1055 = vperm.slane %v1050, 3
        %v1056 = vperm.slane %v1050, 4
        %v1057 = vperm.slane %v1050, 5
        %v1160 = vunpack.c.l.b16 %v954
        %v1161 = vunpack.c.h.b16 %v954
        %v1162 = vunpack.c.l.b16 %v955
        %v1163 = vunpack.c.h.b16 %v955
        %v1164 = vunpack.c.l.b16 %v956
        %v1165 = vunpack.c.h.b16 %v956
        %v1166 = vunpack.c.l.b16 %v957
        %v1167 = vunpack.c.h.b16 %v957
        %v1168 = vunpack.c.l.b16 %v958
        %v1169 = vunpack.c.h.b16 %v958
        %v1170 = vunpack.c.l.b16 %v959
        %v1171 = vunpack.c.h.b16 %v959
        %v1172 = vunpack.c.l.b16 %v960
        %v1173 = vunpack.c.h.b16 %v960
        %v1174 = vunpack.c.l.b16 %v961
        %v1175 = vunpack.c.h.b16 %v961
        %v1176 = vunpack.c.l.b16 %v962
        %v1177 = vunpack.c.h.b16 %v962
        %v1178 = vunpack.c.l.b16 %v963
        %v1179 = vunpack.c.h.b16 %v963
        %v1180 = vunpack.c.l.b16 %v964
        %v1181 = vunpack.c.h.b16 %v964
        %v1182 = vunpack.c.l.b16 %v965
        %v1183 = vunpack.c.h.b16 %v965
        %v1184 = vunpack.c.l.b16 %v966
        %v1185 = vunpack.c.h.b16 %v966
        %v1186 = vunpack.c.l.b16 %v967
        %v1187 = vunpack.c.h.b16 %v967
        %v1188 = vunpack.c.l.b16 %v968
        %v1189 = vunpack.c.h.b16 %v968
        %v1190 = vunpack.c.l.b16 %v969
        %v1191 = vunpack.c.h.b16 %v969
        %v1192 = vunpack.c.l.b16 %v970
        %v1193 = vunpack.c.h.b16 %v970
        %v1194 = vunpack.c.l.b16 %v971
        %v1195 = vunpack.c.h.b16 %v971
        %v1196 = vunpack.c.l.b16 %v972
        %v1197 = vunpack.c.h.b16 %v972
        %v1198 = vunpack.c.l.b16 %v973
        %v1199 = vunpack.c.h.b16 %v973
        %v1200 = vunpack.c.l.b16 %v974
        %v1201 = vunpack.c.h.b16 %v974
        %v1202 = vunpack.c.l.b16 %v975
        %v1203 = vunpack.c.h.b16 %v975
        %v1204 = vunpack.c.l.b16 %v976
        %v1205 = vunpack.c.h.b16 %v976
        %v1206 = vunpack.c.l.b16 %v977
        %v1207 = vunpack.c.h.b16 %v977
        %v1208 = vunpack.c.l.b16 %v978
        %v1209 = vunpack.c.h.b16 %v978
        %v1210 = vunpack.c.l.b16 %v979
        %v1211 = vunpack.c.h.b16 %v979
        %v1212 = vunpack.c.l.b16 %v980
        %v1213 = vunpack.c.h.b16 %v980
        %v1214 = vunpack.c.l.b16 %v981
        %v1215 = vunpack.c.h.b16 %v981
        %v1216 = vunpack.c.l.b16 %v982
        %v1217 = vunpack.c.h.b16 %v982
        %v1218 = vunpack.c.l.b16 %v983
        %v1219 = vunpack.c.h.b16 %v983
        %v1220 = vunpack.c.l.b16 %v984
        %v1221 = vunpack.c.h.b16 %v984
        %v1222 = vunpack.c.l.b16 %v985
        %v1223 = vunpack.c.h.b16 %v985
        %v1224 = vunpack.c.l.b16 %v986
        %v1225 = vunpack.c.h.b16 %v986
        %v1226 = vunpack.c.l.b16 %v987
        %v1227 = vunpack.c.h.b16 %v987
        %v1228 = vunpack.c.l.b16 %v988
        %v1229 = vunpack.c.h.b16 %v988
        %v1230 = vunpack.c.l.b16 %v989
        %v1231 = vunpack.c.h.b16 %v989
        %v1232 = vunpack.c.l.b16 %v990
        %v1233 = vunpack.c.h.b16 %v990
        %v1234 = vunpack.c.l.b16 %v991
        %v1235 = vunpack.c.h.b16 %v991
        %v1236 = vunpack.c.l.b16 %v992
        %v1237 = vunpack.c.h.b16 %v992
        %v1238 = vunpack.c.l.b16 %v993
        %v1239 = vunpack.c.h.b16 %v993
        %v1240 = vunpack.c.l.b16 %v994
        %v1241 = vunpack.c.h.b16 %v994
        %v1242 = vunpack.c.l.b16 %v995
        %v1243 = vunpack.c.h.b16 %v995
        %v1244 = vunpack.c.l.b16 %v996
        %v1245 = vunpack.c.h.b16 %v996
        %v1246 = vunpack.c.l.b16 %v997
        %v1247 = vunpack.c.h.b16 %v997
        %v1248 = vunpack.c.l.b16 %v998
        %v1249 = vunpack.c.h.b16 %v998
        %v1250 = vunpack.c.l.b16 %v999
        %v1251 = vunpack.c.h.b16 %v999
        %v1252 = vunpack.c.l.b16 %v1000
        %v1253 = vunpack.c.h.b16 %v1000
        %v1254 = vunpack.c.l.b16 %v1001
        %v1255 = vunpack.c.h.b16 %v1001
        %v1256 = vunpack.c.l.b16 %v1002
        %v1257 = vunpack.c.h.b16 %v1002
        %v1258 = vunpack.c.l.b16 %v1003
        %v1259 = vunpack.c.h.b16 %v1003
        %v1260 = vunpack.c.l.b16 %v1004
        %v1261 = vunpack.c.h.b16 %v1004
        %v1262 = vunpack.c.l.b16 %v1005
        %v1263 = vunpack.c.h.b16 %v1005
        %v1264 = vunpack.c.l.b16 %v1006
        %v1265 = vunpack.c.h.b16 %v1006
        %v1266 = vunpack.c.l.b16 %v1007
        %v1267 = vunpack.c.h.b16 %v1007
        %v1268 = vunpack.c.l.b16 %v1008
        %v1269 = vunpack.c.h.b16 %v1008
        %v1270 = vunpack.c.l.b16 %v1009
        %v1271 = vunpack.c.h.b16 %v1009
        %v1272 = vunpack.c.l.b16 %v1010
        %v1273 = vunpack.c.h.b16 %v1010
        %v1274 = vunpack.c.l.b16 %v1011
        %v1275 = vunpack.c.h.b16 %v1011
        %v1276 = vunpack.c.l.b16 %v1012
        %v1277 = vunpack.c.h.b16 %v1012
        %v1278 = vunpack.c.l.b16 %v1013
        %v1279 = vunpack.c.h.b16 %v1013
        %v1280 = vunpack.c.l.b16 %v1014
        %v1281 = vunpack.c.h.b16 %v1014
        %v1282 = vunpack.c.l.b16 %v1015
        %v1283 = vunpack.c.h.b16 %v1015
        %v1284 = vunpack.c.l.b16 %v1016
        %v1285 = vunpack.c.h.b16 %v1016
        %v1286 = vunpack.c.l.b16 %v1017
        %v1287 = vunpack.c.h.b16 %v1017
        %v1288 = vunpack.c.l.b16 %v1018
        %v1289 = vunpack.c.h.b16 %v1018
        %v1290 = vunpack.c.l.b16 %v1019
        %v1291 = vunpack.c.h.b16 %v1019
        %v1292 = vunpack.c.l.b16 %v1020
        %v1293 = vunpack.c.h.b16 %v1020
        %v1294 = vunpack.c.l.b16 %v1021
        %v1295 = vunpack.c.h.b16 %v1021
        %v1296 = vunpack.c.l.b16 %v1022
        %v1297 = vunpack.c.h.b16 %v1022
        %v1298 = vunpack.c.l.b16 %v1023
        %v1299 = vunpack.c.h.b16 %v1023
        %v1300 = vunpack.c.l.b16 %v1024
        %v1301 = vunpack.c.h.b16 %v1024
        %v1302 = vunpack.c.l.b16 %v1025
        %v1303 = vunpack.c.h.b16 %v1025
        %v1304 = vunpack.c.l.b16 %v1026
        %v1305 = vunpack.c.h.b16 %v1026
        %v1306 = vunpack.c.l.b16 %v1027
        %v1307 = vunpack.c.h.b16 %v1027
        %v1308 = vunpack.c.l.b16 %v1028
        %v1309 = vunpack.c.h.b16 %v1028
        %v1310 = vunpack.c.l.b16 %v1029
        %v1311 = vunpack.c.h.b16 %v1029
        %v1312 = vunpack.c.l.b16 %v1030
        %v1313 = vunpack.c.h.b16 %v1030
        %v1314 = vunpack.c.l.b16 %v1031
        %v1315 = vunpack.c.h.b16 %v1031
        %v1316 = vunpack.c.l.b16 %v1032
        %v1317 = vunpack.c.h.b16 %v1032
        %v1318 = vunpack.c.l.b16 %v1033
        %v1319 = vunpack.c.h.b16 %v1033
        %v1320 = vunpack.c.l.b16 %v1034
        %v1321 = vunpack.c.h.b16 %v1034
        %v1322 = vunpack.c.l.b16 %v1035
        %v1323 = vunpack.c.h.b16 %v1035
        %v1324 = vunpack.c.l.b16 %v1036
        %v1325 = vunpack.c.h.b16 %v1036
        %v1326 = vunpack.c.l.b16 %v1037
        %v1327 = vunpack.c.h.b16 %v1037
        %v1328 = vunpack.c.l.b16 %v1038
        %v1329 = vunpack.c.h.b16 %v1038
        %v1330 = vunpack.c.l.b16 %v1039
        %v1331 = vunpack.c.h.b16 %v1039
        %v1332 = vunpack.c.l.b16 %v1040
        %v1333 = vunpack.c.h.b16 %v1040
        %v1334 = vunpack.c.l.b16 %v1041
        %v1335 = vunpack.c.h.b16 %v1041
        %v1336 = vunpack.c.l.b16 %v1042
        %v1337 = vunpack.c.h.b16 %v1042
        %v1338 = vunpack.c.l.b16 %v1043
        %v1339 = vunpack.c.h.b16 %v1043
        %v1340 = vunpack.c.l.b16 %v1044
        %v1341 = vunpack.c.h.b16 %v1044
        %v1342 = vunpack.c.l.b16 %v1045
        %v1343 = vunpack.c.h.b16 %v1045
        %v1344 = vunpack.c.l.b16 %v1046
        %v1345 = vunpack.c.h.b16 %v1046
        %v1346 = vunpack.c.l.b16 %v1047
        %v1347 = vunpack.c.h.b16 %v1047
        %v1348 = vunpack.c.l.b16 %v1048
        %v1349 = vunpack.c.h.b16 %v1048
        %v1350 = vunpack.c.l.b16 %v1049
        %v1351 = vunpack.c.h.b16 %v1049
        %v1352 = vpack.c.b16 %v1166, %v1160
        %v1353 = vpack.c.b16 %v1167, %v1161
        %v1354 = vpack.c.b16 %v1168, %v1162
        %v1355 = vpack.c.b16 %v1169, %v1163
        %v1356 = vpack.c.b16 %v1170, %v1164
        %v1357 = vpack.c.b16 %v1171, %v1165
        %v1358 = vpack.c.b16 %v1178, %v1172
        %v1359 = vpack.c.b16 %v1179, %v1173
        %v1360 = vpack.c.b16 %v1180, %v1174
        %v1361 = vpack.c.b16 %v1181, %v1175
        %v1362 = vpack.c.b16 %v1182, %v1176
        %v1363 = vpack.c.b16 %v1183, %v1177
        %v1364 = vpack.c.b16 %v1190, %v1184
        %v1365 = vpack.c.b16 %v1191, %v1185
        %v1366 = vpack.c.b16 %v1192, %v1186
        %v1367 = vpack.c.b16 %v1193, %v1187
        %v1368 = vpack.c.b16 %v1194, %v1188
        %v1369 = vpack.c.b16 %v1195, %v1189
        %v1370 = vpack.c.b16 %v1202, %v1196
        %v1371 = vpack.c.b16 %v1203, %v1197
        %v1372 = vpack.c.b16 %v1204, %v1198
        %v1373 = vpack.c.b16 %v1205, %v1199
        %v1374 = vpack.c.b16 %v1206, %v1200
        %v1375 = vpack.c.b16 %v1207, %v1201
        %v1376 = vpack.c.b16 %v1214, %v1208
        %v1377 = vpack.c.b16 %v1215, %v1209
        %v1378 = vpack.c.b16 %v1216, %v1210
        %v1379 = vpack.c.b16 %v1217, %v1211
        %v1380 = vpack.c.b16 %v1218, %v1212
        %v1381 = vpack.c.b16 %v1219, %v1213
        %v1382 = vpack.c.b16 %v1226, %v1220
        %v1383 = vpack.c.b16 %v1227, %v1221
        %v1384 = vpack.c.b16 %v1228, %v1222
        %v1385 = vpack.c.b16 %v1229, %v1223
        %v1386 = vpack.c.b16 %v1230, %v1224
        %v1387 = vpack.c.b16 %v1231, %v1225
        %v1388 = vpack.c.b16 %v1238, %v1232
        %v1389 = vpack.c.b16 %v1239, %v1233
        %v1390 = vpack.c.b16 %v1240, %v1234
        %v1391 = vpack.c.b16 %v1241, %v1235
        %v1392 = vpack.c.b16 %v1242, %v1236
        %v1393 = vpack.c.b16 %v1243, %v1237
        %v1394 = vpack.c.b16 %v1250, %v1244
        %v1395 = vpack.c.b16 %v1251, %v1245
        %v1396 = vpack.c.b16 %v1252, %v1246
        %v1397 = vpack.c.b16 %v1253, %v1247
        %v1398 = vpack.c.b16 %v1254, %v1248
        %v1399 = vpack.c.b16 %v1255, %v1249
        %v1400 = vpack.c.b16 %v1262, %v1256
        %v1401 = vpack.c.b16 %v1263, %v1257
        %v1402 = vpack.c.b16 %v1264, %v1258
        %v1403 = vpack.c.b16 %v1265, %v1259
        %v1404 = vpack.c.b16 %v1266, %v1260
        %v1405 = vpack.c.b16 %v1267, %v1261
        %v1406 = vpack.c.b16 %v1274, %v1268
        %v1407 = vpack.c.b16 %v1275, %v1269
        %v1408 = vpack.c.b16 %v1276, %v1270
        %v1409 = vpack.c.b16 %v1277, %v1271
        %v1410 = vpack.c.b16 %v1278, %v1272
        %v1411 = vpack.c.b16 %v1279, %v1273
        %v1412 = vpack.c.b16 %v1286, %v1280
        %v1413 = vpack.c.b16 %v1287, %v1281
        %v1414 = vpack.c.b16 %v1288, %v1282
        %v1415 = vpack.c.b16 %v1289, %v1283
        %v1416 = vpack.c.b16 %v1290, %v1284
        %v1417 = vpack.c.b16 %v1291, %v1285
        %v1418 = vpack.c.b16 %v1298, %v1292
        %v1419 = vpack.c.b16 %v1299, %v1293
        %v1420 = vpack.c.b16 %v1300, %v1294
        %v1421 = vpack.c.b16 %v1301, %v1295
        %v1422 = vpack.c.b16 %v1302, %v1296
        %v1423 = vpack.c.b16 %v1303, %v1297
        %v1424 = vpack.c.b16 %v1310, %v1304
        %v1425 = vpack.c.b16 %v1311, %v1305
        %v1426 = vpack.c.b16 %v1312, %v1306
        %v1427 = vpack.c.b16 %v1313, %v1307
        %v1428 = vpack.c.b16 %v1314, %v1308
        %v1429 = vpack.c.b16 %v1315, %v1309
        %v1430 = vpack.c.b16 %v1322, %v1316
        %v1431 = vpack.c.b16 %v1323, %v1317
        %v1432 = vpack.c.b16 %v1324, %v1318
        %v1433 = vpack.c.b16 %v1325, %v1319
        %v1434 = vpack.c.b16 %v1326, %v1320
        %v1435 = vpack.c.b16 %v1327, %v1321
        %v1436 = vpack.c.b16 %v1334, %v1328
        %v1437 = vpack.c.b16 %v1335, %v1329
        %v1438 = vpack.c.b16 %v1336, %v1330
        %v1439 = vpack.c.b16 %v1337, %v1331
        %v1440 = vpack.c.b16 %v1338, %v1332
        %v1441 = vpack.c.b16 %v1339, %v1333
        %v1442 = vpack.c.b16 %v1346, %v1340
        %v1443 = vpack.c.b16 %v1347, %v1341
        %v1444 = vpack.c.b16 %v1348, %v1342
        %v1445 = vpack.c.b16 %v1349, %v1343
        %v1446 = vpack.c.b16 %v1350, %v1344
        %v1447 = vpack.c.b16 %v1351, %v1345
        %1544 = vmatpush.bf16.msra.mxu0 %v1394
        %1545 = vmatpush.bf16.msra.mxu0 %v1388
        %1546 = vmatpush.bf16.msra.mxu0 %v1382
        %1547 = vmatpush.bf16.msra.mxu0 %v1376
        %1548 = vmatpush.bf16.msra.mxu0 %v1370
        %1549 = vmatpush.bf16.msra.mxu0 %v1364
        %1550 = vmatpush.bf16.msra.mxu0 %v1358
        %1551 = vmatpush.bf16.msra.mxu0 %v1352
        %1552 = vmatmul.bf16.gmra.mxu0 %v950
        %v1553 = vpop.f32.mrf.mxu0
        %v1554 = vadd.f32 %v1052, %v1553
        %v1555 = vpop.f32.mrf.mxu0
        %v1556 = vadd.f32 %v1052, %v1555
        %1557 = vmatmul.bf16.gmra.mxu0 %v952
        %v1558 = vpop.f32.mrf.mxu0
        %v1559 = vadd.f32 %v1052, %v1558
        %v1560 = vpop.f32.mrf.mxu0
        %v1561 = vadd.f32 %v1052, %v1560
        %1562 = vdwg.mxu0
        %1563 = vmatpush.bf16.msra.mxu0 %v1442
        %1564 = vmatpush.bf16.msra.mxu0 %v1436
        %1565 = vmatpush.bf16.msra.mxu0 %v1430
        %1566 = vmatpush.bf16.msra.mxu0 %v1424
        %1567 = vmatpush.bf16.msra.mxu0 %v1418
        %1568 = vmatpush.bf16.msra.mxu0 %v1412
        %1569 = vmatpush.bf16.msra.mxu0 %v1406
        %1570 = vmatpush.bf16.msra.mxu0 %v1400
        %1571 = vmatmul.bf16.gmra.mxu0 %v951
        %v1572 = vpop.f32.mrf.mxu0
        %v1573 = vadd.f32 %v1554, %v1572
        %v1574 = vpop.f32.mrf.mxu0
        %v1575 = vadd.f32 %v1556, %v1574
        %1576 = vmatmul.bf16.gmra.mxu0 %v953
        %v1577 = vpop.f32.mrf.mxu0
        %v1578 = vadd.f32 %v1559, %v1577
        %v1579 = vpop.f32.mrf.mxu0
        %v1580 = vadd.f32 %v1561, %v1579
        %1581 = vdwg.mxu0
        %1582 = vmatpush.bf16.msra.mxu0 %v1395
        %1583 = vmatpush.bf16.msra.mxu0 %v1389
        %1584 = vmatpush.bf16.msra.mxu0 %v1383
        %1585 = vmatpush.bf16.msra.mxu0 %v1377
        %1586 = vmatpush.bf16.msra.mxu0 %v1371
        %1587 = vmatpush.bf16.msra.mxu0 %v1365
        %1588 = vmatpush.bf16.msra.mxu0 %v1359
        %1589 = vmatpush.bf16.msra.mxu0 %v1353
        %1590 = vmatmul.bf16.gmra.mxu0 %v950
        %v1591 = vpop.f32.mrf.mxu0
        %v1592 = vadd.f32 %v1053, %v1591
        %v1593 = vpop.f32.mrf.mxu0
        %v1594 = vadd.f32 %v1053, %v1593
        %1595 = vmatmul.bf16.gmra.mxu0 %v952
        %v1596 = vpop.f32.mrf.mxu0
        %v1597 = vadd.f32 %v1053, %v1596
        %v1598 = vpop.f32.mrf.mxu0
        %v1599 = vadd.f32 %v1053, %v1598
        %1600 = vdwg.mxu0
        %1601 = vmatpush.bf16.msra.mxu0 %v1443
        %1602 = vmatpush.bf16.msra.mxu0 %v1437
        %1603 = vmatpush.bf16.msra.mxu0 %v1431
        %1604 = vmatpush.bf16.msra.mxu0 %v1425
        %1605 = vmatpush.bf16.msra.mxu0 %v1419
        %1606 = vmatpush.bf16.msra.mxu0 %v1413
        %1607 = vmatpush.bf16.msra.mxu0 %v1407
        %1608 = vmatpush.bf16.msra.mxu0 %v1401
        %1609 = vmatmul.bf16.gmra.mxu0 %v951
        %v1610 = vpop.f32.mrf.mxu0
        %v1611 = vadd.f32 %v1592, %v1610
        %v1612 = vpop.f32.mrf.mxu0
        %v1613 = vadd.f32 %v1594, %v1612
        %1614 = vmatmul.bf16.gmra.mxu0 %v953
        %v1615 = vpop.f32.mrf.mxu0
        %v1616 = vadd.f32 %v1597, %v1615
        %v1617 = vpop.f32.mrf.mxu0
        %v1618 = vadd.f32 %v1599, %v1617
        %1619 = vdwg.mxu0
        %1620 = vmatpush.bf16.msra.mxu0 %v1396
        %1621 = vmatpush.bf16.msra.mxu0 %v1390
        %1622 = vmatpush.bf16.msra.mxu0 %v1384
        %1623 = vmatpush.bf16.msra.mxu0 %v1378
        %1624 = vmatpush.bf16.msra.mxu0 %v1372
        %1625 = vmatpush.bf16.msra.mxu0 %v1366
        %1626 = vmatpush.bf16.msra.mxu0 %v1360
        %1627 = vmatpush.bf16.msra.mxu0 %v1354
        %1628 = vmatmul.bf16.gmra.mxu0 %v950
        %v1629 = vpop.f32.mrf.mxu0
        %v1630 = vadd.f32 %v1054, %v1629
        %v1631 = vpop.f32.mrf.mxu0
        %v1632 = vadd.f32 %v1054, %v1631
        %1633 = vmatmul.bf16.gmra.mxu0 %v952
        %v1634 = vpop.f32.mrf.mxu0
        %v1635 = vadd.f32 %v1054, %v1634
        %v1636 = vpop.f32.mrf.mxu0
        %v1637 = vadd.f32 %v1054, %v1636
        %1638 = vdwg.mxu0
        %1639 = vmatpush.bf16.msra.mxu0 %v1444
        %1640 = vmatpush.bf16.msra.mxu0 %v1438
        %1641 = vmatpush.bf16.msra.mxu0 %v1432
        %1642 = vmatpush.bf16.msra.mxu0 %v1426
        %1643 = vmatpush.bf16.msra.mxu0 %v1420
        %1644 = vmatpush.bf16.msra.mxu0 %v1414
        %1645 = vmatpush.bf16.msra.mxu0 %v1408
        %1646 = vmatpush.bf16.msra.mxu0 %v1402
        %1647 = vmatmul.bf16.gmra.mxu0 %v951
        %v1648 = vpop.f32.mrf.mxu0
        %v1649 = vadd.f32 %v1630, %v1648
        %v1650 = vpop.f32.mrf.mxu0
        %v1651 = vadd.f32 %v1632, %v1650
        %1652 = vmatmul.bf16.gmra.mxu0 %v953
        %v1653 = vpop.f32.mrf.mxu0
        %v1654 = vadd.f32 %v1635, %v1653
        %v1655 = vpop.f32.mrf.mxu0
        %v1656 = vadd.f32 %v1637, %v1655
        %1657 = vdwg.mxu0
        %1658 = vmatpush.bf16.msra.mxu0 %v1397
        %1659 = vmatpush.bf16.msra.mxu0 %v1391
        %1660 = vmatpush.bf16.msra.mxu0 %v1385
        %1661 = vmatpush.bf16.msra.mxu0 %v1379
        %1662 = vmatpush.bf16.msra.mxu0 %v1373
        %1663 = vmatpush.bf16.msra.mxu0 %v1367
        %1664 = vmatpush.bf16.msra.mxu0 %v1361
        %1665 = vmatpush.bf16.msra.mxu0 %v1355
        %1666 = vmatmul.bf16.gmra.mxu0 %v950
        %v1667 = vpop.f32.mrf.mxu0
        %v1668 = vadd.f32 %v1055, %v1667
        %v1669 = vpop.f32.mrf.mxu0
        %v1670 = vadd.f32 %v1055, %v1669
        %1671 = vmatmul.bf16.gmra.mxu0 %v952
        %v1672 = vpop.f32.mrf.mxu0
        %v1673 = vadd.f32 %v1055, %v1672
        %v1674 = vpop.f32.mrf.mxu0
        %v1675 = vadd.f32 %v1055, %v1674
        %1676 = vdwg.mxu0
        %1677 = vmatpush.bf16.msra.mxu0 %v1445
        %1678 = vmatpush.bf16.msra.mxu0 %v1439
        %1679 = vmatpush.bf16.msra.mxu0 %v1433
        %1680 = vmatpush.bf16.msra.mxu0 %v1427
        %1681 = vmatpush.bf16.msra.mxu0 %v1421
        %1682 = vmatpush.bf16.msra.mxu0 %v1415
        %1683 = vmatpush.bf16.msra.mxu0 %v1409
        %1684 = vmatpush.bf16.msra.mxu0 %v1403
        %1685 = vmatmul.bf16.gmra.mxu0 %v951
        %v1686 = vpop.f32.mrf.mxu0
        %v1687 = vadd.f32 %v1668, %v1686
        %v1688 = vpop.f32.mrf.mxu0
        %v1689 = vadd.f32 %v1670, %v1688
        %1690 = vmatmul.bf16.gmra.mxu0 %v953
        %v1691 = vpop.f32.mrf.mxu0
        %v1692 = vadd.f32 %v1673, %v1691
        %v1693 = vpop.f32.mrf.mxu0
        %v1694 = vadd.f32 %v1675, %v1693
        %1695 = vdwg.mxu0
        %1696 = vmatpush.bf16.msra.mxu0 %v1398
        %1697 = vmatpush.bf16.msra.mxu0 %v1392
        %1698 = vmatpush.bf16.msra.mxu0 %v1386
        %1699 = vmatpush.bf16.msra.mxu0 %v1380
        %1700 = vmatpush.bf16.msra.mxu0 %v1374
        %1701 = vmatpush.bf16.msra.mxu0 %v1368
        %1702 = vmatpush.bf16.msra.mxu0 %v1362
        %1703 = vmatpush.bf16.msra.mxu0 %v1356
        %1704 = vmatmul.bf16.gmra.mxu0 %v950
        %v1705 = vpop.f32.mrf.mxu0
        %v1706 = vadd.f32 %v1056, %v1705
        %v1707 = vpop.f32.mrf.mxu0
        %v1708 = vadd.f32 %v1056, %v1707
        %1709 = vmatmul.bf16.gmra.mxu0 %v952
        %v1710 = vpop.f32.mrf.mxu0
        %v1711 = vadd.f32 %v1056, %v1710
        %v1712 = vpop.f32.mrf.mxu0
        %v1713 = vadd.f32 %v1056, %v1712
        %1714 = vdwg.mxu0
        %1715 = vmatpush.bf16.msra.mxu0 %v1446
        %1716 = vmatpush.bf16.msra.mxu0 %v1440
        %1717 = vmatpush.bf16.msra.mxu0 %v1434
        %1718 = vmatpush.bf16.msra.mxu0 %v1428
        %1719 = vmatpush.bf16.msra.mxu0 %v1422
        %1720 = vmatpush.bf16.msra.mxu0 %v1416
        %1721 = vmatpush.bf16.msra.mxu0 %v1410
        %1722 = vmatpush.bf16.msra.mxu0 %v1404
        %1723 = vmatmul.bf16.gmra.mxu0 %v951
        %v1724 = vpop.f32.mrf.mxu0
        %v1725 = vadd.f32 %v1706, %v1724
        %v1726 = vpop.f32.mrf.mxu0
        %v1727 = vadd.f32 %v1708, %v1726
        %1728 = vmatmul.bf16.gmra.mxu0 %v953
        %v1729 = vpop.f32.mrf.mxu0
        %v1730 = vadd.f32 %v1711, %v1729
        %v1731 = vpop.f32.mrf.mxu0
        %v1732 = vadd.f32 %v1713, %v1731
        %1733 = vdwg.mxu0
        %1734 = vmatpush.bf16.msra.mxu0 %v1399
        %1735 = vmatpush.bf16.msra.mxu0 %v1393
        %1736 = vmatpush.bf16.msra.mxu0 %v1387
        %1737 = vmatpush.bf16.msra.mxu0 %v1381
        %1738 = vmatpush.bf16.msra.mxu0 %v1375
        %1739 = vmatpush.bf16.msra.mxu0 %v1369
        %1740 = vmatpush.bf16.msra.mxu0 %v1363
        %1741 = vmatpush.bf16.msra.mxu0 %v1357
        %1742 = vmatmul.bf16.gmra.mxu0 %v950
        %v1743 = vpop.f32.mrf.mxu0
        %v1744 = vadd.f32 %v1057, %v1743
        %v1745 = vpop.f32.mrf.mxu0
        %v1746 = vadd.f32 %v1057, %v1745
        %1747 = vmatmul.bf16.gmra.mxu0 %v952
        %v1748 = vpop.f32.mrf.mxu0
        %v1749 = vadd.f32 %v1057, %v1748
        %v1750 = vpop.f32.mrf.mxu0
        %v1751 = vadd.f32 %v1057, %v1750
        %1752 = vdwg.mxu0
        %1753 = vmatpush.bf16.msra.mxu0 %v1447
        %1754 = vmatpush.bf16.msra.mxu0 %v1441
        %1755 = vmatpush.bf16.msra.mxu0 %v1435
        %1756 = vmatpush.bf16.msra.mxu0 %v1429
        %1757 = vmatpush.bf16.msra.mxu0 %v1423
        %1758 = vmatpush.bf16.msra.mxu0 %v1417
        %1759 = vmatpush.bf16.msra.mxu0 %v1411
        %1760 = vmatpush.bf16.msra.mxu0 %v1405
        %1761 = vmatmul.bf16.gmra.mxu0 %v951
        %v1762 = vpop.f32.mrf.mxu0
        %v1763 = vadd.f32 %v1744, %v1762
        %v1764 = vpop.f32.mrf.mxu0
        %v1765 = vadd.f32 %v1746, %v1764
        %1766 = vmatmul.bf16.gmra.mxu0 %v953
        %v1767 = vpop.f32.mrf.mxu0
        %v1768 = vadd.f32 %v1749, %v1767
        %v1769 = vpop.f32.mrf.mxu0
        %v1770 = vadd.f32 %v1751, %v1769
        %1771 = vdwg.mxu0
        %v1772 = vpack.c.bf16 %v1573, %v1573
        %v1773 = vpack.c.bf16 %v1575, %v1575
        %v1774 = vpack.c.bf16 %v1578, %v1578
        %v1775 = vpack.c.bf16 %v1580, %v1580
        %v1776 = vpack.c.bf16 %v1649, %v1649
        %v1777 = vpack.c.bf16 %v1651, %v1651
        %v1778 = vpack.c.bf16 %v1654, %v1654
        %v1779 = vpack.c.bf16 %v1656, %v1656
        %v1780 = vpack.c.bf16 %v1725, %v1725
        %v1781 = vpack.c.bf16 %v1727, %v1727
        %v1782 = vpack.c.bf16 %v1730, %v1730
        %v1783 = vpack.c.bf16 %v1732, %v1732
        %v1786 = vunpack.c.l.b16 %v1772
        %v1787 = vunpack.c.l.b16 %v1773
        %v1788 = vpack.c.b16 %v1787, %v1786
        %v1792 = vunpack.c.l.b16 %v1776
        %v1793 = vunpack.c.l.b16 %v1777
        %v1794 = vpack.c.b16 %v1793, %v1792
        %1796 = vmatpush.bf16.xpose.msra.mxu0 0
        %1797 = vmatpush.bf16.xpose.msra.mxu0 0
        %1798 = vmatpush.bf16.xpose.msra.mxu0 0
        %1799 = vmatpush.bf16.xpose.msra.mxu0 0
        %1800 = vmatpush.bf16.xpose.msra.mxu0 0
        %1801 = vmatpush.bf16.xpose.msra.mxu0 0
        %1802 = vmatpush.bf16.xpose.msra.mxu0 0
        %1803 = vmatpush.bf16.xpose.msra.mxu0 %v1794
        %1804 = vmatmul.bf16.gmra.mxu0 %v1788
        %v1805 = vpop.f32.mrf.mxu0
        %v1806 = vadd.f32 %v946, %v1805
        %v1807 = vpop.f32.mrf.mxu0
        %v1808 = vadd.f32 %v947, %v1807
        %1809 = vdwg.mxu0
        %v1812 = vunpack.c.l.b16 %v1774
        %v1813 = vunpack.c.l.b16 %v1775
        %v1814 = vpack.c.b16 %v1813, %v1812
        %v1818 = vunpack.c.l.b16 %v1778
        %v1819 = vunpack.c.l.b16 %v1779
        %v1820 = vpack.c.b16 %v1819, %v1818
        %1822 = vmatpush.bf16.xpose.msra.mxu0 0
        %1823 = vmatpush.bf16.xpose.msra.mxu0 0
        %1824 = vmatpush.bf16.xpose.msra.mxu0 0
        %1825 = vmatpush.bf16.xpose.msra.mxu0 0
        %1826 = vmatpush.bf16.xpose.msra.mxu0 0
        %1827 = vmatpush.bf16.xpose.msra.mxu0 0
        %1828 = vmatpush.bf16.xpose.msra.mxu0 0
        %1829 = vmatpush.bf16.xpose.msra.mxu0 %v1820
        %1830 = vmatmul.bf16.gmra.mxu0 %v1814
        %v1831 = vpop.f32.mrf.mxu0
        %v1832 = vadd.f32 %v948, %v1831
        %v1833 = vpop.f32.mrf.mxu0
        %v1834 = vadd.f32 %v949, %v1833
        %1835 = vdwg.mxu0
        %vm1836 = vcmask 130048
        %v1837 = vsel %vm1836, %v1806, -inf
        %1838 = vmax.xlane.f32.xlu0 %v1837
        %v1839 = vpop.xlane.xlu0 %1838
        %v1840 = vsel %vm1836, %v1808, -inf
        %1841 = vmax.xlane.f32.xlu0 %v1840
        %v1842 = vpop.xlane.xlu0 %1841
        %v1843 = vsel %vm1836, %v1832, -inf
        %1844 = vmax.xlane.f32.xlu0 %v1843
        %v1845 = vpop.xlane.xlu0 %1844
        %v1846 = vsel %vm1836, %v1834, -inf
        %1847 = vmax.xlane.f32.xlu0 %v1846
        %v1848 = vpop.xlane.xlu0 %1847
        %v1849 = vsub.f32 %v1806, %v1839
        %v1850 = vsub.f32 %v1808, %v1842
        %v1851 = vsub.f32 %v1832, %v1845
        %v1852 = vsub.f32 %v1834, %v1848
        %v1853 = vmul.f32 %v1849, 1.442695
        %v1854 = vpow.pop %v1853
        %v1855 = vmul.f32 %v1850, 1.442695
        %v1856 = vpow.pop %v1855
        %v1857 = vmul.f32 %v1851, 1.442695
        %v1858 = vpow.pop %v1857
        %v1859 = vmul.f32 %v1852, 1.442695
        %v1860 = vpow.pop %v1859
        %v1861 = vsel %vm1836, %v1854, 0.0
        %1862 = vadd.xlane.f32.xlu0 %v1861
        %v1863 = vpop.xlane.xlu0 %1862
        %v1864 = vsel %vm1836, %v1856, 0.0
        %1865 = vadd.xlane.f32.xlu0 %v1864
        %v1866 = vpop.xlane.xlu0 %1865
        %v1867 = vsel %vm1836, %v1858, 0.0
        %1868 = vadd.xlane.f32.xlu0 %v1867
        %v1869 = vpop.xlane.xlu0 %1868
        %v1870 = vsel %vm1836, %v1860, 0.0
        %1871 = vadd.xlane.f32.xlu0 %v1870
        %v1872 = vpop.xlane.xlu0 %1871
        %v1873 = vrcp.pop %v1863
        %v1874 = vrcp.pop %v1866
        %v1875 = vrcp.pop %v1869
        %v1876 = vrcp.pop %v1872
        %v1877 = vmul.f32 %v1854, %v1873
        %v1878 = vmul.f32 %v1856, %v1874
        %v1879 = vmul.f32 %v1858, %v1875
        %v1880 = vmul.f32 %v1860, %v1876
        %v1881 = vpack.c.bf16 %v1877, %v1877
        %v1882 = vpack.c.bf16 %v1878, %v1878
        %v1883 = vpack.c.bf16 %v1879, %v1879
        %v1884 = vpack.c.bf16 %v1880, %v1880
        %v1887 = vunpack.c.l.b16 %v1881
        %v1888 = vunpack.c.l.b16 %v1882
        %v1889 = vpack.c.b16 %v1888, %v1887
        %v1892 = vunpack.c.l.b16 %v1780
        %v1893 = vunpack.c.l.b16 %v1781
        %v1894 = vpack.c.b16 %v1893, %v1892
        %v1897 = vsel %vm1836, %v1889, 0
        %1899 = vmatpush.bf16.msra.mxu0 0
        %1900 = vmatpush.bf16.msra.mxu0 0
        %1901 = vmatpush.bf16.msra.mxu0 0
        %1902 = vmatpush.bf16.msra.mxu0 0
        %1903 = vmatpush.bf16.msra.mxu0 0
        %1904 = vmatpush.bf16.msra.mxu0 0
        %1905 = vmatpush.bf16.msra.mxu0 0
        %1906 = vmatpush.bf16.msra.mxu0 %v1894
        %1907 = vmatmul.bf16.gmra.mxu0 %v1897
        %v1908 = vpop.f32.mrf.mxu0
        %v1909 = vadd.f32 0.0, %v1908
        %v1910 = vpop.f32.mrf.mxu0
        %v1911 = vadd.f32 0.0, %v1910
        %1912 = vdwg.mxu0
        %v1915 = vunpack.c.l.b16 %v1883
        %v1916 = vunpack.c.l.b16 %v1884
        %v1917 = vpack.c.b16 %v1916, %v1915
        %v1920 = vunpack.c.l.b16 %v1782
        %v1921 = vunpack.c.l.b16 %v1783
        %v1922 = vpack.c.b16 %v1921, %v1920
        %v1925 = vsel %vm1836, %v1917, 0
        %1927 = vmatpush.bf16.msra.mxu0 0
        %1928 = vmatpush.bf16.msra.mxu0 0
        %1929 = vmatpush.bf16.msra.mxu0 0
        %1930 = vmatpush.bf16.msra.mxu0 0
        %1931 = vmatpush.bf16.msra.mxu0 0
        %1932 = vmatpush.bf16.msra.mxu0 0
        %1933 = vmatpush.bf16.msra.mxu0 0
        %1934 = vmatpush.bf16.msra.mxu0 %v1922
        %1935 = vmatmul.bf16.gmra.mxu0 %v1925
        %v1936 = vpop.f32.mrf.mxu0
        %v1937 = vadd.f32 0.0, %v1936
        %v1938 = vpop.f32.mrf.mxu0
        %v1939 = vadd.f32 0.0, %v1938
        %1940 = vdwg.mxu0
        %v1941 = vpack.c.bf16 %v1611, %v1611
        %v1942 = vpack.c.bf16 %v1613, %v1613
        %v1943 = vpack.c.bf16 %v1616, %v1616
        %v1944 = vpack.c.bf16 %v1618, %v1618
        %v1945 = vpack.c.bf16 %v1687, %v1687
        %v1946 = vpack.c.bf16 %v1689, %v1689
        %v1947 = vpack.c.bf16 %v1692, %v1692
        %v1948 = vpack.c.bf16 %v1694, %v1694
        %v1949 = vpack.c.bf16 %v1763, %v1763
        %v1950 = vpack.c.bf16 %v1765, %v1765
        %v1951 = vpack.c.bf16 %v1768, %v1768
        %v1952 = vpack.c.bf16 %v1770, %v1770
        %v1955 = vunpack.c.l.b16 %v1941
        %v1956 = vunpack.c.l.b16 %v1942
        %v1957 = vpack.c.b16 %v1956, %v1955
        %v1961 = vunpack.c.l.b16 %v1945
        %v1962 = vunpack.c.l.b16 %v1946
        %v1963 = vpack.c.b16 %v1962, %v1961
        %1965 = vmatpush.bf16.xpose.msra.mxu0 0
        %1966 = vmatpush.bf16.xpose.msra.mxu0 0
        %1967 = vmatpush.bf16.xpose.msra.mxu0 0
        %1968 = vmatpush.bf16.xpose.msra.mxu0 0
        %1969 = vmatpush.bf16.xpose.msra.mxu0 0
        %1970 = vmatpush.bf16.xpose.msra.mxu0 0
        %1971 = vmatpush.bf16.xpose.msra.mxu0 0
        %1972 = vmatpush.bf16.xpose.msra.mxu0 %v1963
        %1973 = vmatmul.bf16.gmra.mxu0 %v1957
        %v1974 = vpop.f32.mrf.mxu0
        %v1975 = vadd.f32 %v946, %v1974
        %v1976 = vpop.f32.mrf.mxu0
        %v1977 = vadd.f32 %v947, %v1976
        %1978 = vdwg.mxu0
        %v1981 = vunpack.c.l.b16 %v1943
        %v1982 = vunpack.c.l.b16 %v1944
        %v1983 = vpack.c.b16 %v1982, %v1981
        %v1987 = vunpack.c.l.b16 %v1947
        %v1988 = vunpack.c.l.b16 %v1948
        %v1989 = vpack.c.b16 %v1988, %v1987
        %1991 = vmatpush.bf16.xpose.msra.mxu0 0
        %1992 = vmatpush.bf16.xpose.msra.mxu0 0
        %1993 = vmatpush.bf16.xpose.msra.mxu0 0
        %1994 = vmatpush.bf16.xpose.msra.mxu0 0
        %1995 = vmatpush.bf16.xpose.msra.mxu0 0
        %1996 = vmatpush.bf16.xpose.msra.mxu0 0
        %1997 = vmatpush.bf16.xpose.msra.mxu0 0
        %1998 = vmatpush.bf16.xpose.msra.mxu0 %v1989
        %1999 = vmatmul.bf16.gmra.mxu0 %v1983
        %v2000 = vpop.f32.mrf.mxu0
        %v2001 = vadd.f32 %v948, %v2000
        %v2002 = vpop.f32.mrf.mxu0
        %v2003 = vadd.f32 %v949, %v2002
        %2004 = vdwg.mxu0
        %v2005 = vsel %vm1836, %v1975, -inf
        %2006 = vmax.xlane.f32.xlu0 %v2005
        %v2007 = vpop.xlane.xlu0 %2006
        %v2008 = vsel %vm1836, %v1977, -inf
        %2009 = vmax.xlane.f32.xlu0 %v2008
        %v2010 = vpop.xlane.xlu0 %2009
        %v2011 = vsel %vm1836, %v2001, -inf
        %2012 = vmax.xlane.f32.xlu0 %v2011
        %v2013 = vpop.xlane.xlu0 %2012
        %v2014 = vsel %vm1836, %v2003, -inf
        %2015 = vmax.xlane.f32.xlu0 %v2014
        %v2016 = vpop.xlane.xlu0 %2015
        %v2017 = vsub.f32 %v1975, %v2007
        %v2018 = vsub.f32 %v1977, %v2010
        %v2019 = vsub.f32 %v2001, %v2013
        %v2020 = vsub.f32 %v2003, %v2016
        %v2021 = vmul.f32 %v2017, 1.442695
        %v2022 = vpow.pop %v2021
        %v2023 = vmul.f32 %v2018, 1.442695
        %v2024 = vpow.pop %v2023
        %v2025 = vmul.f32 %v2019, 1.442695
        %v2026 = vpow.pop %v2025
        %v2027 = vmul.f32 %v2020, 1.442695
        %v2028 = vpow.pop %v2027
        %v2029 = vsel %vm1836, %v2022, 0.0
        %2030 = vadd.xlane.f32.xlu0 %v2029
        %v2031 = vpop.xlane.xlu0 %2030
        %v2032 = vsel %vm1836, %v2024, 0.0
        %2033 = vadd.xlane.f32.xlu0 %v2032
        %v2034 = vpop.xlane.xlu0 %2033
        %v2035 = vsel %vm1836, %v2026, 0.0
        %2036 = vadd.xlane.f32.xlu0 %v2035
        %v2037 = vpop.xlane.xlu0 %2036
        %v2038 = vsel %vm1836, %v2028, 0.0
        %2039 = vadd.xlane.f32.xlu0 %v2038
        %v2040 = vpop.xlane.xlu0 %2039
        %v2041 = vrcp.pop %v2031
        %v2042 = vrcp.pop %v2034
        %v2043 = vrcp.pop %v2037
        %v2044 = vrcp.pop %v2040
        %v2045 = vmul.f32 %v2022, %v2041
        %v2046 = vmul.f32 %v2024, %v2042
        %v2047 = vmul.f32 %v2026, %v2043
        %v2048 = vmul.f32 %v2028, %v2044
        %v2049 = vpack.c.bf16 %v2045, %v2045
        %v2050 = vpack.c.bf16 %v2046, %v2046
        %v2051 = vpack.c.bf16 %v2047, %v2047
        %v2052 = vpack.c.bf16 %v2048, %v2048
        %v2055 = vunpack.c.l.b16 %v2049
        %v2056 = vunpack.c.l.b16 %v2050
        %v2057 = vpack.c.b16 %v2056, %v2055
        %v2060 = vunpack.c.l.b16 %v1949
        %v2061 = vunpack.c.l.b16 %v1950
        %v2062 = vpack.c.b16 %v2061, %v2060
        %v2065 = vsel %vm1836, %v2057, 0
        %2067 = vmatpush.bf16.msra.mxu0 0
        %2068 = vmatpush.bf16.msra.mxu0 0
        %2069 = vmatpush.bf16.msra.mxu0 0
        %2070 = vmatpush.bf16.msra.mxu0 0
        %2071 = vmatpush.bf16.msra.mxu0 0
        %2072 = vmatpush.bf16.msra.mxu0 0
        %2073 = vmatpush.bf16.msra.mxu0 0
        %2074 = vmatpush.bf16.msra.mxu0 %v2062
        %2075 = vmatmul.bf16.gmra.mxu0 %v2065
        %v2076 = vpop.f32.mrf.mxu0
        %v2077 = vadd.f32 0.0, %v2076
        %v2078 = vpop.f32.mrf.mxu0
        %v2079 = vadd.f32 0.0, %v2078
        %2080 = vdwg.mxu0
        %v2083 = vunpack.c.l.b16 %v2051
        %v2084 = vunpack.c.l.b16 %v2052
        %v2085 = vpack.c.b16 %v2084, %v2083
        %v2088 = vunpack.c.l.b16 %v1951
        %v2089 = vunpack.c.l.b16 %v1952
        %v2090 = vpack.c.b16 %v2089, %v2088
        %v2093 = vsel %vm1836, %v2085, 0
        %2095 = vmatpush.bf16.msra.mxu0 0
        %2096 = vmatpush.bf16.msra.mxu0 0
        %2097 = vmatpush.bf16.msra.mxu0 0
        %2098 = vmatpush.bf16.msra.mxu0 0
        %2099 = vmatpush.bf16.msra.mxu0 0
        %2100 = vmatpush.bf16.msra.mxu0 0
        %2101 = vmatpush.bf16.msra.mxu0 0
        %2102 = vmatpush.bf16.msra.mxu0 %v2090
        %2103 = vmatmul.bf16.gmra.mxu0 %v2093
        %v2104 = vpop.f32.mrf.mxu0
        %v2105 = vadd.f32 0.0, %v2104
        %v2106 = vpop.f32.mrf.mxu0
        %v2107 = vadd.f32 0.0, %v2106
        %2108 = vdwg.mxu0
        %v2109 = vpack.c.bf16 %v1911, %v1909
        %v2110 = vpack.c.bf16 %v2079, %v2077
        %v2111 = vpack.c.bf16 %v1939, %v1937
        %v2112 = vpack.c.bf16 %v2107, %v2105
        %v2113 = vld [vmem:[%s696] sm:$0xff]
        %v2114 = vld [vmem:[%s696 + $0x8] sm:$0xff]
        %v2115 = vld [vmem:[%s696 + $0x10] sm:$0xff]
        %v2116 = vld [vmem:[%s696 + $0x18] sm:$0xff]
        %v2117 = vld [vmem:[%s696 + $0x20] sm:$0xff]
        %v2118 = vld [vmem:[%s696 + $0x28] sm:$0xff]
        %v2119 = vld [vmem:[%s696 + $0x30] sm:$0xff]
        %v2120 = vld [vmem:[%s696 + $0x38] sm:$0xff]
        %v2121 = vld [vmem:[%s696 + $0x40] sm:$0xff]
        %v2122 = vld [vmem:[%s696 + $0x48] sm:$0xff]
        %v2123 = vld [vmem:[%s696 + $0x50] sm:$0xff]
        %v2124 = vld [vmem:[%s696 + $0x58] sm:$0xff]
        %v2125 = vld [vmem:[%s696 + $0x60] sm:$0xff]
        %v2126 = vld [vmem:[%s696 + $0x68] sm:$0xff]
        %v2127 = vld [vmem:[%s696 + $0x70] sm:$0xff]
        %v2128 = vld [vmem:[%s696 + $0x78] sm:$0xff]
        %v2129 = vld [vmem:[%s696 + $0x80] sm:$0xff]
        %v2130 = vld [vmem:[%s696 + $0x88] sm:$0xff]
        %v2131 = vld [vmem:[%s696 + $0x90] sm:$0xff]
        %v2132 = vld [vmem:[%s696 + $0x98] sm:$0xff]
        %v2133 = vld [vmem:[%s696 + $0xa0] sm:$0xff]
        %v2134 = vld [vmem:[%s696 + $0xa8] sm:$0xff]
        %v2135 = vld [vmem:[%s696 + $0xb0] sm:$0xff]
        %v2136 = vld [vmem:[%s696 + $0xb8] sm:$0xff]
        %v2137 = vld [vmem:[%s696 + $0xc0] sm:$0xff]
        %v2138 = vld [vmem:[%s696 + $0xc8] sm:$0xff]
        %v2139 = vld [vmem:[%s696 + $0xd0] sm:$0xff]
        %v2140 = vld [vmem:[%s696 + $0xd8] sm:$0xff]
        %v2141 = vld [vmem:[%s696 + $0xe0] sm:$0xff]
        %v2142 = vld [vmem:[%s696 + $0xe8] sm:$0xff]
        %v2143 = vld [vmem:[%s696 + $0xf0] sm:$0xff]
        %v2144 = vld [vmem:[%s696 + $0xf8] sm:$0xff]
        %v2145 = vld [vmem:[%s846] sm:$0x3]
        %v2147 = vperm.slane %v2145, 0
        %v2148 = vperm.slane %v2145, 1
        %v2183 = vunpack.c.l.b16 %v2113
        %v2184 = vunpack.c.h.b16 %v2113
        %v2185 = vunpack.c.l.b16 %v2114
        %v2186 = vunpack.c.h.b16 %v2114
        %v2187 = vunpack.c.l.b16 %v2115
        %v2188 = vunpack.c.h.b16 %v2115
        %v2189 = vunpack.c.l.b16 %v2116
        %v2190 = vunpack.c.h.b16 %v2116
        %v2191 = vunpack.c.l.b16 %v2117
        %v2192 = vunpack.c.h.b16 %v2117
        %v2193 = vunpack.c.l.b16 %v2118
        %v2194 = vunpack.c.h.b16 %v2118
        %v2195 = vunpack.c.l.b16 %v2119
        %v2196 = vunpack.c.h.b16 %v2119
        %v2197 = vunpack.c.l.b16 %v2120
        %v2198 = vunpack.c.h.b16 %v2120
        %v2199 = vunpack.c.l.b16 %v2121
        %v2200 = vunpack.c.h.b16 %v2121
        %v2201 = vunpack.c.l.b16 %v2122
        %v2202 = vunpack.c.h.b16 %v2122
        %v2203 = vunpack.c.l.b16 %v2123
        %v2204 = vunpack.c.h.b16 %v2123
        %v2205 = vunpack.c.l.b16 %v2124
        %v2206 = vunpack.c.h.b16 %v2124
        %v2207 = vunpack.c.l.b16 %v2125
        %v2208 = vunpack.c.h.b16 %v2125
        %v2209 = vunpack.c.l.b16 %v2126
        %v2210 = vunpack.c.h.b16 %v2126
        %v2211 = vunpack.c.l.b16 %v2127
        %v2212 = vunpack.c.h.b16 %v2127
        %v2213 = vunpack.c.l.b16 %v2128
        %v2214 = vunpack.c.h.b16 %v2128
        %v2215 = vunpack.c.l.b16 %v2129
        %v2216 = vunpack.c.h.b16 %v2129
        %v2217 = vunpack.c.l.b16 %v2130
        %v2218 = vunpack.c.h.b16 %v2130
        %v2219 = vunpack.c.l.b16 %v2131
        %v2220 = vunpack.c.h.b16 %v2131
        %v2221 = vunpack.c.l.b16 %v2132
        %v2222 = vunpack.c.h.b16 %v2132
        %v2223 = vunpack.c.l.b16 %v2133
        %v2224 = vunpack.c.h.b16 %v2133
        %v2225 = vunpack.c.l.b16 %v2134
        %v2226 = vunpack.c.h.b16 %v2134
        %v2227 = vunpack.c.l.b16 %v2135
        %v2228 = vunpack.c.h.b16 %v2135
        %v2229 = vunpack.c.l.b16 %v2136
        %v2230 = vunpack.c.h.b16 %v2136
        %v2231 = vunpack.c.l.b16 %v2137
        %v2232 = vunpack.c.h.b16 %v2137
        %v2233 = vunpack.c.l.b16 %v2138
        %v2234 = vunpack.c.h.b16 %v2138
        %v2235 = vunpack.c.l.b16 %v2139
        %v2236 = vunpack.c.h.b16 %v2139
        %v2237 = vunpack.c.l.b16 %v2140
        %v2238 = vunpack.c.h.b16 %v2140
        %v2239 = vunpack.c.l.b16 %v2141
        %v2240 = vunpack.c.h.b16 %v2141
        %v2241 = vunpack.c.l.b16 %v2142
        %v2242 = vunpack.c.h.b16 %v2142
        %v2243 = vunpack.c.l.b16 %v2143
        %v2244 = vunpack.c.h.b16 %v2143
        %v2245 = vunpack.c.l.b16 %v2144
        %v2246 = vunpack.c.h.b16 %v2144
        %v2247 = vpack.c.b16 %v2185, %v2183
        %v2248 = vpack.c.b16 %v2186, %v2184
        %v2249 = vpack.c.b16 %v2189, %v2187
        %v2250 = vpack.c.b16 %v2190, %v2188
        %v2251 = vpack.c.b16 %v2193, %v2191
        %v2252 = vpack.c.b16 %v2194, %v2192
        %v2253 = vpack.c.b16 %v2197, %v2195
        %v2254 = vpack.c.b16 %v2198, %v2196
        %v2255 = vpack.c.b16 %v2201, %v2199
        %v2256 = vpack.c.b16 %v2202, %v2200
        %v2257 = vpack.c.b16 %v2205, %v2203
        %v2258 = vpack.c.b16 %v2206, %v2204
        %v2259 = vpack.c.b16 %v2209, %v2207
        %v2260 = vpack.c.b16 %v2210, %v2208
        %v2261 = vpack.c.b16 %v2213, %v2211
        %v2262 = vpack.c.b16 %v2214, %v2212
        %v2263 = vpack.c.b16 %v2217, %v2215
        %v2264 = vpack.c.b16 %v2218, %v2216
        %v2265 = vpack.c.b16 %v2221, %v2219
        %v2266 = vpack.c.b16 %v2222, %v2220
        %v2267 = vpack.c.b16 %v2225, %v2223
        %v2268 = vpack.c.b16 %v2226, %v2224
        %v2269 = vpack.c.b16 %v2229, %v2227
        %v2270 = vpack.c.b16 %v2230, %v2228
        %v2271 = vpack.c.b16 %v2233, %v2231
        %v2272 = vpack.c.b16 %v2234, %v2232
        %v2273 = vpack.c.b16 %v2237, %v2235
        %v2274 = vpack.c.b16 %v2238, %v2236
        %v2275 = vpack.c.b16 %v2241, %v2239
        %v2276 = vpack.c.b16 %v2242, %v2240
        %v2277 = vpack.c.b16 %v2245, %v2243
        %v2278 = vpack.c.b16 %v2246, %v2244
        %2311 = vmatpush.bf16.msra.mxu0 %v2261
        %2312 = vmatpush.bf16.msra.mxu0 %v2259
        %2313 = vmatpush.bf16.msra.mxu0 %v2257
        %2314 = vmatpush.bf16.msra.mxu0 %v2255
        %2315 = vmatpush.bf16.msra.mxu0 %v2253
        %2316 = vmatpush.bf16.msra.mxu0 %v2251
        %2317 = vmatpush.bf16.msra.mxu0 %v2249
        %2318 = vmatpush.bf16.msra.mxu0 %v2247
        %2319 = vmatmul.bf16.gmra.mxu0 %v2109
        %v2320 = vpop.f32.mrf.mxu0
        %v2321 = vadd.f32 %v2147, %v2320
        %v2322 = vpop.f32.mrf.mxu0
        %v2323 = vadd.f32 %v2147, %v2322
        %2324 = vmatmul.bf16.gmra.mxu0 %v2111
        %v2325 = vpop.f32.mrf.mxu0
        %v2326 = vadd.f32 %v2147, %v2325
        %v2327 = vpop.f32.mrf.mxu0
        %v2328 = vadd.f32 %v2147, %v2327
        %2329 = vdwg.mxu0
        %2330 = vmatpush.bf16.msra.mxu0 %v2277
        %2331 = vmatpush.bf16.msra.mxu0 %v2275
        %2332 = vmatpush.bf16.msra.mxu0 %v2273
        %2333 = vmatpush.bf16.msra.mxu0 %v2271
        %2334 = vmatpush.bf16.msra.mxu0 %v2269
        %2335 = vmatpush.bf16.msra.mxu0 %v2267
        %2336 = vmatpush.bf16.msra.mxu0 %v2265
        %2337 = vmatpush.bf16.msra.mxu0 %v2263
        %2338 = vmatmul.bf16.gmra.mxu0 %v2110
        %v2339 = vpop.f32.mrf.mxu0
        %v2340 = vadd.f32 %v2321, %v2339
        %v2341 = vpop.f32.mrf.mxu0
        %v2342 = vadd.f32 %v2323, %v2341
        %2343 = vmatmul.bf16.gmra.mxu0 %v2112
        %v2344 = vpop.f32.mrf.mxu0
        %v2345 = vadd.f32 %v2326, %v2344
        %v2346 = vpop.f32.mrf.mxu0
        %v2347 = vadd.f32 %v2328, %v2346
        %2348 = vdwg.mxu0
        %2349 = vmatpush.bf16.msra.mxu0 %v2262
        %2350 = vmatpush.bf16.msra.mxu0 %v2260
        %2351 = vmatpush.bf16.msra.mxu0 %v2258
        %2352 = vmatpush.bf16.msra.mxu0 %v2256
        %2353 = vmatpush.bf16.msra.mxu0 %v2254
        %2354 = vmatpush.bf16.msra.mxu0 %v2252
        %2355 = vmatpush.bf16.msra.mxu0 %v2250
        %2356 = vmatpush.bf16.msra.mxu0 %v2248
        %2357 = vmatmul.bf16.gmra.mxu0 %v2109
        %v2358 = vpop.f32.mrf.mxu0
        %v2359 = vadd.f32 %v2148, %v2358
        %v2360 = vpop.f32.mrf.mxu0
        %v2361 = vadd.f32 %v2148, %v2360
        %2362 = vmatmul.bf16.gmra.mxu0 %v2111
        %v2363 = vpop.f32.mrf.mxu0
        %v2364 = vadd.f32 %v2148, %v2363
        %v2365 = vpop.f32.mrf.mxu0
        %v2366 = vadd.f32 %v2148, %v2365
        %2367 = vdwg.mxu0
        %2368 = vmatpush.bf16.msra.mxu0 %v2278
        %2369 = vmatpush.bf16.msra.mxu0 %v2276
        %2370 = vmatpush.bf16.msra.mxu0 %v2274
        %2371 = vmatpush.bf16.msra.mxu0 %v2272
        %2372 = vmatpush.bf16.msra.mxu0 %v2270
        %2373 = vmatpush.bf16.msra.mxu0 %v2268
        %2374 = vmatpush.bf16.msra.mxu0 %v2266
        %2375 = vmatpush.bf16.msra.mxu0 %v2264
        %2376 = vmatmul.bf16.gmra.mxu0 %v2110
        %v2377 = vpop.f32.mrf.mxu0
        %v2378 = vadd.f32 %v2359, %v2377
        %v2379 = vpop.f32.mrf.mxu0
        %v2380 = vadd.f32 %v2361, %v2379
        %2381 = vmatmul.bf16.gmra.mxu0 %v2112
        %v2382 = vpop.f32.mrf.mxu0
        %v2383 = vadd.f32 %v2364, %v2382
        %v2384 = vpop.f32.mrf.mxu0
        %v2385 = vadd.f32 %v2366, %v2384
        %2386 = vdwg.mxu0
        %v2387 = vadd.f32 %v938, %v2340
        %v2388 = vadd.f32 %v939, %v2378
        %v2389 = vadd.f32 %v940, %v2342
        %v2390 = vadd.f32 %v941, %v2380
        %v2391 = vadd.f32 %v942, %v2345
        %v2392 = vadd.f32 %v943, %v2383
        %v2393 = vadd.f32 %v944, %v2347
        %v2394 = vadd.f32 %v945, %v2385
        %v2395 = vadd.f32 %v2387, %v2388
        %2396 = vadd.xlane.f32.xlu0 %v2395
        %v2397 = vpop.xlane.xlu0 %2396
        %v2398 = vadd.f32 %v2389, %v2390
        %2399 = vadd.xlane.f32.xlu0 %v2398
        %v2400 = vpop.xlane.xlu0 %2399
        %v2401 = vadd.f32 %v2391, %v2392
        %2402 = vadd.xlane.f32.xlu0 %v2401
        %v2403 = vpop.xlane.xlu0 %2402
        %v2404 = vadd.f32 %v2393, %v2394
        %2405 = vadd.xlane.f32.xlu0 %v2404
        %v2406 = vpop.xlane.xlu0 %2405
        %v2407 = vrcp.pop 256.0
        %v2408 = vmul.f32 256.0, %v2407
        %v2409 = vsub.f32 1.0, %v2408
        %v2410 = vmul.f32 %v2407, %v2409
        %v2411 = vadd.f32 %v2407, %v2410
        %vm2412 = vweird.f32 %v2407
        %v2413 = vsel %vm2412, %v2407, %v2411
        %v2414 = vmul.f32 %v2397, %v2413
        %v2415 = vmul.f32 %v2400, %v2413
        %v2416 = vmul.f32 %v2403, %v2413
        %v2417 = vmul.f32 %v2406, %v2413
        %v2418 = vsub.f32 %v2387, %v2414
        %v2419 = vsub.f32 %v2388, %v2414
        %v2420 = vsub.f32 %v2389, %v2415
        %v2421 = vsub.f32 %v2390, %v2415
        %v2422 = vsub.f32 %v2391, %v2416
        %v2423 = vsub.f32 %v2392, %v2416
        %v2424 = vsub.f32 %v2393, %v2417
        %v2425 = vsub.f32 %v2394, %v2417
        %v2426 = vmul.f32 %v2418, %v2418
        %v2427 = vmul.f32 %v2419, %v2419
        %v2428 = vmul.f32 %v2420, %v2420
        %v2429 = vmul.f32 %v2421, %v2421
        %v2430 = vmul.f32 %v2422, %v2422
        %v2431 = vmul.f32 %v2423, %v2423
        %v2432 = vmul.f32 %v2424, %v2424
        %v2433 = vmul.f32 %v2425, %v2425
        %v2434 = vadd.f32 %v2426, %v2427
        %2435 = vadd.xlane.f32.xlu0 %v2434
        %v2436 = vpop.xlane.xlu0 %2435
        %v2437 = vadd.f32 %v2428, %v2429
        %2438 = vadd.xlane.f32.xlu0 %v2437
        %v2439 = vpop.xlane.xlu0 %2438
        %v2440 = vadd.f32 %v2430, %v2431
        %2441 = vadd.xlane.f32.xlu0 %v2440
        %v2442 = vpop.xlane.xlu0 %2441
        %v2443 = vadd.f32 %v2432, %v2433
        %2444 = vadd.xlane.f32.xlu0 %v2443
        %v2445 = vpop.xlane.xlu0 %2444
        %v2446 = vmul.f32 %v2436, %v2413
        %v2447 = vmul.f32 %v2439, %v2413
        %v2448 = vmul.f32 %v2442, %v2413
        %v2449 = vmul.f32 %v2445, %v2413
        %v2450 = vadd.f32 %v2446, 1e-06
        %v2451 = vadd.f32 %v2447, 1e-06
        %v2452 = vadd.f32 %v2448, 1e-06
        %v2453 = vadd.f32 %v2449, 1e-06
        %v2454 = vrsqrt.pop %v2450
        %v2455 = vmul.f32 %v2454, %v2450
        %v2456 = vmul.f32 %v2455, %v2454
        %v2457 = vmul.f32 0.5, %v2456
        %v2458 = vsub.f32 1.5, %v2457
        %v2459 = vmul.f32 %v2454, %v2458
        %vm2460 = vweird.f32 %v2450
        %vm2461 = vweird.f32 %v2454
        %vm2462 = vmor %vm2460, %vm2461
        %v2463 = vsel %vm2462, %v2454, %v2459
        %v2464 = vrsqrt.pop %v2451
        %v2465 = vmul.f32 %v2464, %v2451
        %v2466 = vmul.f32 %v2465, %v2464
        %v2467 = vmul.f32 0.5, %v2466
        %v2468 = vsub.f32 1.5, %v2467
        %v2469 = vmul.f32 %v2464, %v2468
        %vm2470 = vweird.f32 %v2451
        %vm2471 = vweird.f32 %v2464
        %vm2472 = vmor %vm2470, %vm2471
        %v2473 = vsel %vm2472, %v2464, %v2469
        %v2474 = vrsqrt.pop %v2452
        %v2475 = vmul.f32 %v2474, %v2452
        %v2476 = vmul.f32 %v2475, %v2474
        %v2477 = vmul.f32 0.5, %v2476
        %v2478 = vsub.f32 1.5, %v2477
        %v2479 = vmul.f32 %v2474, %v2478
        %vm2480 = vweird.f32 %v2452
        %vm2481 = vweird.f32 %v2474
        %vm2482 = vmor %vm2480, %vm2481
        %v2483 = vsel %vm2482, %v2474, %v2479
        %v2484 = vrsqrt.pop %v2453
        %v2485 = vmul.f32 %v2484, %v2453
        %v2486 = vmul.f32 %v2485, %v2484
        %v2487 = vmul.f32 0.5, %v2486
        %v2488 = vsub.f32 1.5, %v2487
        %v2489 = vmul.f32 %v2484, %v2488
        %vm2490 = vweird.f32 %v2453
        %vm2491 = vweird.f32 %v2484
        %vm2492 = vmor %vm2490, %vm2491
        %v2493 = vsel %vm2492, %v2484, %v2489
        %v2494 = vmul.f32 %v2418, %v2463
        %v2495 = vmul.f32 %v2419, %v2463
        %v2496 = vmul.f32 %v2420, %v2473
        %v2497 = vmul.f32 %v2421, %v2473
        %v2498 = vmul.f32 %v2422, %v2483
        %v2499 = vmul.f32 %v2423, %v2483
        %v2500 = vmul.f32 %v2424, %v2493
        %v2501 = vmul.f32 %v2425, %v2493
        %v2502 = vld [vmem:[%s850] sm:$0x3]
        %v2504 = vperm.slane %v2502, 0
        %v2505 = vperm.slane %v2502, 1
        %v2508 = vmul.f32 %v2494, %v2504
        %v2509 = vmul.f32 %v2495, %v2505
        %v2510 = vmul.f32 %v2496, %v2504
        %v2511 = vmul.f32 %v2497, %v2505
        %v2512 = vmul.f32 %v2498, %v2504
        %v2513 = vmul.f32 %v2499, %v2505
        %v2514 = vmul.f32 %v2500, %v2504
        %v2515 = vmul.f32 %v2501, %v2505
        %v2516 = vld [vmem:[%s854] sm:$0x3]
        %v2518 = vperm.slane %v2516, 0
        %v2519 = vperm.slane %v2516, 1
        %v2522 = vadd.f32 %v2508, %v2518
        %v2523 = vadd.f32 %v2509, %v2519
        %v2524 = vadd.f32 %v2510, %v2518
        %v2525 = vadd.f32 %v2511, %v2519
        %v2526 = vadd.f32 %v2512, %v2518
        %v2527 = vadd.f32 %v2513, %v2519
        %v2528 = vadd.f32 %v2514, %v2518
        %v2529 = vadd.f32 %v2515, %v2519
        %v2530 = vpack.c.bf16 %v2524, %v2522
        %v2531 = vpack.c.bf16 %v2525, %v2523
        %v2532 = vpack.c.bf16 %v2528, %v2526
        %v2533 = vpack.c.bf16 %v2529, %v2527
        %v2534 = vld [vmem:[%s706] sm:$0xff]
        %v2535 = vld [vmem:[%s706 + $0x8] sm:$0xff]
        %v2536 = vld [vmem:[%s706 + $0x10] sm:$0xff]
        %v2537 = vld [vmem:[%s706 + $0x18] sm:$0xff]
        %v2538 = vld [vmem:[%s706 + $0x20] sm:$0xff]
        %v2539 = vld [vmem:[%s706 + $0x28] sm:$0xff]
        %v2540 = vld [vmem:[%s706 + $0x30] sm:$0xff]
        %v2541 = vld [vmem:[%s706 + $0x38] sm:$0xff]
        %v2542 = vld [vmem:[%s706 + $0x40] sm:$0xff]
        %v2543 = vld [vmem:[%s706 + $0x48] sm:$0xff]
        %v2544 = vld [vmem:[%s706 + $0x50] sm:$0xff]
        %v2545 = vld [vmem:[%s706 + $0x58] sm:$0xff]
        %v2546 = vld [vmem:[%s706 + $0x60] sm:$0xff]
        %v2547 = vld [vmem:[%s706 + $0x68] sm:$0xff]
        %v2548 = vld [vmem:[%s706 + $0x70] sm:$0xff]
        %v2549 = vld [vmem:[%s706 + $0x78] sm:$0xff]
        %v2550 = vld [vmem:[%s706 + $0x80] sm:$0xff]
        %v2551 = vld [vmem:[%s706 + $0x88] sm:$0xff]
        %v2552 = vld [vmem:[%s706 + $0x90] sm:$0xff]
        %v2553 = vld [vmem:[%s706 + $0x98] sm:$0xff]
        %v2554 = vld [vmem:[%s706 + $0xa0] sm:$0xff]
        %v2555 = vld [vmem:[%s706 + $0xa8] sm:$0xff]
        %v2556 = vld [vmem:[%s706 + $0xb0] sm:$0xff]
        %v2557 = vld [vmem:[%s706 + $0xb8] sm:$0xff]
        %v2558 = vld [vmem:[%s706 + $0xc0] sm:$0xff]
        %v2559 = vld [vmem:[%s706 + $0xc8] sm:$0xff]
        %v2560 = vld [vmem:[%s706 + $0xd0] sm:$0xff]
        %v2561 = vld [vmem:[%s706 + $0xd8] sm:$0xff]
        %v2562 = vld [vmem:[%s706 + $0xe0] sm:$0xff]
        %v2563 = vld [vmem:[%s706 + $0xe8] sm:$0xff]
        %v2564 = vld [vmem:[%s706 + $0xf0] sm:$0xff]
        %v2565 = vld [vmem:[%s706 + $0xf8] sm:$0xff]
        %v2566 = vld [vmem:[%s706 + $0x100] sm:$0xff]
        %v2567 = vld [vmem:[%s706 + $0x108] sm:$0xff]
        %v2568 = vld [vmem:[%s706 + $0x110] sm:$0xff]
        %v2569 = vld [vmem:[%s706 + $0x118] sm:$0xff]
        %v2570 = vld [vmem:[%s706 + $0x120] sm:$0xff]
        %v2571 = vld [vmem:[%s706 + $0x128] sm:$0xff]
        %v2572 = vld [vmem:[%s706 + $0x130] sm:$0xff]
        %v2573 = vld [vmem:[%s706 + $0x138] sm:$0xff]
        %v2574 = vld [vmem:[%s706 + $0x140] sm:$0xff]
        %v2575 = vld [vmem:[%s706 + $0x148] sm:$0xff]
        %v2576 = vld [vmem:[%s706 + $0x150] sm:$0xff]
        %v2577 = vld [vmem:[%s706 + $0x158] sm:$0xff]
        %v2578 = vld [vmem:[%s706 + $0x160] sm:$0xff]
        %v2579 = vld [vmem:[%s706 + $0x168] sm:$0xff]
        %v2580 = vld [vmem:[%s706 + $0x170] sm:$0xff]
        %v2581 = vld [vmem:[%s706 + $0x178] sm:$0xff]
        %v2582 = vld [vmem:[%s706 + $0x180] sm:$0xff]
        %v2583 = vld [vmem:[%s706 + $0x188] sm:$0xff]
        %v2584 = vld [vmem:[%s706 + $0x190] sm:$0xff]
        %v2585 = vld [vmem:[%s706 + $0x198] sm:$0xff]
        %v2586 = vld [vmem:[%s706 + $0x1a0] sm:$0xff]
        %v2587 = vld [vmem:[%s706 + $0x1a8] sm:$0xff]
        %v2588 = vld [vmem:[%s706 + $0x1b0] sm:$0xff]
        %v2589 = vld [vmem:[%s706 + $0x1b8] sm:$0xff]
        %v2590 = vld [vmem:[%s706 + $0x1c0] sm:$0xff]
        %v2591 = vld [vmem:[%s706 + $0x1c8] sm:$0xff]
        %v2592 = vld [vmem:[%s706 + $0x1d0] sm:$0xff]
        %v2593 = vld [vmem:[%s706 + $0x1d8] sm:$0xff]
        %v2594 = vld [vmem:[%s706 + $0x1e0] sm:$0xff]
        %v2595 = vld [vmem:[%s706 + $0x1e8] sm:$0xff]
        %v2596 = vld [vmem:[%s706 + $0x1f0] sm:$0xff]
        %v2597 = vld [vmem:[%s706 + $0x1f8] sm:$0xff]
        %v2598 = vld [vmem:[%s858] sm:$0xf]
        %v2600 = vperm.slane %v2598, 0
        %v2601 = vperm.slane %v2598, 1
        %v2602 = vperm.slane %v2598, 2
        %v2603 = vperm.slane %v2598, 3
        %v2672 = vunpack.c.l.b16 %v2534
        %v2673 = vunpack.c.h.b16 %v2534
        %v2674 = vunpack.c.l.b16 %v2535
        %v2675 = vunpack.c.h.b16 %v2535
        %v2676 = vunpack.c.l.b16 %v2536
        %v2677 = vunpack.c.h.b16 %v2536
        %v2678 = vunpack.c.l.b16 %v2537
        %v2679 = vunpack.c.h.b16 %v2537
        %v2680 = vunpack.c.l.b16 %v2538
        %v2681 = vunpack.c.h.b16 %v2538
        %v2682 = vunpack.c.l.b16 %v2539
        %v2683 = vunpack.c.h.b16 %v2539
        %v2684 = vunpack.c.l.b16 %v2540
        %v2685 = vunpack.c.h.b16 %v2540
        %v2686 = vunpack.c.l.b16 %v2541
        %v2687 = vunpack.c.h.b16 %v2541
        %v2688 = vunpack.c.l.b16 %v2542
        %v2689 = vunpack.c.h.b16 %v2542
        %v2690 = vunpack.c.l.b16 %v2543
        %v2691 = vunpack.c.h.b16 %v2543
        %v2692 = vunpack.c.l.b16 %v2544
        %v2693 = vunpack.c.h.b16 %v2544
        %v2694 = vunpack.c.l.b16 %v2545
        %v2695 = vunpack.c.h.b16 %v2545
        %v2696 = vunpack.c.l.b16 %v2546
        %v2697 = vunpack.c.h.b16 %v2546
        %v2698 = vunpack.c.l.b16 %v2547
        %v2699 = vunpack.c.h.b16 %v2547
        %v2700 = vunpack.c.l.b16 %v2548
        %v2701 = vunpack.c.h.b16 %v2548
        %v2702 = vunpack.c.l.b16 %v2549
        %v2703 = vunpack.c.h.b16 %v2549
        %v2704 = vunpack.c.l.b16 %v2550
        %v2705 = vunpack.c.h.b16 %v2550
        %v2706 = vunpack.c.l.b16 %v2551
        %v2707 = vunpack.c.h.b16 %v2551
        %v2708 = vunpack.c.l.b16 %v2552
        %v2709 = vunpack.c.h.b16 %v2552
        %v2710 = vunpack.c.l.b16 %v2553
        %v2711 = vunpack.c.h.b16 %v2553
        %v2712 = vunpack.c.l.b16 %v2554
        %v2713 = vunpack.c.h.b16 %v2554
        %v2714 = vunpack.c.l.b16 %v2555
        %v2715 = vunpack.c.h.b16 %v2555
        %v2716 = vunpack.c.l.b16 %v2556
        %v2717 = vunpack.c.h.b16 %v2556
        %v2718 = vunpack.c.l.b16 %v2557
        %v2719 = vunpack.c.h.b16 %v2557
        %v2720 = vunpack.c.l.b16 %v2558
        %v2721 = vunpack.c.h.b16 %v2558
        %v2722 = vunpack.c.l.b16 %v2559
        %v2723 = vunpack.c.h.b16 %v2559
        %v2724 = vunpack.c.l.b16 %v2560
        %v2725 = vunpack.c.h.b16 %v2560
        %v2726 = vunpack.c.l.b16 %v2561
        %v2727 = vunpack.c.h.b16 %v2561
        %v2728 = vunpack.c.l.b16 %v2562
        %v2729 = vunpack.c.h.b16 %v2562
        %v2730 = vunpack.c.l.b16 %v2563
        %v2731 = vunpack.c.h.b16 %v2563
        %v2732 = vunpack.c.l.b16 %v2564
        %v2733 = vunpack.c.h.b16 %v2564
        %v2734 = vunpack.c.l.b16 %v2565
        %v2735 = vunpack.c.h.b16 %v2565
        %v2736 = vunpack.c.l.b16 %v2566
        %v2737 = vunpack.c.h.b16 %v2566
        %v2738 = vunpack.c.l.b16 %v2567
        %v2739 = vunpack.c.h.b16 %v2567
        %v2740 = vunpack.c.l.b16 %v2568
        %v2741 = vunpack.c.h.b16 %v2568
        %v2742 = vunpack.c.l.b16 %v2569
        %v2743 = vunpack.c.h.b16 %v2569
        %v2744 = vunpack.c.l.b16 %v2570
        %v2745 = vunpack.c.h.b16 %v2570
        %v2746 = vunpack.c.l.b16 %v2571
        %v2747 = vunpack.c.h.b16 %v2571
        %v2748 = vunpack.c.l.b16 %v2572
        %v2749 = vunpack.c.h.b16 %v2572
        %v2750 = vunpack.c.l.b16 %v2573
        %v2751 = vunpack.c.h.b16 %v2573
        %v2752 = vunpack.c.l.b16 %v2574
        %v2753 = vunpack.c.h.b16 %v2574
        %v2754 = vunpack.c.l.b16 %v2575
        %v2755 = vunpack.c.h.b16 %v2575
        %v2756 = vunpack.c.l.b16 %v2576
        %v2757 = vunpack.c.h.b16 %v2576
        %v2758 = vunpack.c.l.b16 %v2577
        %v2759 = vunpack.c.h.b16 %v2577
        %v2760 = vunpack.c.l.b16 %v2578
        %v2761 = vunpack.c.h.b16 %v2578
        %v2762 = vunpack.c.l.b16 %v2579
        %v2763 = vunpack.c.h.b16 %v2579
        %v2764 = vunpack.c.l.b16 %v2580
        %v2765 = vunpack.c.h.b16 %v2580
        %v2766 = vunpack.c.l.b16 %v2581
        %v2767 = vunpack.c.h.b16 %v2581
        %v2768 = vunpack.c.l.b16 %v2582
        %v2769 = vunpack.c.h.b16 %v2582
        %v2770 = vunpack.c.l.b16 %v2583
        %v2771 = vunpack.c.h.b16 %v2583
        %v2772 = vunpack.c.l.b16 %v2584
        %v2773 = vunpack.c.h.b16 %v2584
        %v2774 = vunpack.c.l.b16 %v2585
        %v2775 = vunpack.c.h.b16 %v2585
        %v2776 = vunpack.c.l.b16 %v2586
        %v2777 = vunpack.c.h.b16 %v2586
        %v2778 = vunpack.c.l.b16 %v2587
        %v2779 = vunpack.c.h.b16 %v2587
        %v2780 = vunpack.c.l.b16 %v2588
        %v2781 = vunpack.c.h.b16 %v2588
        %v2782 = vunpack.c.l.b16 %v2589
        %v2783 = vunpack.c.h.b16 %v2589
        %v2784 = vunpack.c.l.b16 %v2590
        %v2785 = vunpack.c.h.b16 %v2590
        %v2786 = vunpack.c.l.b16 %v2591
        %v2787 = vunpack.c.h.b16 %v2591
        %v2788 = vunpack.c.l.b16 %v2592
        %v2789 = vunpack.c.h.b16 %v2592
        %v2790 = vunpack.c.l.b16 %v2593
        %v2791 = vunpack.c.h.b16 %v2593
        %v2792 = vunpack.c.l.b16 %v2594
        %v2793 = vunpack.c.h.b16 %v2594
        %v2794 = vunpack.c.l.b16 %v2595
        %v2795 = vunpack.c.h.b16 %v2595
        %v2796 = vunpack.c.l.b16 %v2596
        %v2797 = vunpack.c.h.b16 %v2596
        %v2798 = vunpack.c.l.b16 %v2597
        %v2799 = vunpack.c.h.b16 %v2597
        %v2800 = vpack.c.b16 %v2676, %v2672
        %v2801 = vpack.c.b16 %v2677, %v2673
        %v2802 = vpack.c.b16 %v2678, %v2674
        %v2803 = vpack.c.b16 %v2679, %v2675
        %v2804 = vpack.c.b16 %v2684, %v2680
        %v2805 = vpack.c.b16 %v2685, %v2681
        %v2806 = vpack.c.b16 %v2686, %v2682
        %v2807 = vpack.c.b16 %v2687, %v2683
        %v2808 = vpack.c.b16 %v2692, %v2688
        %v2809 = vpack.c.b16 %v2693, %v2689
        %v2810 = vpack.c.b16 %v2694, %v2690
        %v2811 = vpack.c.b16 %v2695, %v2691
        %v2812 = vpack.c.b16 %v2700, %v2696
        %v2813 = vpack.c.b16 %v2701, %v2697
        %v2814 = vpack.c.b16 %v2702, %v2698
        %v2815 = vpack.c.b16 %v2703, %v2699
        %v2816 = vpack.c.b16 %v2708, %v2704
        %v2817 = vpack.c.b16 %v2709, %v2705
        %v2818 = vpack.c.b16 %v2710, %v2706
        %v2819 = vpack.c.b16 %v2711, %v2707
        %v2820 = vpack.c.b16 %v2716, %v2712
        %v2821 = vpack.c.b16 %v2717, %v2713
        %v2822 = vpack.c.b16 %v2718, %v2714
        %v2823 = vpack.c.b16 %v2719, %v2715
        %v2824 = vpack.c.b16 %v2724, %v2720
        %v2825 = vpack.c.b16 %v2725, %v2721
        %v2826 = vpack.c.b16 %v2726, %v2722
        %v2827 = vpack.c.b16 %v2727, %v2723
        %v2828 = vpack.c.b16 %v2732, %v2728
        %v2829 = vpack.c.b16 %v2733, %v2729
        %v2830 = vpack.c.b16 %v2734, %v2730
        %v2831 = vpack.c.b16 %v2735, %v2731
        %v2832 = vpack.c.b16 %v2740, %v2736
        %v2833 = vpack.c.b16 %v2741, %v2737
        %v2834 = vpack.c.b16 %v2742, %v2738
        %v2835 = vpack.c.b16 %v2743, %v2739
        %v2836 = vpack.c.b16 %v2748, %v2744
        %v2837 = vpack.c.b16 %v2749, %v2745
        %v2838 = vpack.c.b16 %v2750, %v2746
        %v2839 = vpack.c.b16 %v2751, %v2747
        %v2840 = vpack.c.b16 %v2756, %v2752
        %v2841 = vpack.c.b16 %v2757, %v2753
        %v2842 = vpack.c.b16 %v2758, %v2754
        %v2843 = vpack.c.b16 %v2759, %v2755
        %v2844 = vpack.c.b16 %v2764, %v2760
        %v2845 = vpack.c.b16 %v2765, %v2761
        %v2846 = vpack.c.b16 %v2766, %v2762
        %v2847 = vpack.c.b16 %v2767, %v2763
        %v2848 = vpack.c.b16 %v2772, %v2768
        %v2849 = vpack.c.b16 %v2773, %v2769
        %v2850 = vpack.c.b16 %v2774, %v2770
        %v2851 = vpack.c.b16 %v2775, %v2771
        %v2852 = vpack.c.b16 %v2780, %v2776
        %v2853 = vpack.c.b16 %v2781, %v2777
        %v2854 = vpack.c.b16 %v2782, %v2778
        %v2855 = vpack.c.b16 %v2783, %v2779
        %v2856 = vpack.c.b16 %v2788, %v2784
        %v2857 = vpack.c.b16 %v2789, %v2785
        %v2858 = vpack.c.b16 %v2790, %v2786
        %v2859 = vpack.c.b16 %v2791, %v2787
        %v2860 = vpack.c.b16 %v2796, %v2792
        %v2861 = vpack.c.b16 %v2797, %v2793
        %v2862 = vpack.c.b16 %v2798, %v2794
        %v2863 = vpack.c.b16 %v2799, %v2795
        %2928 = vmatpush.bf16.msra.mxu0 %v2828
        %2929 = vmatpush.bf16.msra.mxu0 %v2824
        %2930 = vmatpush.bf16.msra.mxu0 %v2820
        %2931 = vmatpush.bf16.msra.mxu0 %v2816
        %2932 = vmatpush.bf16.msra.mxu0 %v2812
        %2933 = vmatpush.bf16.msra.mxu0 %v2808
        %2934 = vmatpush.bf16.msra.mxu0 %v2804
        %2935 = vmatpush.bf16.msra.mxu0 %v2800
        %2936 = vmatmul.bf16.gmra.mxu0 %v2530
        %v2937 = vpop.f32.mrf.mxu0
        %v2938 = vadd.f32 %v2600, %v2937
        %v2939 = vpop.f32.mrf.mxu0
        %v2940 = vadd.f32 %v2600, %v2939
        %2941 = vmatmul.bf16.gmra.mxu0 %v2532
        %v2942 = vpop.f32.mrf.mxu0
        %v2943 = vadd.f32 %v2600, %v2942
        %v2944 = vpop.f32.mrf.mxu0
        %v2945 = vadd.f32 %v2600, %v2944
        %2946 = vdwg.mxu0
        %2947 = vmatpush.bf16.msra.mxu0 %v2860
        %2948 = vmatpush.bf16.msra.mxu0 %v2856
        %2949 = vmatpush.bf16.msra.mxu0 %v2852
        %2950 = vmatpush.bf16.msra.mxu0 %v2848
        %2951 = vmatpush.bf16.msra.mxu0 %v2844
        %2952 = vmatpush.bf16.msra.mxu0 %v2840
        %2953 = vmatpush.bf16.msra.mxu0 %v2836
        %2954 = vmatpush.bf16.msra.mxu0 %v2832
        %2955 = vmatmul.bf16.gmra.mxu0 %v2531
        %v2956 = vpop.f32.mrf.mxu0
        %v2957 = vadd.f32 %v2938, %v2956
        %v2958 = vpop.f32.mrf.mxu0
        %v2959 = vadd.f32 %v2940, %v2958
        %2960 = vmatmul.bf16.gmra.mxu0 %v2533
        %v2961 = vpop.f32.mrf.mxu0
        %v2962 = vadd.f32 %v2943, %v2961
        %v2963 = vpop.f32.mrf.mxu0
        %v2964 = vadd.f32 %v2945, %v2963
        %2965 = vdwg.mxu0
        %2966 = vmatpush.bf16.msra.mxu0 %v2829
        %2967 = vmatpush.bf16.msra.mxu0 %v2825
        %2968 = vmatpush.bf16.msra.mxu0 %v2821
        %2969 = vmatpush.bf16.msra.mxu0 %v2817
        %2970 = vmatpush.bf16.msra.mxu0 %v2813
        %2971 = vmatpush.bf16.msra.mxu0 %v2809
        %2972 = vmatpush.bf16.msra.mxu0 %v2805
        %2973 = vmatpush.bf16.msra.mxu0 %v2801
        %2974 = vmatmul.bf16.gmra.mxu0 %v2530
        %v2975 = vpop.f32.mrf.mxu0
        %v2976 = vadd.f32 %v2601, %v2975
        %v2977 = vpop.f32.mrf.mxu0
        %v2978 = vadd.f32 %v2601, %v2977
        %2979 = vmatmul.bf16.gmra.mxu0 %v2532
        %v2980 = vpop.f32.mrf.mxu0
        %v2981 = vadd.f32 %v2601, %v2980
        %v2982 = vpop.f32.mrf.mxu0
        %v2983 = vadd.f32 %v2601, %v2982
        %2984 = vdwg.mxu0
        %2985 = vmatpush.bf16.msra.mxu0 %v2861
        %2986 = vmatpush.bf16.msra.mxu0 %v2857
        %2987 = vmatpush.bf16.msra.mxu0 %v2853
        %2988 = vmatpush.bf16.msra.mxu0 %v2849
        %2989 = vmatpush.bf16.msra.mxu0 %v2845
        %2990 = vmatpush.bf16.msra.mxu0 %v2841
        %2991 = vmatpush.bf16.msra.mxu0 %v2837
        %2992 = vmatpush.bf16.msra.mxu0 %v2833
        %2993 = vmatmul.bf16.gmra.mxu0 %v2531
        %v2994 = vpop.f32.mrf.mxu0
        %v2995 = vadd.f32 %v2976, %v2994
        %v2996 = vpop.f32.mrf.mxu0
        %v2997 = vadd.f32 %v2978, %v2996
        %2998 = vmatmul.bf16.gmra.mxu0 %v2533
        %v2999 = vpop.f32.mrf.mxu0
        %v3000 = vadd.f32 %v2981, %v2999
        %v3001 = vpop.f32.mrf.mxu0
        %v3002 = vadd.f32 %v2983, %v3001
        %3003 = vdwg.mxu0
        %3004 = vmatpush.bf16.msra.mxu0 %v2830
        %3005 = vmatpush.bf16.msra.mxu0 %v2826
        %3006 = vmatpush.bf16.msra.mxu0 %v2822
        %3007 = vmatpush.bf16.msra.mxu0 %v2818
        %3008 = vmatpush.bf16.msra.mxu0 %v2814
        %3009 = vmatpush.bf16.msra.mxu0 %v2810
        %3010 = vmatpush.bf16.msra.mxu0 %v2806
        %3011 = vmatpush.bf16.msra.mxu0 %v2802
        %3012 = vmatmul.bf16.gmra.mxu0 %v2530
        %v3013 = vpop.f32.mrf.mxu0
        %v3014 = vadd.f32 %v2602, %v3013
        %v3015 = vpop.f32.mrf.mxu0
        %v3016 = vadd.f32 %v2602, %v3015
        %3017 = vmatmul.bf16.gmra.mxu0 %v2532
        %v3018 = vpop.f32.mrf.mxu0
        %v3019 = vadd.f32 %v2602, %v3018
        %v3020 = vpop.f32.mrf.mxu0
        %v3021 = vadd.f32 %v2602, %v3020
        %3022 = vdwg.mxu0
        %3023 = vmatpush.bf16.msra.mxu0 %v2862
        %3024 = vmatpush.bf16.msra.mxu0 %v2858
        %3025 = vmatpush.bf16.msra.mxu0 %v2854
        %3026 = vmatpush.bf16.msra.mxu0 %v2850
        %3027 = vmatpush.bf16.msra.mxu0 %v2846
        %3028 = vmatpush.bf16.msra.mxu0 %v2842
        %3029 = vmatpush.bf16.msra.mxu0 %v2838
        %3030 = vmatpush.bf16.msra.mxu0 %v2834
        %3031 = vmatmul.bf16.gmra.mxu0 %v2531
        %v3032 = vpop.f32.mrf.mxu0
        %v3033 = vadd.f32 %v3014, %v3032
        %v3034 = vpop.f32.mrf.mxu0
        %v3035 = vadd.f32 %v3016, %v3034
        %3036 = vmatmul.bf16.gmra.mxu0 %v2533
        %v3037 = vpop.f32.mrf.mxu0
        %v3038 = vadd.f32 %v3019, %v3037
        %v3039 = vpop.f32.mrf.mxu0
        %v3040 = vadd.f32 %v3021, %v3039
        %3041 = vdwg.mxu0
        %3042 = vmatpush.bf16.msra.mxu0 %v2831
        %3043 = vmatpush.bf16.msra.mxu0 %v2827
        %3044 = vmatpush.bf16.msra.mxu0 %v2823
        %3045 = vmatpush.bf16.msra.mxu0 %v2819
        %3046 = vmatpush.bf16.msra.mxu0 %v2815
        %3047 = vmatpush.bf16.msra.mxu0 %v2811
        %3048 = vmatpush.bf16.msra.mxu0 %v2807
        %3049 = vmatpush.bf16.msra.mxu0 %v2803
        %3050 = vmatmul.bf16.gmra.mxu0 %v2530
        %v3051 = vpop.f32.mrf.mxu0
        %v3052 = vadd.f32 %v2603, %v3051
        %v3053 = vpop.f32.mrf.mxu0
        %v3054 = vadd.f32 %v2603, %v3053
        %3055 = vmatmul.bf16.gmra.mxu0 %v2532
        %v3056 = vpop.f32.mrf.mxu0
        %v3057 = vadd.f32 %v2603, %v3056
        %v3058 = vpop.f32.mrf.mxu0
        %v3059 = vadd.f32 %v2603, %v3058
        %3060 = vdwg.mxu0
        %3061 = vmatpush.bf16.msra.mxu0 %v2863
        %3062 = vmatpush.bf16.msra.mxu0 %v2859
        %3063 = vmatpush.bf16.msra.mxu0 %v2855
        %3064 = vmatpush.bf16.msra.mxu0 %v2851
        %3065 = vmatpush.bf16.msra.mxu0 %v2847
        %3066 = vmatpush.bf16.msra.mxu0 %v2843
        %3067 = vmatpush.bf16.msra.mxu0 %v2839
        %3068 = vmatpush.bf16.msra.mxu0 %v2835
        %3069 = vmatmul.bf16.gmra.mxu0 %v2531
        %v3070 = vpop.f32.mrf.mxu0
        %v3071 = vadd.f32 %v3052, %v3070
        %v3072 = vpop.f32.mrf.mxu0
        %v3073 = vadd.f32 %v3054, %v3072
        %3074 = vmatmul.bf16.gmra.mxu0 %v2533
        %v3075 = vpop.f32.mrf.mxu0
        %v3076 = vadd.f32 %v3057, %v3075
        %v3077 = vpop.f32.mrf.mxu0
        %v3078 = vadd.f32 %v3059, %v3077
        %3079 = vdwg.mxu0
        %v3080 = vmax.f32 %v2957, 0.0
        %v3081 = vmax.f32 %v2995, 0.0
        %v3082 = vmax.f32 %v3033, 0.0
        %v3083 = vmax.f32 %v3071, 0.0
        %v3084 = vmax.f32 %v2959, 0.0
        %v3085 = vmax.f32 %v2997, 0.0
        %v3086 = vmax.f32 %v3035, 0.0
        %v3087 = vmax.f32 %v3073, 0.0
        %v3088 = vmax.f32 %v2962, 0.0
        %v3089 = vmax.f32 %v3000, 0.0
        %v3090 = vmax.f32 %v3038, 0.0
        %v3091 = vmax.f32 %v3076, 0.0
        %v3092 = vmax.f32 %v2964, 0.0
        %v3093 = vmax.f32 %v3002, 0.0
        %v3094 = vmax.f32 %v3040, 0.0
        %v3095 = vmax.f32 %v3078, 0.0
        %v3096 = vpack.c.bf16 %v3084, %v3080
        %v3097 = vpack.c.bf16 %v3085, %v3081
        %v3098 = vpack.c.bf16 %v3086, %v3082
        %v3099 = vpack.c.bf16 %v3087, %v3083
        %v3100 = vpack.c.bf16 %v3092, %v3088
        %v3101 = vpack.c.bf16 %v3093, %v3089
        %v3102 = vpack.c.bf16 %v3094, %v3090
        %v3103 = vpack.c.bf16 %v3095, %v3091
        %v3104 = vld [vmem:[%s716] sm:$0xff]
        %v3105 = vld [vmem:[%s716 + $0x8] sm:$0xff]
        %v3106 = vld [vmem:[%s716 + $0x10] sm:$0xff]
        %v3107 = vld [vmem:[%s716 + $0x18] sm:$0xff]
        %v3108 = vld [vmem:[%s716 + $0x20] sm:$0xff]
        %v3109 = vld [vmem:[%s716 + $0x28] sm:$0xff]
        %v3110 = vld [vmem:[%s716 + $0x30] sm:$0xff]
        %v3111 = vld [vmem:[%s716 + $0x38] sm:$0xff]
        %v3112 = vld [vmem:[%s716 + $0x40] sm:$0xff]
        %v3113 = vld [vmem:[%s716 + $0x48] sm:$0xff]
        %v3114 = vld [vmem:[%s716 + $0x50] sm:$0xff]
        %v3115 = vld [vmem:[%s716 + $0x58] sm:$0xff]
        %v3116 = vld [vmem:[%s716 + $0x60] sm:$0xff]
        %v3117 = vld [vmem:[%s716 + $0x68] sm:$0xff]
        %v3118 = vld [vmem:[%s716 + $0x70] sm:$0xff]
        %v3119 = vld [vmem:[%s716 + $0x78] sm:$0xff]
        %v3120 = vld [vmem:[%s716 + $0x80] sm:$0xff]
        %v3121 = vld [vmem:[%s716 + $0x88] sm:$0xff]
        %v3122 = vld [vmem:[%s716 + $0x90] sm:$0xff]
        %v3123 = vld [vmem:[%s716 + $0x98] sm:$0xff]
        %v3124 = vld [vmem:[%s716 + $0xa0] sm:$0xff]
        %v3125 = vld [vmem:[%s716 + $0xa8] sm:$0xff]
        %v3126 = vld [vmem:[%s716 + $0xb0] sm:$0xff]
        %v3127 = vld [vmem:[%s716 + $0xb8] sm:$0xff]
        %v3128 = vld [vmem:[%s716 + $0xc0] sm:$0xff]
        %v3129 = vld [vmem:[%s716 + $0xc8] sm:$0xff]
        %v3130 = vld [vmem:[%s716 + $0xd0] sm:$0xff]
        %v3131 = vld [vmem:[%s716 + $0xd8] sm:$0xff]
        %v3132 = vld [vmem:[%s716 + $0xe0] sm:$0xff]
        %v3133 = vld [vmem:[%s716 + $0xe8] sm:$0xff]
        %v3134 = vld [vmem:[%s716 + $0xf0] sm:$0xff]
        %v3135 = vld [vmem:[%s716 + $0xf8] sm:$0xff]
        %v3136 = vld [vmem:[%s716 + $0x100] sm:$0xff]
        %v3137 = vld [vmem:[%s716 + $0x108] sm:$0xff]
        %v3138 = vld [vmem:[%s716 + $0x110] sm:$0xff]
        %v3139 = vld [vmem:[%s716 + $0x118] sm:$0xff]
        %v3140 = vld [vmem:[%s716 + $0x120] sm:$0xff]
        %v3141 = vld [vmem:[%s716 + $0x128] sm:$0xff]
        %v3142 = vld [vmem:[%s716 + $0x130] sm:$0xff]
        %v3143 = vld [vmem:[%s716 + $0x138] sm:$0xff]
        %v3144 = vld [vmem:[%s716 + $0x140] sm:$0xff]
        %v3145 = vld [vmem:[%s716 + $0x148] sm:$0xff]
        %v3146 = vld [vmem:[%s716 + $0x150] sm:$0xff]
        %v3147 = vld [vmem:[%s716 + $0x158] sm:$0xff]
        %v3148 = vld [vmem:[%s716 + $0x160] sm:$0xff]
        %v3149 = vld [vmem:[%s716 + $0x168] sm:$0xff]
        %v3150 = vld [vmem:[%s716 + $0x170] sm:$0xff]
        %v3151 = vld [vmem:[%s716 + $0x178] sm:$0xff]
        %v3152 = vld [vmem:[%s716 + $0x180] sm:$0xff]
        %v3153 = vld [vmem:[%s716 + $0x188] sm:$0xff]
        %v3154 = vld [vmem:[%s716 + $0x190] sm:$0xff]
        %v3155 = vld [vmem:[%s716 + $0x198] sm:$0xff]
        %v3156 = vld [vmem:[%s716 + $0x1a0] sm:$0xff]
        %v3157 = vld [vmem:[%s716 + $0x1a8] sm:$0xff]
        %v3158 = vld [vmem:[%s716 + $0x1b0] sm:$0xff]
        %v3159 = vld [vmem:[%s716 + $0x1b8] sm:$0xff]
        %v3160 = vld [vmem:[%s716 + $0x1c0] sm:$0xff]
        %v3161 = vld [vmem:[%s716 + $0x1c8] sm:$0xff]
        %v3162 = vld [vmem:[%s716 + $0x1d0] sm:$0xff]
        %v3163 = vld [vmem:[%s716 + $0x1d8] sm:$0xff]
        %v3164 = vld [vmem:[%s716 + $0x1e0] sm:$0xff]
        %v3165 = vld [vmem:[%s716 + $0x1e8] sm:$0xff]
        %v3166 = vld [vmem:[%s716 + $0x1f0] sm:$0xff]
        %v3167 = vld [vmem:[%s716 + $0x1f8] sm:$0xff]
        %v3168 = vld [vmem:[%s862] sm:$0x3]
        %v3170 = vperm.slane %v3168, 0
        %v3171 = vperm.slane %v3168, 1
        %v3238 = vunpack.c.l.b16 %v3104
        %v3239 = vunpack.c.h.b16 %v3104
        %v3240 = vunpack.c.l.b16 %v3105
        %v3241 = vunpack.c.h.b16 %v3105
        %v3242 = vunpack.c.l.b16 %v3106
        %v3243 = vunpack.c.h.b16 %v3106
        %v3244 = vunpack.c.l.b16 %v3107
        %v3245 = vunpack.c.h.b16 %v3107
        %v3246 = vunpack.c.l.b16 %v3108
        %v3247 = vunpack.c.h.b16 %v3108
        %v3248 = vunpack.c.l.b16 %v3109
        %v3249 = vunpack.c.h.b16 %v3109
        %v3250 = vunpack.c.l.b16 %v3110
        %v3251 = vunpack.c.h.b16 %v3110
        %v3252 = vunpack.c.l.b16 %v3111
        %v3253 = vunpack.c.h.b16 %v3111
        %v3254 = vunpack.c.l.b16 %v3112
        %v3255 = vunpack.c.h.b16 %v3112
        %v3256 = vunpack.c.l.b16 %v3113
        %v3257 = vunpack.c.h.b16 %v3113
        %v3258 = vunpack.c.l.b16 %v3114
        %v3259 = vunpack.c.h.b16 %v3114
        %v3260 = vunpack.c.l.b16 %v3115
        %v3261 = vunpack.c.h.b16 %v3115
        %v3262 = vunpack.c.l.b16 %v3116
        %v3263 = vunpack.c.h.b16 %v3116
        %v3264 = vunpack.c.l.b16 %v3117
        %v3265 = vunpack.c.h.b16 %v3117
        %v3266 = vunpack.c.l.b16 %v3118
        %v3267 = vunpack.c.h.b16 %v3118
        %v3268 = vunpack.c.l.b16 %v3119
        %v3269 = vunpack.c.h.b16 %v3119
        %v3270 = vunpack.c.l.b16 %v3120
        %v3271 = vunpack.c.h.b16 %v3120
        %v3272 = vunpack.c.l.b16 %v3121
        %v3273 = vunpack.c.h.b16 %v3121
        %v3274 = vunpack.c.l.b16 %v3122
        %v3275 = vunpack.c.h.b16 %v3122
        %v3276 = vunpack.c.l.b16 %v3123
        %v3277 = vunpack.c.h.b16 %v3123
        %v3278 = vunpack.c.l.b16 %v3124
        %v3279 = vunpack.c.h.b16 %v3124
        %v3280 = vunpack.c.l.b16 %v3125
        %v3281 = vunpack.c.h.b16 %v3125
        %v3282 = vunpack.c.l.b16 %v3126
        %v3283 = vunpack.c.h.b16 %v3126
        %v3284 = vunpack.c.l.b16 %v3127
        %v3285 = vunpack.c.h.b16 %v3127
        %v3286 = vunpack.c.l.b16 %v3128
        %v3287 = vunpack.c.h.b16 %v3128
        %v3288 = vunpack.c.l.b16 %v3129
        %v3289 = vunpack.c.h.b16 %v3129
        %v3290 = vunpack.c.l.b16 %v3130
        %v3291 = vunpack.c.h.b16 %v3130
        %v3292 = vunpack.c.l.b16 %v3131
        %v3293 = vunpack.c.h.b16 %v3131
        %v3294 = vunpack.c.l.b16 %v3132
        %v3295 = vunpack.c.h.b16 %v3132
        %v3296 = vunpack.c.l.b16 %v3133
        %v3297 = vunpack.c.h.b16 %v3133
        %v3298 = vunpack.c.l.b16 %v3134
        %v3299 = vunpack.c.h.b16 %v3134
        %v3300 = vunpack.c.l.b16 %v3135
        %v3301 = vunpack.c.h.b16 %v3135
        %v3302 = vunpack.c.l.b16 %v3136
        %v3303 = vunpack.c.h.b16 %v3136
        %v3304 = vunpack.c.l.b16 %v3137
        %v3305 = vunpack.c.h.b16 %v3137
        %v3306 = vunpack.c.l.b16 %v3138
        %v3307 = vunpack.c.h.b16 %v3138
        %v3308 = vunpack.c.l.b16 %v3139
        %v3309 = vunpack.c.h.b16 %v3139
        %v3310 = vunpack.c.l.b16 %v3140
        %v3311 = vunpack.c.h.b16 %v3140
        %v3312 = vunpack.c.l.b16 %v3141
        %v3313 = vunpack.c.h.b16 %v3141
        %v3314 = vunpack.c.l.b16 %v3142
        %v3315 = vunpack.c.h.b16 %v3142
        %v3316 = vunpack.c.l.b16 %v3143
        %v3317 = vunpack.c.h.b16 %v3143
        %v3318 = vunpack.c.l.b16 %v3144
        %v3319 = vunpack.c.h.b16 %v3144
        %v3320 = vunpack.c.l.b16 %v3145
        %v3321 = vunpack.c.h.b16 %v3145
        %v3322 = vunpack.c.l.b16 %v3146
        %v3323 = vunpack.c.h.b16 %v3146
        %v3324 = vunpack.c.l.b16 %v3147
        %v3325 = vunpack.c.h.b16 %v3147
        %v3326 = vunpack.c.l.b16 %v3148
        %v3327 = vunpack.c.h.b16 %v3148
        %v3328 = vunpack.c.l.b16 %v3149
        %v3329 = vunpack.c.h.b16 %v3149
        %v3330 = vunpack.c.l.b16 %v3150
        %v3331 = vunpack.c.h.b16 %v3150
        %v3332 = vunpack.c.l.b16 %v3151
        %v3333 = vunpack.c.h.b16 %v3151
        %v3334 = vunpack.c.l.b16 %v3152
        %v3335 = vunpack.c.h.b16 %v3152
        %v3336 = vunpack.c.l.b16 %v3153
        %v3337 = vunpack.c.h.b16 %v3153
        %v3338 = vunpack.c.l.b16 %v3154
        %v3339 = vunpack.c.h.b16 %v3154
        %v3340 = vunpack.c.l.b16 %v3155
        %v3341 = vunpack.c.h.b16 %v3155
        %v3342 = vunpack.c.l.b16 %v3156
        %v3343 = vunpack.c.h.b16 %v3156
        %v3344 = vunpack.c.l.b16 %v3157
        %v3345 = vunpack.c.h.b16 %v3157
        %v3346 = vunpack.c.l.b16 %v3158
        %v3347 = vunpack.c.h.b16 %v3158
        %v3348 = vunpack.c.l.b16 %v3159
        %v3349 = vunpack.c.h.b16 %v3159
        %v3350 = vunpack.c.l.b16 %v3160
        %v3351 = vunpack.c.h.b16 %v3160
        %v3352 = vunpack.c.l.b16 %v3161
        %v3353 = vunpack.c.h.b16 %v3161
        %v3354 = vunpack.c.l.b16 %v3162
        %v3355 = vunpack.c.h.b16 %v3162
        %v3356 = vunpack.c.l.b16 %v3163
        %v3357 = vunpack.c.h.b16 %v3163
        %v3358 = vunpack.c.l.b16 %v3164
        %v3359 = vunpack.c.h.b16 %v3164
        %v3360 = vunpack.c.l.b16 %v3165
        %v3361 = vunpack.c.h.b16 %v3165
        %v3362 = vunpack.c.l.b16 %v3166
        %v3363 = vunpack.c.h.b16 %v3166
        %v3364 = vunpack.c.l.b16 %v3167
        %v3365 = vunpack.c.h.b16 %v3167
        %v3366 = vpack.c.b16 %v3240, %v3238
        %v3367 = vpack.c.b16 %v3241, %v3239
        %v3368 = vpack.c.b16 %v3244, %v3242
        %v3369 = vpack.c.b16 %v3245, %v3243
        %v3370 = vpack.c.b16 %v3248, %v3246
        %v3371 = vpack.c.b16 %v3249, %v3247
        %v3372 = vpack.c.b16 %v3252, %v3250
        %v3373 = vpack.c.b16 %v3253, %v3251
        %v3374 = vpack.c.b16 %v3256, %v3254
        %v3375 = vpack.c.b16 %v3257, %v3255
        %v3376 = vpack.c.b16 %v3260, %v3258
        %v3377 = vpack.c.b16 %v3261, %v3259
        %v3378 = vpack.c.b16 %v3264, %v3262
        %v3379 = vpack.c.b16 %v3265, %v3263
        %v3380 = vpack.c.b16 %v3268, %v3266
        %v3381 = vpack.c.b16 %v3269, %v3267
        %v3382 = vpack.c.b16 %v3272, %v3270
        %v3383 = vpack.c.b16 %v3273, %v3271
        %v3384 = vpack.c.b16 %v3276, %v3274
        %v3385 = vpack.c.b16 %v3277, %v3275
        %v3386 = vpack.c.b16 %v3280, %v3278
        %v3387 = vpack.c.b16 %v3281, %v3279
        %v3388 = vpack.c.b16 %v3284, %v3282
        %v3389 = vpack.c.b16 %v3285, %v3283
        %v3390 = vpack.c.b16 %v3288, %v3286
        %v3391 = vpack.c.b16 %v3289, %v3287
        %v3392 = vpack.c.b16 %v3292, %v3290
        %v3393 = vpack.c.b16 %v3293, %v3291
        %v3394 = vpack.c.b16 %v3296, %v3294
        %v3395 = vpack.c.b16 %v3297, %v3295
        %v3396 = vpack.c.b16 %v3300, %v3298
        %v3397 = vpack.c.b16 %v3301, %v3299
        %v3398 = vpack.c.b16 %v3304, %v3302
        %v3399 = vpack.c.b16 %v3305, %v3303
        %v3400 = vpack.c.b16 %v3308, %v3306
        %v3401 = vpack.c.b16 %v3309, %v3307
        %v3402 = vpack.c.b16 %v3312, %v3310
        %v3403 = vpack.c.b16 %v3313, %v3311
        %v3404 = vpack.c.b16 %v3316, %v3314
        %v3405 = vpack.c.b16 %v3317, %v3315
        %v3406 = vpack.c.b16 %v3320, %v3318
        %v3407 = vpack.c.b16 %v3321, %v3319
        %v3408 = vpack.c.b16 %v3324, %v3322
        %v3409 = vpack.c.b16 %v3325, %v3323
        %v3410 = vpack.c.b16 %v3328, %v3326
        %v3411 = vpack.c.b16 %v3329, %v3327
        %v3412 = vpack.c.b16 %v3332, %v3330
        %v3413 = vpack.c.b16 %v3333, %v3331
        %v3414 = vpack.c.b16 %v3336, %v3334
        %v3415 = vpack.c.b16 %v3337, %v3335
        %v3416 = vpack.c.b16 %v3340, %v3338
        %v3417 = vpack.c.b16 %v3341, %v3339
        %v3418 = vpack.c.b16 %v3344, %v3342
        %v3419 = vpack.c.b16 %v3345, %v3343
        %v3420 = vpack.c.b16 %v3348, %v3346
        %v3421 = vpack.c.b16 %v3349, %v3347
        %v3422 = vpack.c.b16 %v3352, %v3350
        %v3423 = vpack.c.b16 %v3353, %v3351
        %v3424 = vpack.c.b16 %v3356, %v3354
        %v3425 = vpack.c.b16 %v3357, %v3355
        %v3426 = vpack.c.b16 %v3360, %v3358
        %v3427 = vpack.c.b16 %v3361, %v3359
        %v3428 = vpack.c.b16 %v3364, %v3362
        %v3429 = vpack.c.b16 %v3365, %v3363
        %3494 = vmatpush.bf16.msra.mxu0 %v3380
        %3495 = vmatpush.bf16.msra.mxu0 %v3378
        %3496 = vmatpush.bf16.msra.mxu0 %v3376
        %3497 = vmatpush.bf16.msra.mxu0 %v3374
        %3498 = vmatpush.bf16.msra.mxu0 %v3372
        %3499 = vmatpush.bf16.msra.mxu0 %v3370
        %3500 = vmatpush.bf16.msra.mxu0 %v3368
        %3501 = vmatpush.bf16.msra.mxu0 %v3366
        %3502 = vmatmul.bf16.gmra.mxu0 %v3096
        %v3503 = vpop.f32.mrf.mxu0
        %v3504 = vadd.f32 %v3170, %v3503
        %v3505 = vpop.f32.mrf.mxu0
        %v3506 = vadd.f32 %v3170, %v3505
        %3507 = vmatmul.bf16.gmra.mxu0 %v3100
        %v3508 = vpop.f32.mrf.mxu0
        %v3509 = vadd.f32 %v3170, %v3508
        %v3510 = vpop.f32.mrf.mxu0
        %v3511 = vadd.f32 %v3170, %v3510
        %3512 = vdwg.mxu0
        %3513 = vmatpush.bf16.msra.mxu0 %v3396
        %3514 = vmatpush.bf16.msra.mxu0 %v3394
        %3515 = vmatpush.bf16.msra.mxu0 %v3392
        %3516 = vmatpush.bf16.msra.mxu0 %v3390
        %3517 = vmatpush.bf16.msra.mxu0 %v3388
        %3518 = vmatpush.bf16.msra.mxu0 %v3386
        %3519 = vmatpush.bf16.msra.mxu0 %v3384
        %3520 = vmatpush.bf16.msra.mxu0 %v3382
        %3521 = vmatmul.bf16.gmra.mxu0 %v3097
        %v3522 = vpop.f32.mrf.mxu0
        %v3523 = vadd.f32 %v3504, %v3522
        %v3524 = vpop.f32.mrf.mxu0
        %v3525 = vadd.f32 %v3506, %v3524
        %3526 = vmatmul.bf16.gmra.mxu0 %v3101
        %v3527 = vpop.f32.mrf.mxu0
        %v3528 = vadd.f32 %v3509, %v3527
        %v3529 = vpop.f32.mrf.mxu0
        %v3530 = vadd.f32 %v3511, %v3529
        %3531 = vdwg.mxu0
        %3532 = vmatpush.bf16.msra.mxu0 %v3412
        %3533 = vmatpush.bf16.msra.mxu0 %v3410
        %3534 = vmatpush.bf16.msra.mxu0 %v3408
        %3535 = vmatpush.bf16.msra.mxu0 %v3406
        %3536 = vmatpush.bf16.msra.mxu0 %v3404
        %3537 = vmatpush.bf16.msra.mxu0 %v3402
        %3538 = vmatpush.bf16.msra.mxu0 %v3400
        %3539 = vmatpush.bf16.msra.mxu0 %v3398
        %3540 = vmatmul.bf16.gmra.mxu0 %v3098
        %v3541 = vpop.f32.mrf.mxu0
        %v3542 = vadd.f32 %v3523, %v3541
        %v3543 = vpop.f32.mrf.mxu0
        %v3544 = vadd.f32 %v3525, %v3543
        %3545 = vmatmul.bf16.gmra.mxu0 %v3102
        %v3546 = vpop.f32.mrf.mxu0
        %v3547 = vadd.f32 %v3528, %v3546
        %v3548 = vpop.f32.mrf.mxu0
        %v3549 = vadd.f32 %v3530, %v3548
        %3550 = vdwg.mxu0
        %3551 = vmatpush.bf16.msra.mxu0 %v3428
        %3552 = vmatpush.bf16.msra.mxu0 %v3426
        %3553 = vmatpush.bf16.msra.mxu0 %v3424
        %3554 = vmatpush.bf16.msra.mxu0 %v3422
        %3555 = vmatpush.bf16.msra.mxu0 %v3420
        %3556 = vmatpush.bf16.msra.mxu0 %v3418
        %3557 = vmatpush.bf16.msra.mxu0 %v3416
        %3558 = vmatpush.bf16.msra.mxu0 %v3414
        %3559 = vmatmul.bf16.gmra.mxu0 %v3099
        %v3560 = vpop.f32.mrf.mxu0
        %v3561 = vadd.f32 %v3542, %v3560
        %v3562 = vpop.f32.mrf.mxu0
        %v3563 = vadd.f32 %v3544, %v3562
        %3564 = vmatmul.bf16.gmra.mxu0 %v3103
        %v3565 = vpop.f32.mrf.mxu0
        %v3566 = vadd.f32 %v3547, %v3565
        %v3567 = vpop.f32.mrf.mxu0
        %v3568 = vadd.f32 %v3549, %v3567
        %3569 = vdwg.mxu0
        %3570 = vmatpush.bf16.msra.mxu0 %v3381
        %3571 = vmatpush.bf16.msra.mxu0 %v3379
        %3572 = vmatpush.bf16.msra.mxu0 %v3377
        %3573 = vmatpush.bf16.msra.mxu0 %v3375
        %3574 = vmatpush.bf16.msra.mxu0 %v3373
        %3575 = vmatpush.bf16.msra.mxu0 %v3371
        %3576 = vmatpush.bf16.msra.mxu0 %v3369
        %3577 = vmatpush.bf16.msra.mxu0 %v3367
        %3578 = vmatmul.bf16.gmra.mxu0 %v3096
        %v3579 = vpop.f32.mrf.mxu0
        %v3580 = vadd.f32 %v3171, %v3579
        %v3581 = vpop.f32.mrf.mxu0
        %v3582 = vadd.f32 %v3171, %v3581
        %3583 = vmatmul.bf16.gmra.mxu0 %v3100
        %v3584 = vpop.f32.mrf.mxu0
        %v3585 = vadd.f32 %v3171, %v3584
        %v3586 = vpop.f32.mrf.mxu0
        %v3587 = vadd.f32 %v3171, %v3586
        %3588 = vdwg.mxu0
        %3589 = vmatpush.bf16.msra.mxu0 %v3397
        %3590 = vmatpush.bf16.msra.mxu0 %v3395
        %3591 = vmatpush.bf16.msra.mxu0 %v3393
        %3592 = vmatpush.bf16.msra.mxu0 %v3391
        %3593 = vmatpush.bf16.msra.mxu0 %v3389
        %3594 = vmatpush.bf16.msra.mxu0 %v3387
        %3595 = vmatpush.bf16.msra.mxu0 %v3385
        %3596 = vmatpush.bf16.msra.mxu0 %v3383
        %3597 = vmatmul.bf16.gmra.mxu0 %v3097
        %v3598 = vpop.f32.mrf.mxu0
        %v3599 = vadd.f32 %v3580, %v3598
        %v3600 = vpop.f32.mrf.mxu0
        %v3601 = vadd.f32 %v3582, %v3600
        %3602 = vmatmul.bf16.gmra.mxu0 %v3101
        %v3603 = vpop.f32.mrf.mxu0
        %v3604 = vadd.f32 %v3585, %v3603
        %v3605 = vpop.f32.mrf.mxu0
        %v3606 = vadd.f32 %v3587, %v3605
        %3607 = vdwg.mxu0
        %3608 = vmatpush.bf16.msra.mxu0 %v3413
        %3609 = vmatpush.bf16.msra.mxu0 %v3411
        %3610 = vmatpush.bf16.msra.mxu0 %v3409
        %3611 = vmatpush.bf16.msra.mxu0 %v3407
        %3612 = vmatpush.bf16.msra.mxu0 %v3405
        %3613 = vmatpush.bf16.msra.mxu0 %v3403
        %3614 = vmatpush.bf16.msra.mxu0 %v3401
        %3615 = vmatpush.bf16.msra.mxu0 %v3399
        %3616 = vmatmul.bf16.gmra.mxu0 %v3098
        %v3617 = vpop.f32.mrf.mxu0
        %v3618 = vadd.f32 %v3599, %v3617
        %v3619 = vpop.f32.mrf.mxu0
        %v3620 = vadd.f32 %v3601, %v3619
        %3621 = vmatmul.bf16.gmra.mxu0 %v3102
        %v3622 = vpop.f32.mrf.mxu0
        %v3623 = vadd.f32 %v3604, %v3622
        %v3624 = vpop.f32.mrf.mxu0
        %v3625 = vadd.f32 %v3606, %v3624
        %3626 = vdwg.mxu0
        %3627 = vmatpush.bf16.msra.mxu0 %v3429
        %3628 = vmatpush.bf16.msra.mxu0 %v3427
        %3629 = vmatpush.bf16.msra.mxu0 %v3425
        %3630 = vmatpush.bf16.msra.mxu0 %v3423
        %3631 = vmatpush.bf16.msra.mxu0 %v3421
        %3632 = vmatpush.bf16.msra.mxu0 %v3419
        %3633 = vmatpush.bf16.msra.mxu0 %v3417
        %3634 = vmatpush.bf16.msra.mxu0 %v3415
        %3635 = vmatmul.bf16.gmra.mxu0 %v3099
        %v3636 = vpop.f32.mrf.mxu0
        %v3637 = vadd.f32 %v3618, %v3636
        %v3638 = vpop.f32.mrf.mxu0
        %v3639 = vadd.f32 %v3620, %v3638
        %3640 = vmatmul.bf16.gmra.mxu0 %v3103
        %v3641 = vpop.f32.mrf.mxu0
        %v3642 = vadd.f32 %v3623, %v3641
        %v3643 = vpop.f32.mrf.mxu0
        %v3644 = vadd.f32 %v3625, %v3643
        %3645 = vdwg.mxu0
        %v3646 = vadd.f32 %v2522, %v3561
        %v3647 = vadd.f32 %v2523, %v3637
        %v3648 = vadd.f32 %v2524, %v3563
        %v3649 = vadd.f32 %v2525, %v3639
        %v3650 = vadd.f32 %v2526, %v3566
        %v3651 = vadd.f32 %v2527, %v3642
        %v3652 = vadd.f32 %v2528, %v3568
        %v3653 = vadd.f32 %v2529, %v3644
        %v3654 = vadd.f32 %v3646, %v3647
        %3655 = vadd.xlane.f32.xlu0 %v3654
        %v3656 = vpop.xlane.xlu0 %3655
        %v3657 = vadd.f32 %v3648, %v3649
        %3658 = vadd.xlane.f32.xlu0 %v3657
        %v3659 = vpop.xlane.xlu0 %3658
        %v3660 = vadd.f32 %v3650, %v3651
        %3661 = vadd.xlane.f32.xlu0 %v3660
        %v3662 = vpop.xlane.xlu0 %3661
        %v3663 = vadd.f32 %v3652, %v3653
        %3664 = vadd.xlane.f32.xlu0 %v3663
        %v3665 = vpop.xlane.xlu0 %3664
        %v3666 = vmul.f32 %v3656, %v2413
        %v3667 = vmul.f32 %v3659, %v2413
        %v3668 = vmul.f32 %v3662, %v2413
        %v3669 = vmul.f32 %v3665, %v2413
        %v3670 = vsub.f32 %v3646, %v3666
        %v3671 = vsub.f32 %v3647, %v3666
        %v3672 = vsub.f32 %v3648, %v3667
        %v3673 = vsub.f32 %v3649, %v3667
        %v3674 = vsub.f32 %v3650, %v3668
        %v3675 = vsub.f32 %v3651, %v3668
        %v3676 = vsub.f32 %v3652, %v3669
        %v3677 = vsub.f32 %v3653, %v3669
        %v3678 = vmul.f32 %v3670, %v3670
        %v3679 = vmul.f32 %v3671, %v3671
        %v3680 = vmul.f32 %v3672, %v3672
        %v3681 = vmul.f32 %v3673, %v3673
        %v3682 = vmul.f32 %v3674, %v3674
        %v3683 = vmul.f32 %v3675, %v3675
        %v3684 = vmul.f32 %v3676, %v3676
        %v3685 = vmul.f32 %v3677, %v3677
        %v3686 = vadd.f32 %v3678, %v3679
        %3687 = vadd.xlane.f32.xlu0 %v3686
        %v3688 = vpop.xlane.xlu0 %3687
        %v3689 = vadd.f32 %v3680, %v3681
        %3690 = vadd.xlane.f32.xlu0 %v3689
        %v3691 = vpop.xlane.xlu0 %3690
        %v3692 = vadd.f32 %v3682, %v3683
        %3693 = vadd.xlane.f32.xlu0 %v3692
        %v3694 = vpop.xlane.xlu0 %3693
        %v3695 = vadd.f32 %v3684, %v3685
        %3696 = vadd.xlane.f32.xlu0 %v3695
        %v3697 = vpop.xlane.xlu0 %3696
        %v3698 = vmul.f32 %v3688, %v2413
        %v3699 = vmul.f32 %v3691, %v2413
        %v3700 = vmul.f32 %v3694, %v2413
        %v3701 = vmul.f32 %v3697, %v2413
        %v3702 = vadd.f32 %v3698, 1e-06
        %v3703 = vadd.f32 %v3699, 1e-06
        %v3704 = vadd.f32 %v3700, 1e-06
        %v3705 = vadd.f32 %v3701, 1e-06
        %v3706 = vrsqrt.pop %v3702
        %v3707 = vmul.f32 %v3706, %v3702
        %v3708 = vmul.f32 %v3707, %v3706
        %v3709 = vmul.f32 0.5, %v3708
        %v3710 = vsub.f32 1.5, %v3709
        %v3711 = vmul.f32 %v3706, %v3710
        %vm3712 = vweird.f32 %v3702
        %vm3713 = vweird.f32 %v3706
        %vm3714 = vmor %vm3712, %vm3713
        %v3715 = vsel %vm3714, %v3706, %v3711
        %v3716 = vrsqrt.pop %v3703
        %v3717 = vmul.f32 %v3716, %v3703
        %v3718 = vmul.f32 %v3717, %v3716
        %v3719 = vmul.f32 0.5, %v3718
        %v3720 = vsub.f32 1.5, %v3719
        %v3721 = vmul.f32 %v3716, %v3720
        %vm3722 = vweird.f32 %v3703
        %vm3723 = vweird.f32 %v3716
        %vm3724 = vmor %vm3722, %vm3723
        %v3725 = vsel %vm3724, %v3716, %v3721
        %v3726 = vrsqrt.pop %v3704
        %v3727 = vmul.f32 %v3726, %v3704
        %v3728 = vmul.f32 %v3727, %v3726
        %v3729 = vmul.f32 0.5, %v3728
        %v3730 = vsub.f32 1.5, %v3729
        %v3731 = vmul.f32 %v3726, %v3730
        %vm3732 = vweird.f32 %v3704
        %vm3733 = vweird.f32 %v3726
        %vm3734 = vmor %vm3732, %vm3733
        %v3735 = vsel %vm3734, %v3726, %v3731
        %v3736 = vrsqrt.pop %v3705
        %v3737 = vmul.f32 %v3736, %v3705
        %v3738 = vmul.f32 %v3737, %v3736
        %v3739 = vmul.f32 0.5, %v3738
        %v3740 = vsub.f32 1.5, %v3739
        %v3741 = vmul.f32 %v3736, %v3740
        %vm3742 = vweird.f32 %v3705
        %vm3743 = vweird.f32 %v3736
        %vm3744 = vmor %vm3742, %vm3743
        %v3745 = vsel %vm3744, %v3736, %v3741
        %v3746 = vmul.f32 %v3670, %v3715
        %v3747 = vmul.f32 %v3671, %v3715
        %v3748 = vmul.f32 %v3672, %v3725
        %v3749 = vmul.f32 %v3673, %v3725
        %v3750 = vmul.f32 %v3674, %v3735
        %v3751 = vmul.f32 %v3675, %v3735
        %v3752 = vmul.f32 %v3676, %v3745
        %v3753 = vmul.f32 %v3677, %v3745
        %v3754 = vld [vmem:[%s866] sm:$0x3]
        %v3756 = vperm.slane %v3754, 0
        %v3757 = vperm.slane %v3754, 1
        %v3760 = vmul.f32 %v3746, %v3756
        %v3761 = vmul.f32 %v3747, %v3757
        %v3762 = vmul.f32 %v3748, %v3756
        %v3763 = vmul.f32 %v3749, %v3757
        %v3764 = vmul.f32 %v3750, %v3756
        %v3765 = vmul.f32 %v3751, %v3757
        %v3766 = vmul.f32 %v3752, %v3756
        %v3767 = vmul.f32 %v3753, %v3757
        %v3768 = vld [vmem:[%s870] sm:$0x3]
        %v3770 = vperm.slane %v3768, 0
        %v3771 = vperm.slane %v3768, 1
        %v3774 = vadd.f32 %v3760, %v3770
        %v3775 = vadd.f32 %v3761, %v3771
        %v3776 = vadd.f32 %v3762, %v3770
        %v3777 = vadd.f32 %v3763, %v3771
        %v3778 = vadd.f32 %v3764, %v3770
        %v3779 = vadd.f32 %v3765, %v3771
        %v3780 = vadd.f32 %v3766, %v3770
        %v3781 = vadd.f32 %v3767, %v3771
        %3782 = vst [vmem:[%s825] sm:$0xff] %v3774
        %3783 = vst [vmem:[%s825 + $0x8] sm:$0xff] %v3775
        %3784 = vst [vmem:[%s825 + $0x10] sm:$0xff] %v3776
        %3785 = vst [vmem:[%s825 + $0x18] sm:$0xff] %v3777
        %3786 = vst [vmem:[%s825 + $0x20] sm:$0xff] %v3778
        %3787 = vst [vmem:[%s825 + $0x28] sm:$0xff] %v3779
        %3788 = vst [vmem:[%s825 + $0x30] sm:$0xff] %v3780
        %3789 = vst [vmem:[%s825 + $0x38] sm:$0xff] %v3781
        %s3790 = sand.u32 %s448, 1
        %s3791 = scalar_lea.sflag [#allocation5], %s3790
        %s3792 = sand.u32 %s448, 1
        %s3793 = smul.addr %s3792, 64
        %s3794 = scalar_lea.vmem [#allocation12], %s3793
        // Predicated region
        $region105: #{tpu_custom_call.1} parent=79 // pred_check
          %p3795 = pneg %p458
        $region106: #{tpu_custom_call.1} parent=79 // pred_check_branch
          %3797 = sbr.rel (%p3795) target = $region108
        $region107: #{tpu_custom_call.1} parent=79 // pred_region
          %s3798 = smul.u32 2, %s42
          %3800 = vsyncadd %s3791, 0
          %s3801 = smul.addr %s3798, 4
          %s3802 = smul.addr %s3801, 8
          %s3803 = scalar_lea.hbm %s15, %s3802
          %s3804 = sshll.u32 %s3794, 4
          %s3805 = int_to_ptr.vmem [resolvable:$true] %s3804
          %s3806 = sshll.u32 %s3803, 4
          %s3807 = int_to_ptr.hbm [resolvable:$true] %s3806
          %3812 = dma.vmem_to_hbm [thread:$0]  %s3805, 1024, %s3807, %s3791, 256, 256, 16
        $region108: #{tpu_custom_call.1} parent=79 // pred_fallthru
          _
      $region80: #{tpu_custom_call.1} parent=5 // pred_fallthru
        _
      %p3813 = scmp.le.s32.totalorder 2, %s33
      // Predicated region
      $region109: #{tpu_custom_call.1} parent=5 // pred_check
        %p3814 = pneg %p3813
      $region110: #{tpu_custom_call.1} parent=5 // pred_check_branch
        %3816 = sbr.rel (%p3814) target = $region112
      $region111: #{tpu_custom_call.1} parent=5 // pred_region
        %s3817 = ssub.s32 %s33, 2
        // Predicated region
        $region113: #{tpu_custom_call.1} parent=111 // pred_check
          %p3818 = pneg %p464
        $region114: #{tpu_custom_call.1} parent=111 // pred_check_branch
          %3820 = sbr.rel (%p3818) target = $region116
        $region115: #{tpu_custom_call.1} parent=111 // pred_region
          %s3821 = sand.u32 %s449, 1
          %s3822 = scalar_lea.sflag [#allocation5], %s3821
          %s3823 = sand.u32 %s449, 1
          %s3824 = smul.addr %s3823, 64
          %s3825 = scalar_lea.vmem [#allocation12], %s3824
          %3827 = dma.done %s3822, 1024
        $region116: #{tpu_custom_call.1} parent=111 // pred_fallthru
          _
      $region112: #{tpu_custom_call.1} parent=5 // pred_fallthru
        _
    $region6: #{tpu_custom_call.1} parent=1 // loop_footer
      %s37 = sadd.s32 1, %s33
    $region7: #{tpu_custom_call.1} parent=1 // loop_footer_branch
      %32 = sbr.rel target = $region3
    $region8: #{tpu_custom_call.1} parent=1 // loop_exit
      _
    %3828 = vsyncpa [#allocation4], 1
    %s3829 = scalar_lea.sflag [#allocation4], 1
    %3830 = vsyncpa %s3829, 1
    %3831 = vsyncpa [#allocation7], 1
    %s3832 = scalar_lea.sflag [#allocation7], 1
    %3833 = vsyncpa %s3832, 1
    %3834 = vsyncpa [#allocation10], 1
    %s3835 = scalar_lea.sflag [#allocation10], 1
    %3836 = vsyncpa %s3835, 1
    %3837 = vsyncpa [#allocation5], 1
    %s3838 = scalar_lea.sflag [#allocation5], 1
    %3839 = vsyncpa %s3838, 1

</llo_original>
